<compile_context>
chip_gen: v5e
topology: v5e:2x2
jax: 0.10.0
libtpu: 0.0.40
codegen_flags: <defaults>
</compile_context>

<pallas_src>
import jax
import jax.numpy as jnp
from jax import lax
from jax.experimental import pallas as pl
from jax.experimental.pallas import tpu as pltpu


def net_kernel(p1_ref, w1_ref, b1_ref, w2_ref, b2_ref, wfc_ref, bfc_ref,
               out_ref):
    tb = p1_ref.shape[0]

    # ---- conv1 (+bias): single MXU matmul over all 25 taps ------------------
    # p1 rows ordered (b, pool_offset d1 in 0..3, pooled position i*12+j).
    p1 = p1_ref[...].reshape(tb * 4 * 144, 25)
    h1 = jnp.dot(p1, w1_ref[...], preferred_element_type=jnp.float32)
    h1 = h1 + b1_ref[...]                                   # (tb*576, 10)
    h1 = h1.reshape(tb, 4, 144, 10)

    # ---- max_pool2d(2) + relu: max over the (untiled) pool-offset axis ------
    a1 = jnp.maximum(jnp.maximum(h1[:, 0], h1[:, 1]),
                     jnp.maximum(h1[:, 2], h1[:, 3]))       # (tb, 144, 10)
    a1 = jnp.maximum(a1, 0.0)
    a1 = a1.reshape(tb, 12, 12, 10)                         # spatial NHWC view

    # ---- conv2: in-kernel im2col gather -> ONE (tb*64,250)@(250,20) matmul --
    cols = []
    for ki in range(5):
        for kj in range(5):
            cols.append(a1[:, ki:ki + 8, kj:kj + 8, :].reshape(tb * 64, 10))
    p2 = jnp.concatenate(cols, axis=1)                      # (tb*64, 250)
    h2 = jnp.dot(p2, w2_ref[...], preferred_element_type=jnp.float32)
    h2 = h2 + b2_ref[...]                                   # (tb*64, 20)

    # TODO(synk): nn.Dropout2d is identity here (eval/inference semantics).

    # ---- max_pool2d(2) + relu -> (tb, 4, 4, 20) ------------------------------
    h2 = h2.reshape(tb, 4, 2, 8, 20)                        # (b, ip, di, J, c)
    t = jnp.maximum(h2[:, :, 0], h2[:, :, 1])               # row pool (tb,4,8,20)
    t = t.reshape(tb, 4, 4, 2, 20)                          # (b, ip, jp, dj, c)
    a2 = jnp.maximum(t[:, :, :, 0], t[:, :, :, 1])          # col pool (tb,4,4,20)
    a2 = jnp.maximum(a2, 0.0)

    # ---- fc(320 -> 10): ONE matmul (weights pre-permuted to NHWC order) -----
    fc_cols = []
    for i in range(4):
        for j in range(4):
            fc_cols.append(a2[:, i, j, :])                  # (tb, 20)
    flat = jnp.concatenate(fc_cols, axis=1)                 # (tb, 320)
    logits = jnp.dot(flat, wfc_ref[...], preferred_element_type=jnp.float32)
    logits = logits + bfc_ref[...]                          # (tb, 10)

    # ---- log_softmax(dim=1) --------------------------------------------------
    m = jnp.max(logits, axis=1, keepdims=True)
    z = logits - m
    lse = jnp.log(jnp.sum(jnp.exp(z), axis=1, keepdims=True))
    out_ref[...] = z - lse


def _conv1_pool_patches(x):
    """x: (B, 28, 28) -> (B, 4, 144, 25) conv1 im2col patches, grouped so the
    first 2x2 max-pool becomes a max over axis 1 inside the kernel:
      p[b, di*2+dj, i*12+j, ki*5+kj] = x[b, 2*i + di + ki, 2*j + dj + kj]
    """
    B = x.shape[0]
    groups = []
    for di in range(2):
        for dj in range(2):
            taps = []
            for ki in range(5):
                for kj in range(5):
                    r0, c0 = di + ki, dj + kj
                    sl = x[:, r0:r0 + 23:2, c0:c0 + 23:2]   # (B, 12, 12)
                    taps.append(sl.reshape(B, 144))
            groups.append(jnp.stack(taps, axis=-1))          # (B, 144, 25)
    return jnp.stack(groups, axis=1)                          # (B, 4, 144, 25)


def net_forward(x_nchw, params, batch_tile=8):
    """x_nchw: (B, 1, 28, 28) float32 -> (B, 10) log-probabilities
    (matches PyTorch Net.forward in eval mode)."""
    B = x_nchw.shape[0]
    x = x_nchw.reshape(B, 28, 28).astype(jnp.float32)

    # Batch tiling: one grid step per `tb` samples (tb multiple of 8 when >1 step).
    tb = B if B <= batch_tile else batch_tile
    Bp = ((B + tb - 1) // tb) * tb
    if Bp != B:
        x = jnp.concatenate([x, jnp.zeros((Bp - B, 28, 28), x.dtype)], axis=0)

    # conv1 im2col done once in the wrapper (XLA); kernel sees lane-dense rows.
    p1 = _conv1_pool_patches(x)                                       # (Bp,4,144,25)

    # Re-pack PyTorch-layout weights for the fused-matmul kernel.
    w1m = params["w1"].reshape(10, 25).T.astype(jnp.float32)          # (25, 10)
    b1m = params["b1"].reshape(1, 10).astype(jnp.float32)
    w2m = jnp.transpose(params["w2"], (2, 3, 1, 0)).reshape(250, 20).astype(jnp.float32)
    b2m = params["b2"].reshape(1, 20).astype(jnp.float32)
    # NHWC flatten order: k = (i*4 + j)*20 + c  <->  PyTorch k = c*16 + i*4 + j
    wfcm = jnp.transpose(params["wfc"].reshape(10, 20, 4, 4),
                         (2, 3, 1, 0)).reshape(320, 10).astype(jnp.float32)
    bfcm = params["bfc"].reshape(1, 10).astype(jnp.float32)

    out = pl.pallas_call(
        net_kernel,
        out_shape=jax.ShapeDtypeStruct((Bp, 10), jnp.float32),
        grid=(Bp // tb,),
        in_specs=[
            pl.BlockSpec((tb, 4, 144, 25), lambda b: (b, 0, 0, 0)),
            pl.BlockSpec((25, 10), lambda b: (0, 0)),
            pl.BlockSpec((1, 10), lambda b: (0, 0)),
            pl.BlockSpec((250, 20), lambda b: (0, 0)),
            pl.BlockSpec((1, 20), lambda b: (0, 0)),
            pl.BlockSpec((320, 10), lambda b: (0, 0)),
            pl.BlockSpec((1, 10), lambda b: (0, 0)),
        ],
        out_specs=pl.BlockSpec((tb, 10), lambda b: (b, 0)),
        compiler_params=pltpu.CompilerParams(
            dimension_semantics=("parallel",),
            vmem_limit_bytes=48 * 1024 * 1024),
    )(p1, w1m, b1m, w2m, b2m, wfcm, bfcm)
    return out[:B]


# ---------------------- pure-JAX reference (for checking) -------------------
def _pool_nchw(y):
    B, C, H, W = y.shape
    return y.reshape(B, C, H // 2, 2, W // 2, 2).max(axis=(3, 5))


def reference_forward(x, p):
    dn = ("NCHW", "OIHW", "NCHW")
    y = lax.conv_general_dilated(x, p["w1"], (1, 1), "VALID", dimension_numbers=dn)
    y = y + p["b1"][None, :, None, None]
    y = jnp.maximum(_pool_nchw(y), 0.0)
    y = lax.conv_general_dilated(y, p["w2"], (1, 1), "VALID", dimension_numbers=dn)
    y = y + p["b2"][None, :, None, None]
    y = jnp.maximum(_pool_nchw(y), 0.0)
    flat = y.reshape(y.shape[0], -1)                      # NCHW flatten -> 320
    logits = flat @ p["wfc"].T + p["bfc"]
    return jax.nn.log_softmax(logits, axis=1)


if __name__ == "__main__":
    key = jax.random.PRNGKey(0)
    kx, kp = jax.random.split(key)
    x = jax.random.normal(kx, (2, 1, 28, 28), dtype=jnp.float32)

    ks = jax.random.split(kp, 6)
    params = {
        "w1":  jax.random.normal(ks[0], (10, 1, 5, 5), jnp.float32) * 0.1,
        "b1":  jax.random.normal(ks[1], (10,), jnp.float32) * 0.1,
        "w2":  jax.random.normal(ks[2], (20, 10, 5, 5), jnp.float32) * 0.05,
        "b2":  jax.random.normal(ks[3], (20,), jnp.float32) * 0.05,
        "wfc": jax.random.normal(ks[4], (10, 320), jnp.float32) * 0.05,
        "bfc": jax.random.normal(ks[5], (10,), jnp.float32) * 0.05,
    }

    out = jax.block_until_ready(net_forward(x, params))
    ref = jax.block_until_ready(reference_forward(x, params))

    assert out.shape == (2, 10), out.shape
    max_diff = jnp.max(jnp.abs(out - ref))
    assert jnp.allclose(out, ref, atol=2e-4, rtol=2e-4), \
        f"max abs diff = {max_diff}"
    print("KERNEL_OK")
</pallas_src>

<mosaic_0001>
module attributes {stable_mosaic.version = 11 : i64} {
  func.func @net_kernel(%arg0: i32, %arg1: memref<2x4x144x25xf32, #tpu.memory_space<vmem>>, %arg2: memref<25x10xf32, #tpu.memory_space<vmem>>, %arg3: memref<1x10xf32, #tpu.memory_space<vmem>>, %arg4: memref<250x20xf32, #tpu.memory_space<vmem>>, %arg5: memref<1x20xf32, #tpu.memory_space<vmem>>, %arg6: memref<320x10xf32, #tpu.memory_space<vmem>>, %arg7: memref<1x10xf32, #tpu.memory_space<vmem>>, %arg8: memref<2x10xf32, #tpu.memory_space<vmem>>) attributes {dimension_semantics = [#tpu.dimension_semantics<parallel>], iteration_bounds = array<i64: 1>, scalar_prefetch = 0 : i64, scratch_operands = 0 : i64, tpu.core_type = #tpu.core_type<tc>, window_params = [{transform_indices = @transform_0, window_bounds = array<i64: 2, 4, 144, 25>}, {pipeline_mode = #tpu.pipeline_mode<synchronous>, transform_indices = @transform_1, window_bounds = array<i64: 25, 10>}, {pipeline_mode = #tpu.pipeline_mode<synchronous>, transform_indices = @transform_2, window_bounds = array<i64: 1, 10>}, {pipeline_mode = #tpu.pipeline_mode<synchronous>, transform_indices = @transform_3, window_bounds = array<i64: 250, 20>}, {pipeline_mode = #tpu.pipeline_mode<synchronous>, transform_indices = @transform_4, window_bounds = array<i64: 1, 20>}, {pipeline_mode = #tpu.pipeline_mode<synchronous>, transform_indices = @transform_5, window_bounds = array<i64: 320, 10>}, {pipeline_mode = #tpu.pipeline_mode<synchronous>, transform_indices = @transform_6, window_bounds = array<i64: 1, 10>}, {transform_indices = @transform_7, window_bounds = array<i64: 2, 10>}]} {
    %c0 = arith.constant 0 : index
    %c0_0 = arith.constant 0 : index
    %c0_1 = arith.constant 0 : index
    %c0_2 = arith.constant 0 : index
    %0 = vector.load %arg1[%c0, %c0_0, %c0_1, %c0_2] : memref<2x4x144x25xf32, #tpu.memory_space<vmem>>, vector<2x4x144x25xf32>
    %1 = vector.shape_cast %0 : vector<2x4x144x25xf32> to vector<1152x25xf32>
    %c0_3 = arith.constant 0 : index
    %c0_4 = arith.constant 0 : index
    %2 = vector.load %arg2[%c0_3, %c0_4] : memref<25x10xf32, #tpu.memory_space<vmem>>, vector<25x10xf32>
    %cst = arith.constant dense<0.000000e+00> : vector<1152x10xf32>
    %3 = tpu.matmul %1, %2, %cst {dimension_numbers = #tpu.dot_dimension_numbers<[1], [0], [0], [1], [0, 0, 1, 1], [], []>} : vector<1152x25xf32>, vector<25x10xf32>, vector<1152x10xf32> -> vector<1152x10xf32>
    %c0_5 = arith.constant 0 : index
    %c0_6 = arith.constant 0 : index
    %4 = vector.load %arg3[%c0_5, %c0_6] : memref<1x10xf32, #tpu.memory_space<vmem>>, vector<1x10xf32>
    %5 = vector.broadcast %4 : vector<1x10xf32> to vector<1152x10xf32>
    %6 = arith.addf %3, %5 : vector<1152x10xf32>
    %7 = vector.shape_cast %6 : vector<1152x10xf32> to vector<2x4x144x10xf32>
    %8 = vector.extract_strided_slice %7 {offsets = [0, 0, 0, 0], sizes = [2, 1, 144, 10], strides = [1, 1, 1, 1]} : vector<2x4x144x10xf32> to vector<2x1x144x10xf32>
    %9 = vector.shape_cast %8 : vector<2x1x144x10xf32> to vector<2x144x10xf32>
    %10 = vector.extract_strided_slice %7 {offsets = [0, 1, 0, 0], sizes = [2, 1, 144, 10], strides = [1, 1, 1, 1]} : vector<2x4x144x10xf32> to vector<2x1x144x10xf32>
    %11 = vector.shape_cast %10 : vector<2x1x144x10xf32> to vector<2x144x10xf32>
    %12 = arith.maximumf %9, %11 : vector<2x144x10xf32>
    %13 = vector.extract_strided_slice %7 {offsets = [0, 2, 0, 0], sizes = [2, 1, 144, 10], strides = [1, 1, 1, 1]} : vector<2x4x144x10xf32> to vector<2x1x144x10xf32>
    %14 = vector.shape_cast %13 : vector<2x1x144x10xf32> to vector<2x144x10xf32>
    %15 = vector.extract_strided_slice %7 {offsets = [0, 3, 0, 0], sizes = [2, 1, 144, 10], strides = [1, 1, 1, 1]} : vector<2x4x144x10xf32> to vector<2x1x144x10xf32>
    %16 = vector.shape_cast %15 : vector<2x1x144x10xf32> to vector<2x144x10xf32>
    %17 = arith.maximumf %14, %16 : vector<2x144x10xf32>
    %18 = arith.maximumf %12, %17 : vector<2x144x10xf32>
    %cst_7 = arith.constant 0.000000e+00 : f32
    %19 = vector.broadcast %cst_7 : f32 to vector<2x144x10xf32>
    %20 = arith.maximumf %18, %19 : vector<2x144x10xf32>
    %21 = vector.shape_cast %20 : vector<2x144x10xf32> to vector<2x12x12x10xf32>
    %22 = vector.extract_strided_slice %21 {offsets = [0, 0, 0, 0], sizes = [2, 8, 8, 10], strides = [1, 1, 1, 1]} : vector<2x12x12x10xf32> to vector<2x8x8x10xf32>
    %23 = vector.shape_cast %22 : vector<2x8x8x10xf32> to vector<128x10xf32>
    %24 = vector.extract_strided_slice %21 {offsets = [0, 0, 1, 0], sizes = [2, 8, 8, 10], strides = [1, 1, 1, 1]} : vector<2x12x12x10xf32> to vector<2x8x8x10xf32>
    %25 = vector.shape_cast %24 : vector<2x8x8x10xf32> to vector<128x10xf32>
    %26 = vector.extract_strided_slice %21 {offsets = [0, 0, 2, 0], sizes = [2, 8, 8, 10], strides = [1, 1, 1, 1]} : vector<2x12x12x10xf32> to vector<2x8x8x10xf32>
    %27 = vector.shape_cast %26 : vector<2x8x8x10xf32> to vector<128x10xf32>
    %28 = vector.extract_strided_slice %21 {offsets = [0, 0, 3, 0], sizes = [2, 8, 8, 10], strides = [1, 1, 1, 1]} : vector<2x12x12x10xf32> to vector<2x8x8x10xf32>
    %29 = vector.shape_cast %28 : vector<2x8x8x10xf32> to vector<128x10xf32>
    %30 = vector.extract_strided_slice %21 {offsets = [0, 0, 4, 0], sizes = [2, 8, 8, 10], strides = [1, 1, 1, 1]} : vector<2x12x12x10xf32> to vector<2x8x8x10xf32>
    %31 = vector.shape_cast %30 : vector<2x8x8x10xf32> to vector<128x10xf32>
    %32 = vector.extract_strided_slice %21 {offsets = [0, 1, 0, 0], sizes = [2, 8, 8, 10], strides = [1, 1, 1, 1]} : vector<2x12x12x10xf32> to vector<2x8x8x10xf32>
    %33 = vector.shape_cast %32 : vector<2x8x8x10xf32> to vector<128x10xf32>
    %34 = vector.extract_strided_slice %21 {offsets = [0, 1, 1, 0], sizes = [2, 8, 8, 10], strides = [1, 1, 1, 1]} : vector<2x12x12x10xf32> to vector<2x8x8x10xf32>
    %35 = vector.shape_cast %34 : vector<2x8x8x10xf32> to vector<128x10xf32>
    %36 = vector.extract_strided_slice %21 {offsets = [0, 1, 2, 0], sizes = [2, 8, 8, 10], strides = [1, 1, 1, 1]} : vector<2x12x12x10xf32> to vector<2x8x8x10xf32>
    %37 = vector.shape_cast %36 : vector<2x8x8x10xf32> to vector<128x10xf32>
    %38 = vector.extract_strided_slice %21 {offsets = [0, 1, 3, 0], sizes = [2, 8, 8, 10], strides = [1, 1, 1, 1]} : vector<2x12x12x10xf32> to vector<2x8x8x10xf32>
    %39 = vector.shape_cast %38 : vector<2x8x8x10xf32> to vector<128x10xf32>
    %40 = vector.extract_strided_slice %21 {offsets = [0, 1, 4, 0], sizes = [2, 8, 8, 10], strides = [1, 1, 1, 1]} : vector<2x12x12x10xf32> to vector<2x8x8x10xf32>
    %41 = vector.shape_cast %40 : vector<2x8x8x10xf32> to vector<128x10xf32>
    %42 = vector.extract_strided_slice %21 {offsets = [0, 2, 0, 0], sizes = [2, 8, 8, 10], strides = [1, 1, 1, 1]} : vector<2x12x12x10xf32> to vector<2x8x8x10xf32>
    %43 = vector.shape_cast %42 : vector<2x8x8x10xf32> to vector<128x10xf32>
    %44 = vector.extract_strided_slice %21 {offsets = [0, 2, 1, 0], sizes = [2, 8, 8, 10], strides = [1, 1, 1, 1]} : vector<2x12x12x10xf32> to vector<2x8x8x10xf32>
    %45 = vector.shape_cast %44 : vector<2x8x8x10xf32> to vector<128x10xf32>
    %46 = vector.extract_strided_slice %21 {offsets = [0, 2, 2, 0], sizes = [2, 8, 8, 10], strides = [1, 1, 1, 1]} : vector<2x12x12x10xf32> to vector<2x8x8x10xf32>
    %47 = vector.shape_cast %46 : vector<2x8x8x10xf32> to vector<128x10xf32>
    %48 = vector.extract_strided_slice %21 {offsets = [0, 2, 3, 0], sizes = [2, 8, 8, 10], strides = [1, 1, 1, 1]} : vector<2x12x12x10xf32> to vector<2x8x8x10xf32>
    %49 = vector.shape_cast %48 : vector<2x8x8x10xf32> to vector<128x10xf32>
    %50 = vector.extract_strided_slice %21 {offsets = [0, 2, 4, 0], sizes = [2, 8, 8, 10], strides = [1, 1, 1, 1]} : vector<2x12x12x10xf32> to vector<2x8x8x10xf32>
    %51 = vector.shape_cast %50 : vector<2x8x8x10xf32> to vector<128x10xf32>
    %52 = vector.extract_strided_slice %21 {offsets = [0, 3, 0, 0], sizes = [2, 8, 8, 10], strides = [1, 1, 1, 1]} : vector<2x12x12x10xf32> to vector<2x8x8x10xf32>
    %53 = vector.shape_cast %52 : vector<2x8x8x10xf32> to vector<128x10xf32>
    %54 = vector.extract_strided_slice %21 {offsets = [0, 3, 1, 0], sizes = [2, 8, 8, 10], strides = [1, 1, 1, 1]} : vector<2x12x12x10xf32> to vector<2x8x8x10xf32>
    %55 = vector.shape_cast %54 : vector<2x8x8x10xf32> to vector<128x10xf32>
    %56 = vector.extract_strided_slice %21 {offsets = [0, 3, 2, 0], sizes = [2, 8, 8, 10], strides = [1, 1, 1, 1]} : vector<2x12x12x10xf32> to vector<2x8x8x10xf32>
    %57 = vector.shape_cast %56 : vector<2x8x8x10xf32> to vector<128x10xf32>
    %58 = vector.extract_strided_slice %21 {offsets = [0, 3, 3, 0], sizes = [2, 8, 8, 10], strides = [1, 1, 1, 1]} : vector<2x12x12x10xf32> to vector<2x8x8x10xf32>
    %59 = vector.shape_cast %58 : vector<2x8x8x10xf32> to vector<128x10xf32>
    %60 = vector.extract_strided_slice %21 {offsets = [0, 3, 4, 0], sizes = [2, 8, 8, 10], strides = [1, 1, 1, 1]} : vector<2x12x12x10xf32> to vector<2x8x8x10xf32>
    %61 = vector.shape_cast %60 : vector<2x8x8x10xf32> to vector<128x10xf32>
    %62 = vector.extract_strided_slice %21 {offsets = [0, 4, 0, 0], sizes = [2, 8, 8, 10], strides = [1, 1, 1, 1]} : vector<2x12x12x10xf32> to vector<2x8x8x10xf32>
    %63 = vector.shape_cast %62 : vector<2x8x8x10xf32> to vector<128x10xf32>
    %64 = vector.extract_strided_slice %21 {offsets = [0, 4, 1, 0], sizes = [2, 8, 8, 10], strides = [1, 1, 1, 1]} : vector<2x12x12x10xf32> to vector<2x8x8x10xf32>
    %65 = vector.shape_cast %64 : vector<2x8x8x10xf32> to vector<128x10xf32>
    %66 = vector.extract_strided_slice %21 {offsets = [0, 4, 2, 0], sizes = [2, 8, 8, 10], strides = [1, 1, 1, 1]} : vector<2x12x12x10xf32> to vector<2x8x8x10xf32>
    %67 = vector.shape_cast %66 : vector<2x8x8x10xf32> to vector<128x10xf32>
    %68 = vector.extract_strided_slice %21 {offsets = [0, 4, 3, 0], sizes = [2, 8, 8, 10], strides = [1, 1, 1, 1]} : vector<2x12x12x10xf32> to vector<2x8x8x10xf32>
    %69 = vector.shape_cast %68 : vector<2x8x8x10xf32> to vector<128x10xf32>
    %70 = vector.extract_strided_slice %21 {offsets = [0, 4, 4, 0], sizes = [2, 8, 8, 10], strides = [1, 1, 1, 1]} : vector<2x12x12x10xf32> to vector<2x8x8x10xf32>
    %71 = vector.shape_cast %70 : vector<2x8x8x10xf32> to vector<128x10xf32>
    %72 = tpu.concatenate %23, %25, %27, %29, %31, %33, %35, %37, %39, %41, %43, %45, %47, %49, %51, %53 in 1 : vector<128x10xf32>, vector<128x10xf32>, vector<128x10xf32>, vector<128x10xf32>, vector<128x10xf32>, vector<128x10xf32>, vector<128x10xf32>, vector<128x10xf32>, vector<128x10xf32>, vector<128x10xf32>, vector<128x10xf32>, vector<128x10xf32>, vector<128x10xf32>, vector<128x10xf32>, vector<128x10xf32>, vector<128x10xf32> -> vector<128x160xf32>
    %73 = tpu.concatenate %55, %57, %59, %61, %63, %65, %67, %69, %71 in 1 : vector<128x10xf32>, vector<128x10xf32>, vector<128x10xf32>, vector<128x10xf32>, vector<128x10xf32>, vector<128x10xf32>, vector<128x10xf32>, vector<128x10xf32>, vector<128x10xf32> -> vector<128x90xf32>
    %74 = tpu.concatenate %72, %73 in 1 : vector<128x160xf32>, vector<128x90xf32> -> vector<128x250xf32>
    %c0_8 = arith.constant 0 : index
    %c0_9 = arith.constant 0 : index
    %75 = vector.load %arg4[%c0_8, %c0_9] : memref<250x20xf32, #tpu.memory_space<vmem>>, vector<250x20xf32>
    %cst_10 = arith.constant dense<0.000000e+00> : vector<128x20xf32>
    %76 = tpu.matmul %74, %75, %cst_10 {dimension_numbers = #tpu.dot_dimension_numbers<[1], [0], [0], [1], [0, 0, 1, 1], [], []>} : vector<128x250xf32>, vector<250x20xf32>, vector<128x20xf32> -> vector<128x20xf32>
    %c0_11 = arith.constant 0 : index
    %c0_12 = arith.constant 0 : index
    %77 = vector.load %arg5[%c0_11, %c0_12] : memref<1x20xf32, #tpu.memory_space<vmem>>, vector<1x20xf32>
    %78 = vector.broadcast %77 : vector<1x20xf32> to vector<128x20xf32>
    %79 = arith.addf %76, %78 : vector<128x20xf32>
    %80 = vector.shape_cast %79 : vector<128x20xf32> to vector<2x4x2x8x20xf32>
    %81 = vector.extract_strided_slice %80 {offsets = [0, 0, 0, 0, 0], sizes = [2, 4, 1, 8, 20], strides = [1, 1, 1, 1, 1]} : vector<2x4x2x8x20xf32> to vector<2x4x1x8x20xf32>
    %82 = vector.shape_cast %81 : vector<2x4x1x8x20xf32> to vector<2x4x8x20xf32>
    %83 = vector.extract_strided_slice %80 {offsets = [0, 0, 1, 0, 0], sizes = [2, 4, 1, 8, 20], strides = [1, 1, 1, 1, 1]} : vector<2x4x2x8x20xf32> to vector<2x4x1x8x20xf32>
    %84 = vector.shape_cast %83 : vector<2x4x1x8x20xf32> to vector<2x4x8x20xf32>
    %85 = arith.maximumf %82, %84 : vector<2x4x8x20xf32>
    %86 = vector.shape_cast %85 : vector<2x4x8x20xf32> to vector<2x4x4x2x20xf32>
    %87 = vector.extract_strided_slice %86 {offsets = [0, 0, 0, 0, 0], sizes = [2, 4, 4, 1, 20], strides = [1, 1, 1, 1, 1]} : vector<2x4x4x2x20xf32> to vector<2x4x4x1x20xf32>
    %88 = vector.shape_cast %87 : vector<2x4x4x1x20xf32> to vector<2x4x4x20xf32>
    %89 = vector.extract_strided_slice %86 {offsets = [0, 0, 0, 1, 0], sizes = [2, 4, 4, 1, 20], strides = [1, 1, 1, 1, 1]} : vector<2x4x4x2x20xf32> to vector<2x4x4x1x20xf32>
    %90 = vector.shape_cast %89 : vector<2x4x4x1x20xf32> to vector<2x4x4x20xf32>
    %91 = arith.maximumf %88, %90 : vector<2x4x4x20xf32>
    %cst_13 = arith.constant 0.000000e+00 : f32
    %92 = vector.broadcast %cst_13 : f32 to vector<2x4x4x20xf32>
    %93 = arith.maximumf %91, %92 : vector<2x4x4x20xf32>
    %94 = vector.extract_strided_slice %93 {offsets = [0, 0, 0, 0], sizes = [2, 1, 1, 20], strides = [1, 1, 1, 1]} : vector<2x4x4x20xf32> to vector<2x1x1x20xf32>
    %95 = vector.shape_cast %94 : vector<2x1x1x20xf32> to vector<2x20xf32>
    %96 = vector.extract_strided_slice %93 {offsets = [0, 0, 1, 0], sizes = [2, 1, 1, 20], strides = [1, 1, 1, 1]} : vector<2x4x4x20xf32> to vector<2x1x1x20xf32>
    %97 = vector.shape_cast %96 : vector<2x1x1x20xf32> to vector<2x20xf32>
    %98 = vector.extract_strided_slice %93 {offsets = [0, 0, 2, 0], sizes = [2, 1, 1, 20], strides = [1, 1, 1, 1]} : vector<2x4x4x20xf32> to vector<2x1x1x20xf32>
    %99 = vector.shape_cast %98 : vector<2x1x1x20xf32> to vector<2x20xf32>
    %100 = vector.extract_strided_slice %93 {offsets = [0, 0, 3, 0], sizes = [2, 1, 1, 20], strides = [1, 1, 1, 1]} : vector<2x4x4x20xf32> to vector<2x1x1x20xf32>
    %101 = vector.shape_cast %100 : vector<2x1x1x20xf32> to vector<2x20xf32>
    %102 = vector.extract_strided_slice %93 {offsets = [0, 1, 0, 0], sizes = [2, 1, 1, 20], strides = [1, 1, 1, 1]} : vector<2x4x4x20xf32> to vector<2x1x1x20xf32>
    %103 = vector.shape_cast %102 : vector<2x1x1x20xf32> to vector<2x20xf32>
    %104 = vector.extract_strided_slice %93 {offsets = [0, 1, 1, 0], sizes = [2, 1, 1, 20], strides = [1, 1, 1, 1]} : vector<2x4x4x20xf32> to vector<2x1x1x20xf32>
    %105 = vector.shape_cast %104 : vector<2x1x1x20xf32> to vector<2x20xf32>
    %106 = vector.extract_strided_slice %93 {offsets = [0, 1, 2, 0], sizes = [2, 1, 1, 20], strides = [1, 1, 1, 1]} : vector<2x4x4x20xf32> to vector<2x1x1x20xf32>
    %107 = vector.shape_cast %106 : vector<2x1x1x20xf32> to vector<2x20xf32>
    %108 = vector.extract_strided_slice %93 {offsets = [0, 1, 3, 0], sizes = [2, 1, 1, 20], strides = [1, 1, 1, 1]} : vector<2x4x4x20xf32> to vector<2x1x1x20xf32>
    %109 = vector.shape_cast %108 : vector<2x1x1x20xf32> to vector<2x20xf32>
    %110 = vector.extract_strided_slice %93 {offsets = [0, 2, 0, 0], sizes = [2, 1, 1, 20], strides = [1, 1, 1, 1]} : vector<2x4x4x20xf32> to vector<2x1x1x20xf32>
    %111 = vector.shape_cast %110 : vector<2x1x1x20xf32> to vector<2x20xf32>
    %112 = vector.extract_strided_slice %93 {offsets = [0, 2, 1, 0], sizes = [2, 1, 1, 20], strides = [1, 1, 1, 1]} : vector<2x4x4x20xf32> to vector<2x1x1x20xf32>
    %113 = vector.shape_cast %112 : vector<2x1x1x20xf32> to vector<2x20xf32>
    %114 = vector.extract_strided_slice %93 {offsets = [0, 2, 2, 0], sizes = [2, 1, 1, 20], strides = [1, 1, 1, 1]} : vector<2x4x4x20xf32> to vector<2x1x1x20xf32>
    %115 = vector.shape_cast %114 : vector<2x1x1x20xf32> to vector<2x20xf32>
    %116 = vector.extract_strided_slice %93 {offsets = [0, 2, 3, 0], sizes = [2, 1, 1, 20], strides = [1, 1, 1, 1]} : vector<2x4x4x20xf32> to vector<2x1x1x20xf32>
    %117 = vector.shape_cast %116 : vector<2x1x1x20xf32> to vector<2x20xf32>
    %118 = vector.extract_strided_slice %93 {offsets = [0, 3, 0, 0], sizes = [2, 1, 1, 20], strides = [1, 1, 1, 1]} : vector<2x4x4x20xf32> to vector<2x1x1x20xf32>
    %119 = vector.shape_cast %118 : vector<2x1x1x20xf32> to vector<2x20xf32>
    %120 = vector.extract_strided_slice %93 {offsets = [0, 3, 1, 0], sizes = [2, 1, 1, 20], strides = [1, 1, 1, 1]} : vector<2x4x4x20xf32> to vector<2x1x1x20xf32>
    %121 = vector.shape_cast %120 : vector<2x1x1x20xf32> to vector<2x20xf32>
    %122 = vector.extract_strided_slice %93 {offsets = [0, 3, 2, 0], sizes = [2, 1, 1, 20], strides = [1, 1, 1, 1]} : vector<2x4x4x20xf32> to vector<2x1x1x20xf32>
    %123 = vector.shape_cast %122 : vector<2x1x1x20xf32> to vector<2x20xf32>
    %124 = vector.extract_strided_slice %93 {offsets = [0, 3, 3, 0], sizes = [2, 1, 1, 20], strides = [1, 1, 1, 1]} : vector<2x4x4x20xf32> to vector<2x1x1x20xf32>
    %125 = vector.shape_cast %124 : vector<2x1x1x20xf32> to vector<2x20xf32>
    %126 = tpu.concatenate %95, %97, %99, %101, %103, %105, %107, %109, %111, %113, %115, %117, %119, %121, %123, %125 in 1 : vector<2x20xf32>, vector<2x20xf32>, vector<2x20xf32>, vector<2x20xf32>, vector<2x20xf32>, vector<2x20xf32>, vector<2x20xf32>, vector<2x20xf32>, vector<2x20xf32>, vector<2x20xf32>, vector<2x20xf32>, vector<2x20xf32>, vector<2x20xf32>, vector<2x20xf32>, vector<2x20xf32>, vector<2x20xf32> -> vector<2x320xf32>
    %c0_14 = arith.constant 0 : index
    %c0_15 = arith.constant 0 : index
    %127 = vector.load %arg6[%c0_14, %c0_15] : memref<320x10xf32, #tpu.memory_space<vmem>>, vector<320x10xf32>
    %cst_16 = arith.constant dense<0.000000e+00> : vector<2x10xf32>
    %128 = tpu.matmul %126, %127, %cst_16 {dimension_numbers = #tpu.dot_dimension_numbers<[1], [0], [0], [1], [0, 0, 1, 1], [], []>} : vector<2x320xf32>, vector<320x10xf32>, vector<2x10xf32> -> vector<2x10xf32>
    %c0_17 = arith.constant 0 : index
    %c0_18 = arith.constant 0 : index
    %129 = vector.load %arg7[%c0_17, %c0_18] : memref<1x10xf32, #tpu.memory_space<vmem>>, vector<1x10xf32>
    %130 = vector.broadcast %129 : vector<1x10xf32> to vector<2x10xf32>
    %131 = arith.addf %128, %130 : vector<2x10xf32>
    %cst_19 = arith.constant dense<0xFF800000> : vector<2xf32>
    %132 = vector.multi_reduction <maximumf>, %131, %cst_19 [1] : vector<2x10xf32> to vector<2xf32>
    %133 = vector.shape_cast %132 : vector<2xf32> to vector<2x1xf32>
    %134 = vector.broadcast %133 : vector<2x1xf32> to vector<2x10xf32>
    %135 = arith.subf %131, %134 : vector<2x10xf32>
    %136 = math.exp %135 : vector<2x10xf32>
    %cst_20 = arith.constant dense<0.000000e+00> : vector<2xf32>
    %137 = vector.multi_reduction <add>, %136, %cst_20 [1] : vector<2x10xf32> to vector<2xf32>
    %138 = vector.shape_cast %137 : vector<2xf32> to vector<2x1xf32>
    %139 = math.log %138 : vector<2x1xf32>
    %140 = vector.broadcast %139 : vector<2x1xf32> to vector<2x10xf32>
    %141 = arith.subf %135, %140 : vector<2x10xf32>
    %c0_21 = arith.constant 0 : index
    %c0_22 = arith.constant 0 : index
    %142 = vector.load %arg8[%c0_21, %c0_22] : memref<2x10xf32, #tpu.memory_space<vmem>>, vector<2x10xf32>
    tpu.vector_store %arg8[%c0_21, %c0_22], %141 {strides = array<i32>} : memref<2x10xf32, #tpu.memory_space<vmem>>, vector<2x10xf32>,
    return
  }
  func.func @transform_0(%arg0: i32) -> (i32, i32, i32, i32) {
    %c0_i32 = arith.constant 0 : i32
    %c0_i32_0 = arith.constant 0 : i32
    %c0_i32_1 = arith.constant 0 : i32
    %c0_i32_2 = arith.constant 0 : i32
    return %arg0, %c0_i32, %c0_i32_0, %c0_i32_1 : i32, i32, i32, i32
  }
  func.func @transform_1(%arg0: i32) -> (i32, i32) {
    %c0_i32 = arith.constant 0 : i32
    %c0_i32_0 = arith.constant 0 : i32
    %c0_i32_1 = arith.constant 0 : i32
    return %c0_i32, %c0_i32_0 : i32, i32
  }
  func.func @transform_2(%arg0: i32) -> (i32, i32) {
    %c0_i32 = arith.constant 0 : i32
    %c0_i32_0 = arith.constant 0 : i32
    %c0_i32_1 = arith.constant 0 : i32
    return %c0_i32, %c0_i32_0 : i32, i32
  }
  func.func @transform_3(%arg0: i32) -> (i32, i32) {
    %c0_i32 = arith.constant 0 : i32
    %c0_i32_0 = arith.constant 0 : i32
    %c0_i32_1 = arith.constant 0 : i32
    return %c0_i32, %c0_i32_0 : i32, i32
  }
  func.func @transform_4(%arg0: i32) -> (i32, i32) {
    %c0_i32 = arith.constant 0 : i32
    %c0_i32_0 = arith.constant 0 : i32
    %c0_i32_1 = arith.constant 0 : i32
    return %c0_i32, %c0_i32_0 : i32, i32
  }
  func.func @transform_5(%arg0: i32) -> (i32, i32) {
    %c0_i32 = arith.constant 0 : i32
    %c0_i32_0 = arith.constant 0 : i32
    %c0_i32_1 = arith.constant 0 : i32
    return %c0_i32, %c0_i32_0 : i32, i32
  }
  func.func @transform_6(%arg0: i32) -> (i32, i32) {
    %c0_i32 = arith.constant 0 : i32
    %c0_i32_0 = arith.constant 0 : i32
    %c0_i32_1 = arith.constant 0 : i32
    return %c0_i32, %c0_i32_0 : i32, i32
  }
  func.func @transform_7(%arg0: i32) -> (i32, i32) {
    %c0_i32 = arith.constant 0 : i32
    %c0_i32_0 = arith.constant 0 : i32
    return %arg0, %c0_i32 : i32, i32
  }
}

</mosaic_0001>

<llo_original>
// kernel: tpu_custom_call.1
$region0: #{tpu_custom_call.1}
  #allocation0 [shape = 'u32[]', space=smem, size = 0x4, offset = 0x4, fixed_abs, tag = 'smem constant byte address 0x4 - core index']
  #allocation1 [shape = 'u32[72,128]{1,0:T(1,128)}', space=vmem, size = 0x9000, scoped, tag = 'internal scratch']
  %s0 = inlined_call_operand.vmem [shape: f32[2,4,144,25], index: 0, kind: input, shape index: {}]
  %s1 = inlined_call_operand.vmem [shape: f32[25,10], index: 1, kind: input, shape index: {}]
  %s2 = inlined_call_operand.vmem [shape: f32[1,10], index: 2, kind: input, shape index: {}]
  %s3 = inlined_call_operand.vmem [shape: f32[250,20], index: 3, kind: input, shape index: {}]
  %s4 = inlined_call_operand.vmem [shape: f32[1,20], index: 4, kind: input, shape index: {}]
  %s5 = inlined_call_operand.vmem [shape: f32[320,10], index: 5, kind: input, shape index: {}]
  %s6 = inlined_call_operand.vmem [shape: f32[1,10], index: 6, kind: input, shape index: {}]
  %s7 = inlined_call_operand.hbm [shape: f32[2,10], index: 7, kind: output, shape index: {}]
  %s8 = sld [smem:[#allocation0]]
  $region38: #{tpu_custom_call.1} parent=0
    _
  %s10 = ssub.s32 1, %s8
  %s11 = scalar_select 0, %s10, %s8
  $region1: #{tpu_custom_call.1} parent=0
    #allocation2 [shape = 'u8[1024]{0}', space=vmem, size = 0x400, scoped, tag = 'output window, operand 0, single buffered']
    #allocation3 [shape = 's32[1]{0}', space=sflag, size = 0x4, scoped, tag = 'scoped memory for tpu_custom_call.1']
    %12 = vsyncpa [#allocation3], 0
    // Predicated region
    $region2: #{tpu_custom_call.1} parent=1 // pred_check
      _
    $region3: #{tpu_custom_call.1} parent=1 // pred_check_branch
      %14 = sbr.rel (0) target = $region5
    $region4: #{tpu_custom_call.1} parent=1 // pred_region
      _
    $region5: #{tpu_custom_call.1} parent=1 // pred_fallthru
      _
    // Predicated region
    $region6: #{tpu_custom_call.1} parent=1 // pred_check
      _
    $region7: #{tpu_custom_call.1} parent=1 // pred_check_branch
      %16 = sbr.rel (0) target = $region9
    $region8: #{tpu_custom_call.1} parent=1 // pred_region
      _
    $region9: #{tpu_custom_call.1} parent=1 // pred_fallthru
      _
    // Predicated region
    $region10: #{tpu_custom_call.1} parent=1 // pred_check
      _
    $region11: #{tpu_custom_call.1} parent=1 // pred_check_branch
      %18 = sbr.rel (0) target = $region13
    $region12: #{tpu_custom_call.1} parent=1 // pred_region
      _
    $region13: #{tpu_custom_call.1} parent=1 // pred_fallthru
      _
    // Predicated region
    $region14: #{tpu_custom_call.1} parent=1 // pred_check
      _
    $region15: #{tpu_custom_call.1} parent=1 // pred_check_branch
      %20 = sbr.rel (0) target = $region17
    $region16: #{tpu_custom_call.1} parent=1 // pred_region
      _
    $region17: #{tpu_custom_call.1} parent=1 // pred_fallthru
      _
    // Predicated region
    $region18: #{tpu_custom_call.1} parent=1 // pred_check
      _
    $region19: #{tpu_custom_call.1} parent=1 // pred_check_branch
      %22 = sbr.rel (0) target = $region21
    $region20: #{tpu_custom_call.1} parent=1 // pred_region
      _
    $region21: #{tpu_custom_call.1} parent=1 // pred_fallthru
      _
    // Predicated region
    $region22: #{tpu_custom_call.1} parent=1 // pred_check
      _
    $region23: #{tpu_custom_call.1} parent=1 // pred_check_branch
      %24 = sbr.rel (0) target = $region25
    $region24: #{tpu_custom_call.1} parent=1 // pred_region
      _
    $region25: #{tpu_custom_call.1} parent=1 // pred_fallthru
      _
    // Predicated region
    $region26: #{tpu_custom_call.1} parent=1 // pred_check
      _
    $region27: #{tpu_custom_call.1} parent=1 // pred_check_branch
      %26 = sbr.rel (0) target = $region29
    $region28: #{tpu_custom_call.1} parent=1 // pred_region
      _
    $region29: #{tpu_custom_call.1} parent=1 // pred_fallthru
      _
    %v27 = vld [vmem:[%s0] sm:$0xff]
    %v28 = vld [vmem:[%s0 + $0x8] sm:$0xff]
    %v29 = vld [vmem:[%s0 + $0x10] sm:$0xff]
    %v30 = vld [vmem:[%s0 + $0x18] sm:$0xff]
    %v31 = vld [vmem:[%s0 + $0x20] sm:$0xff]
    %v32 = vld [vmem:[%s0 + $0x28] sm:$0xff]
    %v33 = vld [vmem:[%s0 + $0x30] sm:$0xff]
    %v34 = vld [vmem:[%s0 + $0x38] sm:$0xff]
    %v35 = vld [vmem:[%s0 + $0x40] sm:$0xff]
    %v36 = vld [vmem:[%s0 + $0x48] sm:$0xff]
    %v37 = vld [vmem:[%s0 + $0x50] sm:$0xff]
    %v38 = vld [vmem:[%s0 + $0x58] sm:$0xff]
    %v39 = vld [vmem:[%s0 + $0x60] sm:$0xff]
    %v40 = vld [vmem:[%s0 + $0x68] sm:$0xff]
    %v41 = vld [vmem:[%s0 + $0x70] sm:$0xff]
    %v42 = vld [vmem:[%s0 + $0x78] sm:$0xff]
    %v43 = vld [vmem:[%s0 + $0x80] sm:$0xff]
    %v44 = vld [vmem:[%s0 + $0x88] sm:$0xff]
    %v45 = vld [vmem:[%s0 + $0x90] sm:$0xff]
    %v46 = vld [vmem:[%s0 + $0x98] sm:$0xff]
    %v47 = vld [vmem:[%s0 + $0xa0] sm:$0xff]
    %v48 = vld [vmem:[%s0 + $0xa8] sm:$0xff]
    %v49 = vld [vmem:[%s0 + $0xb0] sm:$0xff]
    %v50 = vld [vmem:[%s0 + $0xb8] sm:$0xff]
    %v51 = vld [vmem:[%s0 + $0xc0] sm:$0xff]
    %v52 = vld [vmem:[%s0 + $0xc8] sm:$0xff]
    %v53 = vld [vmem:[%s0 + $0xd0] sm:$0xff]
    %v54 = vld [vmem:[%s0 + $0xd8] sm:$0xff]
    %v55 = vld [vmem:[%s0 + $0xe0] sm:$0xff]
    %v56 = vld [vmem:[%s0 + $0xe8] sm:$0xff]
    %v57 = vld [vmem:[%s0 + $0xf0] sm:$0xff]
    %v58 = vld [vmem:[%s0 + $0xf8] sm:$0xff]
    %v59 = vld [vmem:[%s0 + $0x100] sm:$0xff]
    %v60 = vld [vmem:[%s0 + $0x108] sm:$0xff]
    %v61 = vld [vmem:[%s0 + $0x110] sm:$0xff]
    %v62 = vld [vmem:[%s0 + $0x118] sm:$0xff]
    %v63 = vld [vmem:[%s0 + $0x120] sm:$0xff]
    %v64 = vld [vmem:[%s0 + $0x128] sm:$0xff]
    %v65 = vld [vmem:[%s0 + $0x130] sm:$0xff]
    %v66 = vld [vmem:[%s0 + $0x138] sm:$0xff]
    %v67 = vld [vmem:[%s0 + $0x140] sm:$0xff]
    %v68 = vld [vmem:[%s0 + $0x148] sm:$0xff]
    %v69 = vld [vmem:[%s0 + $0x150] sm:$0xff]
    %v70 = vld [vmem:[%s0 + $0x158] sm:$0xff]
    %v71 = vld [vmem:[%s0 + $0x160] sm:$0xff]
    %v72 = vld [vmem:[%s0 + $0x168] sm:$0xff]
    %v73 = vld [vmem:[%s0 + $0x170] sm:$0xff]
    %v74 = vld [vmem:[%s0 + $0x178] sm:$0xff]
    %v75 = vld [vmem:[%s0 + $0x180] sm:$0xff]
    %v76 = vld [vmem:[%s0 + $0x188] sm:$0xff]
    %v77 = vld [vmem:[%s0 + $0x190] sm:$0xff]
    %v78 = vld [vmem:[%s0 + $0x198] sm:$0xff]
    %v79 = vld [vmem:[%s0 + $0x1a0] sm:$0xff]
    %v80 = vld [vmem:[%s0 + $0x1a8] sm:$0xff]
    %v81 = vld [vmem:[%s0 + $0x1b0] sm:$0xff]
    %v82 = vld [vmem:[%s0 + $0x1b8] sm:$0xff]
    %v83 = vld [vmem:[%s0 + $0x1c0] sm:$0xff]
    %v84 = vld [vmem:[%s0 + $0x1c8] sm:$0xff]
    %v85 = vld [vmem:[%s0 + $0x1d0] sm:$0xff]
    %v86 = vld [vmem:[%s0 + $0x1d8] sm:$0xff]
    %v87 = vld [vmem:[%s0 + $0x1e0] sm:$0xff]
    %v88 = vld [vmem:[%s0 + $0x1e8] sm:$0xff]
    %v89 = vld [vmem:[%s0 + $0x1f0] sm:$0xff]
    %v90 = vld [vmem:[%s0 + $0x1f8] sm:$0xff]
    %v91 = vld [vmem:[%s0 + $0x200] sm:$0xff]
    %v92 = vld [vmem:[%s0 + $0x208] sm:$0xff]
    %v93 = vld [vmem:[%s0 + $0x210] sm:$0xff]
    %v94 = vld [vmem:[%s0 + $0x218] sm:$0xff]
    %v95 = vld [vmem:[%s0 + $0x220] sm:$0xff]
    %v96 = vld [vmem:[%s0 + $0x228] sm:$0xff]
    %v97 = vld [vmem:[%s0 + $0x230] sm:$0xff]
    %v98 = vld [vmem:[%s0 + $0x238] sm:$0xff]
    %v99 = vld [vmem:[%s0 + $0x240] sm:$0xff]
    %v100 = vld [vmem:[%s0 + $0x248] sm:$0xff]
    %v101 = vld [vmem:[%s0 + $0x250] sm:$0xff]
    %v102 = vld [vmem:[%s0 + $0x258] sm:$0xff]
    %v103 = vld [vmem:[%s0 + $0x260] sm:$0xff]
    %v104 = vld [vmem:[%s0 + $0x268] sm:$0xff]
    %v105 = vld [vmem:[%s0 + $0x270] sm:$0xff]
    %v106 = vld [vmem:[%s0 + $0x278] sm:$0xff]
    %v107 = vld [vmem:[%s0 + $0x280] sm:$0xff]
    %v108 = vld [vmem:[%s0 + $0x288] sm:$0xff]
    %v109 = vld [vmem:[%s0 + $0x290] sm:$0xff]
    %v110 = vld [vmem:[%s0 + $0x298] sm:$0xff]
    %v111 = vld [vmem:[%s0 + $0x2a0] sm:$0xff]
    %v112 = vld [vmem:[%s0 + $0x2a8] sm:$0xff]
    %v113 = vld [vmem:[%s0 + $0x2b0] sm:$0xff]
    %v114 = vld [vmem:[%s0 + $0x2b8] sm:$0xff]
    %v115 = vld [vmem:[%s0 + $0x2c0] sm:$0xff]
    %v116 = vld [vmem:[%s0 + $0x2c8] sm:$0xff]
    %v117 = vld [vmem:[%s0 + $0x2d0] sm:$0xff]
    %v118 = vld [vmem:[%s0 + $0x2d8] sm:$0xff]
    %v119 = vld [vmem:[%s0 + $0x2e0] sm:$0xff]
    %v120 = vld [vmem:[%s0 + $0x2e8] sm:$0xff]
    %v121 = vld [vmem:[%s0 + $0x2f0] sm:$0xff]
    %v122 = vld [vmem:[%s0 + $0x2f8] sm:$0xff]
    %v123 = vld [vmem:[%s0 + $0x300] sm:$0xff]
    %v124 = vld [vmem:[%s0 + $0x308] sm:$0xff]
    %v125 = vld [vmem:[%s0 + $0x310] sm:$0xff]
    %v126 = vld [vmem:[%s0 + $0x318] sm:$0xff]
    %v127 = vld [vmem:[%s0 + $0x320] sm:$0xff]
    %v128 = vld [vmem:[%s0 + $0x328] sm:$0xff]
    %v129 = vld [vmem:[%s0 + $0x330] sm:$0xff]
    %v130 = vld [vmem:[%s0 + $0x338] sm:$0xff]
    %v131 = vld [vmem:[%s0 + $0x340] sm:$0xff]
    %v132 = vld [vmem:[%s0 + $0x348] sm:$0xff]
    %v133 = vld [vmem:[%s0 + $0x350] sm:$0xff]
    %v134 = vld [vmem:[%s0 + $0x358] sm:$0xff]
    %v135 = vld [vmem:[%s0 + $0x360] sm:$0xff]
    %v136 = vld [vmem:[%s0 + $0x368] sm:$0xff]
    %v137 = vld [vmem:[%s0 + $0x370] sm:$0xff]
    %v138 = vld [vmem:[%s0 + $0x378] sm:$0xff]
    %v139 = vld [vmem:[%s0 + $0x380] sm:$0xff]
    %v140 = vld [vmem:[%s0 + $0x388] sm:$0xff]
    %v141 = vld [vmem:[%s0 + $0x390] sm:$0xff]
    %v142 = vld [vmem:[%s0 + $0x398] sm:$0xff]
    %v143 = vld [vmem:[%s0 + $0x3a0] sm:$0xff]
    %v144 = vld [vmem:[%s0 + $0x3a8] sm:$0xff]
    %v145 = vld [vmem:[%s0 + $0x3b0] sm:$0xff]
    %v146 = vld [vmem:[%s0 + $0x3b8] sm:$0xff]
    %v147 = vld [vmem:[%s0 + $0x3c0] sm:$0xff]
    %v148 = vld [vmem:[%s0 + $0x3c8] sm:$0xff]
    %v149 = vld [vmem:[%s0 + $0x3d0] sm:$0xff]
    %v150 = vld [vmem:[%s0 + $0x3d8] sm:$0xff]
    %v151 = vld [vmem:[%s0 + $0x3e0] sm:$0xff]
    %v152 = vld [vmem:[%s0 + $0x3e8] sm:$0xff]
    %v153 = vld [vmem:[%s0 + $0x3f0] sm:$0xff]
    %v154 = vld [vmem:[%s0 + $0x3f8] sm:$0xff]
    %v155 = vld [vmem:[%s0 + $0x400] sm:$0xff]
    %v156 = vld [vmem:[%s0 + $0x408] sm:$0xff]
    %v157 = vld [vmem:[%s0 + $0x410] sm:$0xff]
    %v158 = vld [vmem:[%s0 + $0x418] sm:$0xff]
    %v159 = vld [vmem:[%s0 + $0x420] sm:$0xff]
    %v160 = vld [vmem:[%s0 + $0x428] sm:$0xff]
    %v161 = vld [vmem:[%s0 + $0x430] sm:$0xff]
    %v162 = vld [vmem:[%s0 + $0x438] sm:$0xff]
    %v163 = vld [vmem:[%s0 + $0x440] sm:$0xff]
    %v164 = vld [vmem:[%s0 + $0x448] sm:$0xff]
    %v165 = vld [vmem:[%s0 + $0x450] sm:$0xff]
    %v166 = vld [vmem:[%s0 + $0x458] sm:$0xff]
    %v167 = vld [vmem:[%s0 + $0x460] sm:$0xff]
    %v168 = vld [vmem:[%s0 + $0x468] sm:$0xff]
    %v169 = vld [vmem:[%s0 + $0x470] sm:$0xff]
    %v170 = vld [vmem:[%s0 + $0x478] sm:$0xff]
    %v171 = vld [vmem:[%s1] sm:$0xff]
    %v172 = vld [vmem:[%s1 + $0x8] sm:$0xff]
    %v173 = vld [vmem:[%s1 + $0x10] sm:$0xff]
    %v174 = vld [vmem:[%s1 + $0x18] sm:$0x1]
    %v175 = vld [vmem:[%s2] sm:$0x1]
    %v177 = vperm.slane %v175, 0
    %vm179 = vcmask 203776
    %v181 = vsel %vm179, %v27, 0
    %v184 = vsel %vm179, %v28, 0
    %v187 = vsel %vm179, %v29, 0
    %v190 = vsel %vm179, %v30, 0
    %v193 = vsel %vm179, %v31, 0
    %v196 = vsel %vm179, %v32, 0
    %v199 = vsel %vm179, %v33, 0
    %v202 = vsel %vm179, %v34, 0
    %v205 = vsel %vm179, %v35, 0
    %v208 = vsel %vm179, %v36, 0
    %v211 = vsel %vm179, %v37, 0
    %v214 = vsel %vm179, %v38, 0
    %v217 = vsel %vm179, %v39, 0
    %v220 = vsel %vm179, %v40, 0
    %v223 = vsel %vm179, %v41, 0
    %v226 = vsel %vm179, %v42, 0
    %v229 = vsel %vm179, %v43, 0
    %v232 = vsel %vm179, %v44, 0
    %v235 = vsel %vm179, %v45, 0
    %v238 = vsel %vm179, %v46, 0
    %v241 = vsel %vm179, %v47, 0
    %v244 = vsel %vm179, %v48, 0
    %v247 = vsel %vm179, %v49, 0
    %v250 = vsel %vm179, %v50, 0
    %v253 = vsel %vm179, %v51, 0
    %v256 = vsel %vm179, %v52, 0
    %v259 = vsel %vm179, %v53, 0
    %v262 = vsel %vm179, %v54, 0
    %v265 = vsel %vm179, %v55, 0
    %v268 = vsel %vm179, %v56, 0
    %v271 = vsel %vm179, %v57, 0
    %v274 = vsel %vm179, %v58, 0
    %v277 = vsel %vm179, %v59, 0
    %v280 = vsel %vm179, %v60, 0
    %v283 = vsel %vm179, %v61, 0
    %v286 = vsel %vm179, %v62, 0
    %v289 = vsel %vm179, %v63, 0
    %v292 = vsel %vm179, %v64, 0
    %v295 = vsel %vm179, %v65, 0
    %v298 = vsel %vm179, %v66, 0
    %v301 = vsel %vm179, %v67, 0
    %v304 = vsel %vm179, %v68, 0
    %v307 = vsel %vm179, %v69, 0
    %v310 = vsel %vm179, %v70, 0
    %v313 = vsel %vm179, %v71, 0
    %v316 = vsel %vm179, %v72, 0
    %v319 = vsel %vm179, %v73, 0
    %v322 = vsel %vm179, %v74, 0
    %v325 = vsel %vm179, %v75, 0
    %v328 = vsel %vm179, %v76, 0
    %v331 = vsel %vm179, %v77, 0
    %v334 = vsel %vm179, %v78, 0
    %v337 = vsel %vm179, %v79, 0
    %v340 = vsel %vm179, %v80, 0
    %v343 = vsel %vm179, %v81, 0
    %v346 = vsel %vm179, %v82, 0
    %v349 = vsel %vm179, %v83, 0
    %v352 = vsel %vm179, %v84, 0
    %v355 = vsel %vm179, %v85, 0
    %v358 = vsel %vm179, %v86, 0
    %v361 = vsel %vm179, %v87, 0
    %v364 = vsel %vm179, %v88, 0
    %v367 = vsel %vm179, %v89, 0
    %v370 = vsel %vm179, %v90, 0
    %v373 = vsel %vm179, %v91, 0
    %v376 = vsel %vm179, %v92, 0
    %v379 = vsel %vm179, %v93, 0
    %v382 = vsel %vm179, %v94, 0
    %v385 = vsel %vm179, %v95, 0
    %v388 = vsel %vm179, %v96, 0
    %v391 = vsel %vm179, %v97, 0
    %v394 = vsel %vm179, %v98, 0
    %v397 = vsel %vm179, %v99, 0
    %v400 = vsel %vm179, %v100, 0
    %v403 = vsel %vm179, %v101, 0
    %v406 = vsel %vm179, %v102, 0
    %v409 = vsel %vm179, %v103, 0
    %v412 = vsel %vm179, %v104, 0
    %v415 = vsel %vm179, %v105, 0
    %v418 = vsel %vm179, %v106, 0
    %v421 = vsel %vm179, %v107, 0
    %v424 = vsel %vm179, %v108, 0
    %v427 = vsel %vm179, %v109, 0
    %v430 = vsel %vm179, %v110, 0
    %v433 = vsel %vm179, %v111, 0
    %v436 = vsel %vm179, %v112, 0
    %v439 = vsel %vm179, %v113, 0
    %v442 = vsel %vm179, %v114, 0
    %v445 = vsel %vm179, %v115, 0
    %v448 = vsel %vm179, %v116, 0
    %v451 = vsel %vm179, %v117, 0
    %v454 = vsel %vm179, %v118, 0
    %v457 = vsel %vm179, %v119, 0
    %v460 = vsel %vm179, %v120, 0
    %v463 = vsel %vm179, %v121, 0
    %v466 = vsel %vm179, %v122, 0
    %v469 = vsel %vm179, %v123, 0
    %v472 = vsel %vm179, %v124, 0
    %v475 = vsel %vm179, %v125, 0
    %v478 = vsel %vm179, %v126, 0
    %v481 = vsel %vm179, %v127, 0
    %v484 = vsel %vm179, %v128, 0
    %v487 = vsel %vm179, %v129, 0
    %v490 = vsel %vm179, %v130, 0
    %v493 = vsel %vm179, %v131, 0
    %v496 = vsel %vm179, %v132, 0
    %v499 = vsel %vm179, %v133, 0
    %v502 = vsel %vm179, %v134, 0
    %v505 = vsel %vm179, %v135, 0
    %v508 = vsel %vm179, %v136, 0
    %v511 = vsel %vm179, %v137, 0
    %v514 = vsel %vm179, %v138, 0
    %v517 = vsel %vm179, %v139, 0
    %v520 = vsel %vm179, %v140, 0
    %v523 = vsel %vm179, %v141, 0
    %v526 = vsel %vm179, %v142, 0
    %v529 = vsel %vm179, %v143, 0
    %v532 = vsel %vm179, %v144, 0
    %v535 = vsel %vm179, %v145, 0
    %v538 = vsel %vm179, %v146, 0
    %v541 = vsel %vm179, %v147, 0
    %v544 = vsel %vm179, %v148, 0
    %v547 = vsel %vm179, %v149, 0
    %v550 = vsel %vm179, %v150, 0
    %v553 = vsel %vm179, %v151, 0
    %v556 = vsel %vm179, %v152, 0
    %v559 = vsel %vm179, %v153, 0
    %v562 = vsel %vm179, %v154, 0
    %v565 = vsel %vm179, %v155, 0
    %v568 = vsel %vm179, %v156, 0
    %v571 = vsel %vm179, %v157, 0
    %v574 = vsel %vm179, %v158, 0
    %v577 = vsel %vm179, %v159, 0
    %v580 = vsel %vm179, %v160, 0
    %v583 = vsel %vm179, %v161, 0
    %v586 = vsel %vm179, %v162, 0
    %v589 = vsel %vm179, %v163, 0
    %v592 = vsel %vm179, %v164, 0
    %v595 = vsel %vm179, %v165, 0
    %v598 = vsel %vm179, %v166, 0
    %v601 = vsel %vm179, %v167, 0
    %v604 = vsel %vm179, %v168, 0
    %v607 = vsel %vm179, %v169, 0
    %v610 = vsel %vm179, %v170, 0
    %vm612 = vcmask 1040384
    %v614 = vsel %vm612, %v174, 0
    %616 = vmatpush.msra.mxu0 0.0
    %617 = vmatpush.msra.mxu0 0.0
    %618 = vmatpush.msra.mxu0 0.0
    %619 = vmatpush.msra.mxu0 0.0
    %620 = vmatpush.msra.mxu0 0.0
    %621 = vmatpush.msra.mxu0 0.0
    %622 = vmatpush.msra.mxu0 0.0
    %623 = vmatpush.msra.mxu0 0.0
    %624 = vmatpush.msra.mxu0 0.0
    %625 = vmatpush.msra.mxu0 0.0
    %626 = vmatpush.msra.mxu0 0.0
    %627 = vmatpush.msra.mxu0 0.0
    %628 = vmatpush.msra.mxu0 %v614
    %629 = vmatpush.msra.mxu0 %v173
    %630 = vmatpush.msra.mxu0 %v172
    %631 = vmatpush.msra.mxu0 %v171
    %632 = vmatmul.f32.gmra.mxu0 %v181
    %v633 = vpop.f32.mrf.mxu0
    %v634 = vadd.f32 %v177, %v633
    %635 = vmatmul.f32.gmra.mxu0 %v184
    %v636 = vpop.f32.mrf.mxu0
    %v637 = vadd.f32 %v177, %v636
    %638 = vmatmul.f32.gmra.mxu0 %v187
    %v639 = vpop.f32.mrf.mxu0
    %v640 = vadd.f32 %v177, %v639
    %641 = vmatmul.f32.gmra.mxu0 %v190
    %v642 = vpop.f32.mrf.mxu0
    %v643 = vadd.f32 %v177, %v642
    %644 = vmatmul.f32.gmra.mxu0 %v193
    %v645 = vpop.f32.mrf.mxu0
    %v646 = vadd.f32 %v177, %v645
    %647 = vmatmul.f32.gmra.mxu0 %v196
    %v648 = vpop.f32.mrf.mxu0
    %v649 = vadd.f32 %v177, %v648
    %650 = vmatmul.f32.gmra.mxu0 %v199
    %v651 = vpop.f32.mrf.mxu0
    %v652 = vadd.f32 %v177, %v651
    %653 = vmatmul.f32.gmra.mxu0 %v202
    %v654 = vpop.f32.mrf.mxu0
    %v655 = vadd.f32 %v177, %v654
    %656 = vmatmul.f32.gmra.mxu0 %v205
    %v657 = vpop.f32.mrf.mxu0
    %v658 = vadd.f32 %v177, %v657
    %659 = vmatmul.f32.gmra.mxu0 %v208
    %v660 = vpop.f32.mrf.mxu0
    %v661 = vadd.f32 %v177, %v660
    %662 = vmatmul.f32.gmra.mxu0 %v211
    %v663 = vpop.f32.mrf.mxu0
    %v664 = vadd.f32 %v177, %v663
    %665 = vmatmul.f32.gmra.mxu0 %v214
    %v666 = vpop.f32.mrf.mxu0
    %v667 = vadd.f32 %v177, %v666
    %668 = vmatmul.f32.gmra.mxu0 %v217
    %v669 = vpop.f32.mrf.mxu0
    %v670 = vadd.f32 %v177, %v669
    %671 = vmatmul.f32.gmra.mxu0 %v220
    %v672 = vpop.f32.mrf.mxu0
    %v673 = vadd.f32 %v177, %v672
    %674 = vmatmul.f32.gmra.mxu0 %v223
    %v675 = vpop.f32.mrf.mxu0
    %v676 = vadd.f32 %v177, %v675
    %677 = vmatmul.f32.gmra.mxu0 %v226
    %v678 = vpop.f32.mrf.mxu0
    %v679 = vadd.f32 %v177, %v678
    %680 = vmatmul.f32.gmra.mxu0 %v229
    %v681 = vpop.f32.mrf.mxu0
    %v682 = vadd.f32 %v177, %v681
    %683 = vmatmul.f32.gmra.mxu0 %v232
    %v684 = vpop.f32.mrf.mxu0
    %v685 = vadd.f32 %v177, %v684
    %686 = vmatmul.f32.gmra.mxu0 %v235
    %v687 = vpop.f32.mrf.mxu0
    %v688 = vadd.f32 %v177, %v687
    %689 = vmatmul.f32.gmra.mxu0 %v238
    %v690 = vpop.f32.mrf.mxu0
    %v691 = vadd.f32 %v177, %v690
    %692 = vmatmul.f32.gmra.mxu0 %v241
    %v693 = vpop.f32.mrf.mxu0
    %v694 = vadd.f32 %v177, %v693
    %695 = vmatmul.f32.gmra.mxu0 %v244
    %v696 = vpop.f32.mrf.mxu0
    %v697 = vadd.f32 %v177, %v696
    %698 = vmatmul.f32.gmra.mxu0 %v247
    %v699 = vpop.f32.mrf.mxu0
    %v700 = vadd.f32 %v177, %v699
    %701 = vmatmul.f32.gmra.mxu0 %v250
    %v702 = vpop.f32.mrf.mxu0
    %v703 = vadd.f32 %v177, %v702
    %704 = vmatmul.f32.gmra.mxu0 %v253
    %v705 = vpop.f32.mrf.mxu0
    %v706 = vadd.f32 %v177, %v705
    %707 = vmatmul.f32.gmra.mxu0 %v256
    %v708 = vpop.f32.mrf.mxu0
    %v709 = vadd.f32 %v177, %v708
    %710 = vmatmul.f32.gmra.mxu0 %v259
    %v711 = vpop.f32.mrf.mxu0
    %v712 = vadd.f32 %v177, %v711
    %713 = vmatmul.f32.gmra.mxu0 %v262
    %v714 = vpop.f32.mrf.mxu0
    %v715 = vadd.f32 %v177, %v714
    %716 = vmatmul.f32.gmra.mxu0 %v265
    %v717 = vpop.f32.mrf.mxu0
    %v718 = vadd.f32 %v177, %v717
    %719 = vmatmul.f32.gmra.mxu0 %v268
    %v720 = vpop.f32.mrf.mxu0
    %v721 = vadd.f32 %v177, %v720
    %722 = vmatmul.f32.gmra.mxu0 %v271
    %v723 = vpop.f32.mrf.mxu0
    %v724 = vadd.f32 %v177, %v723
    %725 = vmatmul.f32.gmra.mxu0 %v274
    %v726 = vpop.f32.mrf.mxu0
    %v727 = vadd.f32 %v177, %v726
    %728 = vmatmul.f32.gmra.mxu0 %v277
    %v729 = vpop.f32.mrf.mxu0
    %v730 = vadd.f32 %v177, %v729
    %731 = vmatmul.f32.gmra.mxu0 %v280
    %v732 = vpop.f32.mrf.mxu0
    %v733 = vadd.f32 %v177, %v732
    %734 = vmatmul.f32.gmra.mxu0 %v283
    %v735 = vpop.f32.mrf.mxu0
    %v736 = vadd.f32 %v177, %v735
    %737 = vmatmul.f32.gmra.mxu0 %v286
    %v738 = vpop.f32.mrf.mxu0
    %v739 = vadd.f32 %v177, %v738
    %740 = vmatmul.f32.gmra.mxu0 %v289
    %v741 = vpop.f32.mrf.mxu0
    %v742 = vadd.f32 %v177, %v741
    %743 = vmatmul.f32.gmra.mxu0 %v292
    %v744 = vpop.f32.mrf.mxu0
    %v745 = vadd.f32 %v177, %v744
    %746 = vmatmul.f32.gmra.mxu0 %v295
    %v747 = vpop.f32.mrf.mxu0
    %v748 = vadd.f32 %v177, %v747
    %749 = vmatmul.f32.gmra.mxu0 %v298
    %v750 = vpop.f32.mrf.mxu0
    %v751 = vadd.f32 %v177, %v750
    %752 = vmatmul.f32.gmra.mxu0 %v301
    %v753 = vpop.f32.mrf.mxu0
    %v754 = vadd.f32 %v177, %v753
    %755 = vmatmul.f32.gmra.mxu0 %v304
    %v756 = vpop.f32.mrf.mxu0
    %v757 = vadd.f32 %v177, %v756
    %758 = vmatmul.f32.gmra.mxu0 %v307
    %v759 = vpop.f32.mrf.mxu0
    %v760 = vadd.f32 %v177, %v759
    %761 = vmatmul.f32.gmra.mxu0 %v310
    %v762 = vpop.f32.mrf.mxu0
    %v763 = vadd.f32 %v177, %v762
    %764 = vmatmul.f32.gmra.mxu0 %v313
    %v765 = vpop.f32.mrf.mxu0
    %v766 = vadd.f32 %v177, %v765
    %767 = vmatmul.f32.gmra.mxu0 %v316
    %v768 = vpop.f32.mrf.mxu0
    %v769 = vadd.f32 %v177, %v768
    %770 = vmatmul.f32.gmra.mxu0 %v319
    %v771 = vpop.f32.mrf.mxu0
    %v772 = vadd.f32 %v177, %v771
    %773 = vmatmul.f32.gmra.mxu0 %v322
    %v774 = vpop.f32.mrf.mxu0
    %v775 = vadd.f32 %v177, %v774
    %776 = vmatmul.f32.gmra.mxu0 %v325
    %v777 = vpop.f32.mrf.mxu0
    %v778 = vadd.f32 %v177, %v777
    %779 = vmatmul.f32.gmra.mxu0 %v328
    %v780 = vpop.f32.mrf.mxu0
    %v781 = vadd.f32 %v177, %v780
    %782 = vmatmul.f32.gmra.mxu0 %v331
    %v783 = vpop.f32.mrf.mxu0
    %v784 = vadd.f32 %v177, %v783
    %785 = vmatmul.f32.gmra.mxu0 %v334
    %v786 = vpop.f32.mrf.mxu0
    %v787 = vadd.f32 %v177, %v786
    %788 = vmatmul.f32.gmra.mxu0 %v337
    %v789 = vpop.f32.mrf.mxu0
    %v790 = vadd.f32 %v177, %v789
    %791 = vmatmul.f32.gmra.mxu0 %v340
    %v792 = vpop.f32.mrf.mxu0
    %v793 = vadd.f32 %v177, %v792
    %794 = vmatmul.f32.gmra.mxu0 %v343
    %v795 = vpop.f32.mrf.mxu0
    %v796 = vadd.f32 %v177, %v795
    %797 = vmatmul.f32.gmra.mxu0 %v346
    %v798 = vpop.f32.mrf.mxu0
    %v799 = vadd.f32 %v177, %v798
    %800 = vmatmul.f32.gmra.mxu0 %v349
    %v801 = vpop.f32.mrf.mxu0
    %v802 = vadd.f32 %v177, %v801
    %803 = vmatmul.f32.gmra.mxu0 %v352
    %v804 = vpop.f32.mrf.mxu0
    %v805 = vadd.f32 %v177, %v804
    %806 = vmatmul.f32.gmra.mxu0 %v355
    %v807 = vpop.f32.mrf.mxu0
    %v808 = vadd.f32 %v177, %v807
    %809 = vmatmul.f32.gmra.mxu0 %v358
    %v810 = vpop.f32.mrf.mxu0
    %v811 = vadd.f32 %v177, %v810
    %812 = vmatmul.f32.gmra.mxu0 %v361
    %v813 = vpop.f32.mrf.mxu0
    %v814 = vadd.f32 %v177, %v813
    %815 = vmatmul.f32.gmra.mxu0 %v364
    %v816 = vpop.f32.mrf.mxu0
    %v817 = vadd.f32 %v177, %v816
    %818 = vmatmul.f32.gmra.mxu0 %v367
    %v819 = vpop.f32.mrf.mxu0
    %v820 = vadd.f32 %v177, %v819
    %821 = vmatmul.f32.gmra.mxu0 %v370
    %v822 = vpop.f32.mrf.mxu0
    %v823 = vadd.f32 %v177, %v822
    %824 = vmatmul.f32.gmra.mxu0 %v373
    %v825 = vpop.f32.mrf.mxu0
    %v826 = vadd.f32 %v177, %v825
    %827 = vmatmul.f32.gmra.mxu0 %v376
    %v828 = vpop.f32.mrf.mxu0
    %v829 = vadd.f32 %v177, %v828
    %830 = vmatmul.f32.gmra.mxu0 %v379
    %v831 = vpop.f32.mrf.mxu0
    %v832 = vadd.f32 %v177, %v831
    %833 = vmatmul.f32.gmra.mxu0 %v382
    %v834 = vpop.f32.mrf.mxu0
    %v835 = vadd.f32 %v177, %v834
    %836 = vmatmul.f32.gmra.mxu0 %v385
    %v837 = vpop.f32.mrf.mxu0
    %v838 = vadd.f32 %v177, %v837
    %839 = vmatmul.f32.gmra.mxu0 %v388
    %v840 = vpop.f32.mrf.mxu0
    %v841 = vadd.f32 %v177, %v840
    %842 = vmatmul.f32.gmra.mxu0 %v391
    %v843 = vpop.f32.mrf.mxu0
    %v844 = vadd.f32 %v177, %v843
    %845 = vmatmul.f32.gmra.mxu0 %v394
    %v846 = vpop.f32.mrf.mxu0
    %v847 = vadd.f32 %v177, %v846
    %848 = vmatmul.f32.gmra.mxu0 %v397
    %v849 = vpop.f32.mrf.mxu0
    %v850 = vadd.f32 %v177, %v849
    %851 = vmatmul.f32.gmra.mxu0 %v400
    %v852 = vpop.f32.mrf.mxu0
    %v853 = vadd.f32 %v177, %v852
    %854 = vmatmul.f32.gmra.mxu0 %v403
    %v855 = vpop.f32.mrf.mxu0
    %v856 = vadd.f32 %v177, %v855
    %857 = vmatmul.f32.gmra.mxu0 %v406
    %v858 = vpop.f32.mrf.mxu0
    %v859 = vadd.f32 %v177, %v858
    %860 = vmatmul.f32.gmra.mxu0 %v409
    %v861 = vpop.f32.mrf.mxu0
    %v862 = vadd.f32 %v177, %v861
    %863 = vmatmul.f32.gmra.mxu0 %v412
    %v864 = vpop.f32.mrf.mxu0
    %v865 = vadd.f32 %v177, %v864
    %866 = vmatmul.f32.gmra.mxu0 %v415
    %v867 = vpop.f32.mrf.mxu0
    %v868 = vadd.f32 %v177, %v867
    %869 = vmatmul.f32.gmra.mxu0 %v418
    %v870 = vpop.f32.mrf.mxu0
    %v871 = vadd.f32 %v177, %v870
    %872 = vmatmul.f32.gmra.mxu0 %v421
    %v873 = vpop.f32.mrf.mxu0
    %v874 = vadd.f32 %v177, %v873
    %875 = vmatmul.f32.gmra.mxu0 %v424
    %v876 = vpop.f32.mrf.mxu0
    %v877 = vadd.f32 %v177, %v876
    %878 = vmatmul.f32.gmra.mxu0 %v427
    %v879 = vpop.f32.mrf.mxu0
    %v880 = vadd.f32 %v177, %v879
    %881 = vmatmul.f32.gmra.mxu0 %v430
    %v882 = vpop.f32.mrf.mxu0
    %v883 = vadd.f32 %v177, %v882
    %884 = vmatmul.f32.gmra.mxu0 %v433
    %v885 = vpop.f32.mrf.mxu0
    %v886 = vadd.f32 %v177, %v885
    %887 = vmatmul.f32.gmra.mxu0 %v436
    %v888 = vpop.f32.mrf.mxu0
    %v889 = vadd.f32 %v177, %v888
    %890 = vmatmul.f32.gmra.mxu0 %v439
    %v891 = vpop.f32.mrf.mxu0
    %v892 = vadd.f32 %v177, %v891
    %893 = vmatmul.f32.gmra.mxu0 %v442
    %v894 = vpop.f32.mrf.mxu0
    %v895 = vadd.f32 %v177, %v894
    %896 = vmatmul.f32.gmra.mxu0 %v445
    %v897 = vpop.f32.mrf.mxu0
    %v898 = vadd.f32 %v177, %v897
    %899 = vmatmul.f32.gmra.mxu0 %v448
    %v900 = vpop.f32.mrf.mxu0
    %v901 = vadd.f32 %v177, %v900
    %902 = vmatmul.f32.gmra.mxu0 %v451
    %v903 = vpop.f32.mrf.mxu0
    %v904 = vadd.f32 %v177, %v903
    %905 = vmatmul.f32.gmra.mxu0 %v454
    %v906 = vpop.f32.mrf.mxu0
    %v907 = vadd.f32 %v177, %v906
    %908 = vmatmul.f32.gmra.mxu0 %v457
    %v909 = vpop.f32.mrf.mxu0
    %v910 = vadd.f32 %v177, %v909
    %911 = vmatmul.f32.gmra.mxu0 %v460
    %v912 = vpop.f32.mrf.mxu0
    %v913 = vadd.f32 %v177, %v912
    %914 = vmatmul.f32.gmra.mxu0 %v463
    %v915 = vpop.f32.mrf.mxu0
    %v916 = vadd.f32 %v177, %v915
    %917 = vmatmul.f32.gmra.mxu0 %v466
    %v918 = vpop.f32.mrf.mxu0
    %v919 = vadd.f32 %v177, %v918
    %920 = vmatmul.f32.gmra.mxu0 %v469
    %v921 = vpop.f32.mrf.mxu0
    %v922 = vadd.f32 %v177, %v921
    %923 = vmatmul.f32.gmra.mxu0 %v472
    %v924 = vpop.f32.mrf.mxu0
    %v925 = vadd.f32 %v177, %v924
    %926 = vmatmul.f32.gmra.mxu0 %v475
    %v927 = vpop.f32.mrf.mxu0
    %v928 = vadd.f32 %v177, %v927
    %929 = vmatmul.f32.gmra.mxu0 %v478
    %v930 = vpop.f32.mrf.mxu0
    %v931 = vadd.f32 %v177, %v930
    %932 = vmatmul.f32.gmra.mxu0 %v481
    %v933 = vpop.f32.mrf.mxu0
    %v934 = vadd.f32 %v177, %v933
    %935 = vmatmul.f32.gmra.mxu0 %v484
    %v936 = vpop.f32.mrf.mxu0
    %v937 = vadd.f32 %v177, %v936
    %938 = vmatmul.f32.gmra.mxu0 %v487
    %v939 = vpop.f32.mrf.mxu0
    %v940 = vadd.f32 %v177, %v939
    %941 = vmatmul.f32.gmra.mxu0 %v490
    %v942 = vpop.f32.mrf.mxu0
    %v943 = vadd.f32 %v177, %v942
    %944 = vmatmul.f32.gmra.mxu0 %v493
    %v945 = vpop.f32.mrf.mxu0
    %v946 = vadd.f32 %v177, %v945
    %947 = vmatmul.f32.gmra.mxu0 %v496
    %v948 = vpop.f32.mrf.mxu0
    %v949 = vadd.f32 %v177, %v948
    %950 = vmatmul.f32.gmra.mxu0 %v499
    %v951 = vpop.f32.mrf.mxu0
    %v952 = vadd.f32 %v177, %v951
    %953 = vmatmul.f32.gmra.mxu0 %v502
    %v954 = vpop.f32.mrf.mxu0
    %v955 = vadd.f32 %v177, %v954
    %956 = vmatmul.f32.gmra.mxu0 %v505
    %v957 = vpop.f32.mrf.mxu0
    %v958 = vadd.f32 %v177, %v957
    %959 = vmatmul.f32.gmra.mxu0 %v508
    %v960 = vpop.f32.mrf.mxu0
    %v961 = vadd.f32 %v177, %v960
    %962 = vmatmul.f32.gmra.mxu0 %v511
    %v963 = vpop.f32.mrf.mxu0
    %v964 = vadd.f32 %v177, %v963
    %965 = vmatmul.f32.gmra.mxu0 %v514
    %v966 = vpop.f32.mrf.mxu0
    %v967 = vadd.f32 %v177, %v966
    %968 = vmatmul.f32.gmra.mxu0 %v517
    %v969 = vpop.f32.mrf.mxu0
    %v970 = vadd.f32 %v177, %v969
    %971 = vmatmul.f32.gmra.mxu0 %v520
    %v972 = vpop.f32.mrf.mxu0
    %v973 = vadd.f32 %v177, %v972
    %974 = vmatmul.f32.gmra.mxu0 %v523
    %v975 = vpop.f32.mrf.mxu0
    %v976 = vadd.f32 %v177, %v975
    %977 = vmatmul.f32.gmra.mxu0 %v526
    %v978 = vpop.f32.mrf.mxu0
    %v979 = vadd.f32 %v177, %v978
    %980 = vmatmul.f32.gmra.mxu0 %v529
    %v981 = vpop.f32.mrf.mxu0
    %v982 = vadd.f32 %v177, %v981
    %983 = vmatmul.f32.gmra.mxu0 %v532
    %v984 = vpop.f32.mrf.mxu0
    %v985 = vadd.f32 %v177, %v984
    %986 = vmatmul.f32.gmra.mxu0 %v535
    %v987 = vpop.f32.mrf.mxu0
    %v988 = vadd.f32 %v177, %v987
    %989 = vmatmul.f32.gmra.mxu0 %v538
    %v990 = vpop.f32.mrf.mxu0
    %v991 = vadd.f32 %v177, %v990
    %992 = vmatmul.f32.gmra.mxu0 %v541
    %v993 = vpop.f32.mrf.mxu0
    %v994 = vadd.f32 %v177, %v993
    %995 = vmatmul.f32.gmra.mxu0 %v544
    %v996 = vpop.f32.mrf.mxu0
    %v997 = vadd.f32 %v177, %v996
    %998 = vmatmul.f32.gmra.mxu0 %v547
    %v999 = vpop.f32.mrf.mxu0
    %v1000 = vadd.f32 %v177, %v999
    %1001 = vmatmul.f32.gmra.mxu0 %v550
    %v1002 = vpop.f32.mrf.mxu0
    %v1003 = vadd.f32 %v177, %v1002
    %1004 = vmatmul.f32.gmra.mxu0 %v553
    %v1005 = vpop.f32.mrf.mxu0
    %v1006 = vadd.f32 %v177, %v1005
    %1007 = vmatmul.f32.gmra.mxu0 %v556
    %v1008 = vpop.f32.mrf.mxu0
    %v1009 = vadd.f32 %v177, %v1008
    %1010 = vmatmul.f32.gmra.mxu0 %v559
    %v1011 = vpop.f32.mrf.mxu0
    %v1012 = vadd.f32 %v177, %v1011
    %1013 = vmatmul.f32.gmra.mxu0 %v562
    %v1014 = vpop.f32.mrf.mxu0
    %v1015 = vadd.f32 %v177, %v1014
    %1016 = vmatmul.f32.gmra.mxu0 %v565
    %v1017 = vpop.f32.mrf.mxu0
    %v1018 = vadd.f32 %v177, %v1017
    %1019 = vmatmul.f32.gmra.mxu0 %v568
    %v1020 = vpop.f32.mrf.mxu0
    %v1021 = vadd.f32 %v177, %v1020
    %1022 = vmatmul.f32.gmra.mxu0 %v571
    %v1023 = vpop.f32.mrf.mxu0
    %v1024 = vadd.f32 %v177, %v1023
    %1025 = vmatmul.f32.gmra.mxu0 %v574
    %v1026 = vpop.f32.mrf.mxu0
    %v1027 = vadd.f32 %v177, %v1026
    %1028 = vmatmul.f32.gmra.mxu0 %v577
    %v1029 = vpop.f32.mrf.mxu0
    %v1030 = vadd.f32 %v177, %v1029
    %1031 = vmatmul.f32.gmra.mxu0 %v580
    %v1032 = vpop.f32.mrf.mxu0
    %v1033 = vadd.f32 %v177, %v1032
    %1034 = vmatmul.f32.gmra.mxu0 %v583
    %v1035 = vpop.f32.mrf.mxu0
    %v1036 = vadd.f32 %v177, %v1035
    %1037 = vmatmul.f32.gmra.mxu0 %v586
    %v1038 = vpop.f32.mrf.mxu0
    %v1039 = vadd.f32 %v177, %v1038
    %1040 = vmatmul.f32.gmra.mxu0 %v589
    %v1041 = vpop.f32.mrf.mxu0
    %v1042 = vadd.f32 %v177, %v1041
    %1043 = vmatmul.f32.gmra.mxu0 %v592
    %v1044 = vpop.f32.mrf.mxu0
    %v1045 = vadd.f32 %v177, %v1044
    %1046 = vmatmul.f32.gmra.mxu0 %v595
    %v1047 = vpop.f32.mrf.mxu0
    %v1048 = vadd.f32 %v177, %v1047
    %1049 = vmatmul.f32.gmra.mxu0 %v598
    %v1050 = vpop.f32.mrf.mxu0
    %v1051 = vadd.f32 %v177, %v1050
    %1052 = vmatmul.f32.gmra.mxu0 %v601
    %v1053 = vpop.f32.mrf.mxu0
    %v1054 = vadd.f32 %v177, %v1053
    %1055 = vmatmul.f32.gmra.mxu0 %v604
    %v1056 = vpop.f32.mrf.mxu0
    %v1057 = vadd.f32 %v177, %v1056
    %1058 = vmatmul.f32.gmra.mxu0 %v607
    %v1059 = vpop.f32.mrf.mxu0
    %v1060 = vadd.f32 %v177, %v1059
    %1061 = vmatmul.f32.gmra.mxu0 %v610
    %v1062 = vpop.f32.mrf.mxu0
    %v1063 = vadd.f32 %v177, %v1062
    %1064 = vdwg.mxu0
    %v1065 = vmax.f32 %v634, %v688
    %v1066 = vmax.f32 %v637, %v691
    %v1067 = vmax.f32 %v640, %v694
    %v1068 = vmax.f32 %v643, %v697
    %v1069 = vmax.f32 %v646, %v700
    %v1070 = vmax.f32 %v649, %v703
    %v1071 = vmax.f32 %v652, %v706
    %v1072 = vmax.f32 %v655, %v709
    %v1073 = vmax.f32 %v658, %v712
    %v1074 = vmax.f32 %v661, %v715
    %v1075 = vmax.f32 %v664, %v718
    %v1076 = vmax.f32 %v667, %v721
    %v1077 = vmax.f32 %v670, %v724
    %v1078 = vmax.f32 %v673, %v727
    %v1079 = vmax.f32 %v676, %v730
    %v1080 = vmax.f32 %v679, %v733
    %v1081 = vmax.f32 %v682, %v736
    %v1082 = vmax.f32 %v685, %v739
    %v1083 = vmax.f32 %v850, %v904
    %v1084 = vmax.f32 %v853, %v907
    %v1085 = vmax.f32 %v856, %v910
    %v1086 = vmax.f32 %v859, %v913
    %v1087 = vmax.f32 %v862, %v916
    %v1088 = vmax.f32 %v865, %v919
    %v1089 = vmax.f32 %v868, %v922
    %v1090 = vmax.f32 %v871, %v925
    %v1091 = vmax.f32 %v874, %v928
    %v1092 = vmax.f32 %v877, %v931
    %v1093 = vmax.f32 %v880, %v934
    %v1094 = vmax.f32 %v883, %v937
    %v1095 = vmax.f32 %v886, %v940
    %v1096 = vmax.f32 %v889, %v943
    %v1097 = vmax.f32 %v892, %v946
    %v1098 = vmax.f32 %v895, %v949
    %v1099 = vmax.f32 %v898, %v952
    %v1100 = vmax.f32 %v901, %v955
    %v1101 = vmax.f32 %v742, %v796
    %v1102 = vmax.f32 %v745, %v799
    %v1103 = vmax.f32 %v748, %v802
    %v1104 = vmax.f32 %v751, %v805
    %v1105 = vmax.f32 %v754, %v808
    %v1106 = vmax.f32 %v757, %v811
    %v1107 = vmax.f32 %v760, %v814
    %v1108 = vmax.f32 %v763, %v817
    %v1109 = vmax.f32 %v766, %v820
    %v1110 = vmax.f32 %v769, %v823
    %v1111 = vmax.f32 %v772, %v826
    %v1112 = vmax.f32 %v775, %v829
    %v1113 = vmax.f32 %v778, %v832
    %v1114 = vmax.f32 %v781, %v835
    %v1115 = vmax.f32 %v784, %v838
    %v1116 = vmax.f32 %v787, %v841
    %v1117 = vmax.f32 %v790, %v844
    %v1118 = vmax.f32 %v793, %v847
    %v1119 = vmax.f32 %v958, %v1012
    %v1120 = vmax.f32 %v961, %v1015
    %v1121 = vmax.f32 %v964, %v1018
    %v1122 = vmax.f32 %v967, %v1021
    %v1123 = vmax.f32 %v970, %v1024
    %v1124 = vmax.f32 %v973, %v1027
    %v1125 = vmax.f32 %v976, %v1030
    %v1126 = vmax.f32 %v979, %v1033
    %v1127 = vmax.f32 %v982, %v1036
    %v1128 = vmax.f32 %v985, %v1039
    %v1129 = vmax.f32 %v988, %v1042
    %v1130 = vmax.f32 %v991, %v1045
    %v1131 = vmax.f32 %v994, %v1048
    %v1132 = vmax.f32 %v997, %v1051
    %v1133 = vmax.f32 %v1000, %v1054
    %v1134 = vmax.f32 %v1003, %v1057
    %v1135 = vmax.f32 %v1006, %v1060
    %v1136 = vmax.f32 %v1009, %v1063
    %v1137 = vmax.f32 %v1065, %v1101
    %v1138 = vmax.f32 %v1066, %v1102
    %v1139 = vmax.f32 %v1067, %v1103
    %v1140 = vmax.f32 %v1068, %v1104
    %v1141 = vmax.f32 %v1069, %v1105
    %v1142 = vmax.f32 %v1070, %v1106
    %v1143 = vmax.f32 %v1071, %v1107
    %v1144 = vmax.f32 %v1072, %v1108
    %v1145 = vmax.f32 %v1073, %v1109
    %v1146 = vmax.f32 %v1074, %v1110
    %v1147 = vmax.f32 %v1075, %v1111
    %v1148 = vmax.f32 %v1076, %v1112
    %v1149 = vmax.f32 %v1077, %v1113
    %v1150 = vmax.f32 %v1078, %v1114
    %v1151 = vmax.f32 %v1079, %v1115
    %v1152 = vmax.f32 %v1080, %v1116
    %v1153 = vmax.f32 %v1081, %v1117
    %v1154 = vmax.f32 %v1082, %v1118
    %v1155 = vmax.f32 %v1083, %v1119
    %v1156 = vmax.f32 %v1084, %v1120
    %v1157 = vmax.f32 %v1085, %v1121
    %v1158 = vmax.f32 %v1086, %v1122
    %v1159 = vmax.f32 %v1087, %v1123
    %v1160 = vmax.f32 %v1088, %v1124
    %v1161 = vmax.f32 %v1089, %v1125
    %v1162 = vmax.f32 %v1090, %v1126
    %v1163 = vmax.f32 %v1091, %v1127
    %v1164 = vmax.f32 %v1092, %v1128
    %v1165 = vmax.f32 %v1093, %v1129
    %v1166 = vmax.f32 %v1094, %v1130
    %v1167 = vmax.f32 %v1095, %v1131
    %v1168 = vmax.f32 %v1096, %v1132
    %v1169 = vmax.f32 %v1097, %v1133
    %v1170 = vmax.f32 %v1098, %v1134
    %v1171 = vmax.f32 %v1099, %v1135
    %v1172 = vmax.f32 %v1100, %v1136
    %v1173 = vmax.f32 %v1137, 0.0
    %v1174 = vmax.f32 %v1138, 0.0
    %v1175 = vmax.f32 %v1139, 0.0
    %v1176 = vmax.f32 %v1140, 0.0
    %v1177 = vmax.f32 %v1141, 0.0
    %v1178 = vmax.f32 %v1142, 0.0
    %v1179 = vmax.f32 %v1143, 0.0
    %v1180 = vmax.f32 %v1144, 0.0
    %v1181 = vmax.f32 %v1145, 0.0
    %v1182 = vmax.f32 %v1146, 0.0
    %v1183 = vmax.f32 %v1147, 0.0
    %v1184 = vmax.f32 %v1148, 0.0
    %v1185 = vmax.f32 %v1149, 0.0
    %v1186 = vmax.f32 %v1150, 0.0
    %v1187 = vmax.f32 %v1151, 0.0
    %v1188 = vmax.f32 %v1152, 0.0
    %v1189 = vmax.f32 %v1153, 0.0
    %v1190 = vmax.f32 %v1154, 0.0
    %v1191 = vmax.f32 %v1155, 0.0
    %v1192 = vmax.f32 %v1156, 0.0
    %v1193 = vmax.f32 %v1157, 0.0
    %v1194 = vmax.f32 %v1158, 0.0
    %v1195 = vmax.f32 %v1159, 0.0
    %v1196 = vmax.f32 %v1160, 0.0
    %v1197 = vmax.f32 %v1161, 0.0
    %v1198 = vmax.f32 %v1162, 0.0
    %v1199 = vmax.f32 %v1163, 0.0
    %v1200 = vmax.f32 %v1164, 0.0
    %v1201 = vmax.f32 %v1165, 0.0
    %v1202 = vmax.f32 %v1166, 0.0
    %v1203 = vmax.f32 %v1167, 0.0
    %v1204 = vmax.f32 %v1168, 0.0
    %v1205 = vmax.f32 %v1169, 0.0
    %v1206 = vmax.f32 %v1170, 0.0
    %v1207 = vmax.f32 %v1171, 0.0
    %v1208 = vmax.f32 %v1172, 0.0
    %v1245 = vrot.slane %v1173, 4
    %v1246 = vrot.slane %v1174, 4
    %v1247 = vrot.slane %v1175, 4
    %v1248 = vrot.slane %v1176, 4
    %v1249 = vrot.slane %v1177, 4
    %v1250 = vrot.slane %v1178, 4
    %v1251 = vrot.slane %v1179, 4
    %v1252 = vrot.slane %v1180, 4
    %v1253 = vrot.slane %v1181, 4
    %v1254 = vrot.slane %v1182, 4
    %v1255 = vrot.slane %v1183, 4
    %v1256 = vrot.slane %v1184, 4
    %v1257 = vrot.slane %v1185, 4
    %v1258 = vrot.slane %v1186, 4
    %v1259 = vrot.slane %v1187, 4
    %v1260 = vrot.slane %v1188, 4
    %v1261 = vrot.slane %v1189, 4
    %v1262 = vrot.slane %v1190, 4
    %v1263 = vrot.slane %v1191, 4
    %v1264 = vrot.slane %v1192, 4
    %v1265 = vrot.slane %v1193, 4
    %v1266 = vrot.slane %v1194, 4
    %v1267 = vrot.slane %v1195, 4
    %v1268 = vrot.slane %v1196, 4
    %v1269 = vrot.slane %v1197, 4
    %v1270 = vrot.slane %v1198, 4
    %v1271 = vrot.slane %v1199, 4
    %v1272 = vrot.slane %v1200, 4
    %v1273 = vrot.slane %v1201, 4
    %v1274 = vrot.slane %v1202, 4
    %v1275 = vrot.slane %v1203, 4
    %v1276 = vrot.slane %v1204, 4
    %v1277 = vrot.slane %v1205, 4
    %v1278 = vrot.slane %v1206, 4
    %v1279 = vrot.slane %v1207, 4
    %v1280 = vrot.slane %v1208, 4
    %vm1281 = vcmask 1042432
    %vm1282 = vcmask 1046532
    %vm1283 = vmor %vm1281, %vm1282
    %v1284 = vrot.slane %v1173, 5
    %v1285 = vrot.slane %v1284, 4
    %v1286 = vrot.slane %v1245, 5
    %v1287 = vsel %vm1283, %v1285, %v1286
    %v1288 = vrot.slane %v1286, 4
    %v1289 = vrot.slane %v1174, 5
    %v1290 = vsel %vm1283, %v1288, %v1289
    %v1291 = vrot.slane %v1246, 5
    %v1292 = vrot.slane %v1291, 4
    %v1293 = vrot.slane %v1175, 5
    %v1294 = vsel %vm1283, %v1292, %v1293
    %v1295 = vrot.slane %v1293, 4
    %v1296 = vrot.slane %v1247, 5
    %v1297 = vsel %vm1283, %v1295, %v1296
    %v1298 = vrot.slane %v1176, 5
    %v1299 = vrot.slane %v1298, 4
    %v1300 = vrot.slane %v1248, 5
    %v1301 = vsel %vm1283, %v1299, %v1300
    %v1302 = vrot.slane %v1300, 4
    %v1303 = vrot.slane %v1177, 5
    %v1304 = vsel %vm1283, %v1302, %v1303
    %v1305 = vrot.slane %v1249, 5
    %v1306 = vrot.slane %v1305, 4
    %v1307 = vrot.slane %v1178, 5
    %v1308 = vsel %vm1283, %v1306, %v1307
    %v1309 = vrot.slane %v1307, 4
    %v1310 = vrot.slane %v1250, 5
    %v1311 = vsel %vm1283, %v1309, %v1310
    %v1312 = vrot.slane %v1179, 5
    %v1313 = vrot.slane %v1312, 4
    %v1314 = vrot.slane %v1251, 5
    %v1315 = vsel %vm1283, %v1313, %v1314
    %v1316 = vrot.slane %v1314, 4
    %v1317 = vrot.slane %v1180, 5
    %v1318 = vsel %vm1283, %v1316, %v1317
    %v1319 = vrot.slane %v1252, 5
    %v1320 = vrot.slane %v1319, 4
    %v1321 = vrot.slane %v1181, 5
    %v1322 = vsel %vm1283, %v1320, %v1321
    %v1323 = vrot.slane %v1321, 4
    %v1324 = vrot.slane %v1253, 5
    %v1325 = vsel %vm1283, %v1323, %v1324
    %v1326 = vrot.slane %v1182, 5
    %v1327 = vrot.slane %v1326, 4
    %v1328 = vrot.slane %v1254, 5
    %v1329 = vsel %vm1283, %v1327, %v1328
    %v1330 = vrot.slane %v1328, 4
    %v1331 = vrot.slane %v1183, 5
    %v1332 = vsel %vm1283, %v1330, %v1331
    %v1333 = vrot.slane %v1255, 5
    %v1334 = vrot.slane %v1333, 4
    %v1335 = vrot.slane %v1184, 5
    %v1336 = vsel %vm1283, %v1334, %v1335
    %v1337 = vrot.slane %v1335, 4
    %v1338 = vrot.slane %v1256, 5
    %v1339 = vsel %vm1283, %v1337, %v1338
    %v1340 = vrot.slane %v1191, 5
    %v1341 = vrot.slane %v1340, 4
    %v1342 = vrot.slane %v1263, 5
    %v1343 = vsel %vm1283, %v1341, %v1342
    %v1344 = vrot.slane %v1342, 4
    %v1345 = vrot.slane %v1192, 5
    %v1346 = vsel %vm1283, %v1344, %v1345
    %v1347 = vrot.slane %v1264, 5
    %v1348 = vrot.slane %v1347, 4
    %v1349 = vrot.slane %v1193, 5
    %v1350 = vsel %vm1283, %v1348, %v1349
    %v1351 = vrot.slane %v1349, 4
    %v1352 = vrot.slane %v1265, 5
    %v1353 = vsel %vm1283, %v1351, %v1352
    %v1354 = vrot.slane %v1194, 5
    %v1355 = vrot.slane %v1354, 4
    %v1356 = vrot.slane %v1266, 5
    %v1357 = vsel %vm1283, %v1355, %v1356
    %v1358 = vrot.slane %v1356, 4
    %v1359 = vrot.slane %v1195, 5
    %v1360 = vsel %vm1283, %v1358, %v1359
    %v1361 = vrot.slane %v1267, 5
    %v1362 = vrot.slane %v1361, 4
    %v1363 = vrot.slane %v1196, 5
    %v1364 = vsel %vm1283, %v1362, %v1363
    %v1365 = vrot.slane %v1363, 4
    %v1366 = vrot.slane %v1268, 5
    %v1367 = vsel %vm1283, %v1365, %v1366
    %v1368 = vrot.slane %v1197, 5
    %v1369 = vrot.slane %v1368, 4
    %v1370 = vrot.slane %v1269, 5
    %v1371 = vsel %vm1283, %v1369, %v1370
    %v1372 = vrot.slane %v1370, 4
    %v1373 = vrot.slane %v1198, 5
    %v1374 = vsel %vm1283, %v1372, %v1373
    %v1375 = vrot.slane %v1270, 5
    %v1376 = vrot.slane %v1375, 4
    %v1377 = vrot.slane %v1199, 5
    %v1378 = vsel %vm1283, %v1376, %v1377
    %v1379 = vrot.slane %v1377, 4
    %v1380 = vrot.slane %v1271, 5
    %v1381 = vsel %vm1283, %v1379, %v1380
    %v1382 = vrot.slane %v1200, 5
    %v1383 = vrot.slane %v1382, 4
    %v1384 = vrot.slane %v1272, 5
    %v1385 = vsel %vm1283, %v1383, %v1384
    %v1386 = vrot.slane %v1384, 4
    %v1387 = vrot.slane %v1201, 5
    %v1388 = vsel %vm1283, %v1386, %v1387
    %v1389 = vrot.slane %v1273, 5
    %v1390 = vrot.slane %v1389, 4
    %v1391 = vrot.slane %v1202, 5
    %v1392 = vsel %vm1283, %v1390, %v1391
    %v1393 = vrot.slane %v1391, 4
    %v1394 = vrot.slane %v1274, 5
    %v1395 = vsel %vm1283, %v1393, %v1394
    %vm1396 = vcmask 1041408
    %vm1397 = vcmask 1045508
    %vm1398 = vmor %vm1396, %vm1397
    %v1399 = vrot.slane %v1173, 6
    %v1400 = vrot.slane %v1399, 4
    %v1401 = vrot.slane %v1245, 6
    %v1402 = vsel %vm1398, %v1400, %v1401
    %v1403 = vrot.slane %v1401, 4
    %v1404 = vrot.slane %v1174, 6
    %v1405 = vsel %vm1398, %v1403, %v1404
    %v1406 = vrot.slane %v1246, 6
    %v1407 = vrot.slane %v1406, 4
    %v1408 = vrot.slane %v1175, 6
    %v1409 = vsel %vm1398, %v1407, %v1408
    %v1410 = vrot.slane %v1408, 4
    %v1411 = vrot.slane %v1247, 6
    %v1412 = vsel %vm1398, %v1410, %v1411
    %v1413 = vrot.slane %v1176, 6
    %v1414 = vrot.slane %v1413, 4
    %v1415 = vrot.slane %v1248, 6
    %v1416 = vsel %vm1398, %v1414, %v1415
    %v1417 = vrot.slane %v1415, 4
    %v1418 = vrot.slane %v1177, 6
    %v1419 = vsel %vm1398, %v1417, %v1418
    %v1420 = vrot.slane %v1249, 6
    %v1421 = vrot.slane %v1420, 4
    %v1422 = vrot.slane %v1178, 6
    %v1423 = vsel %vm1398, %v1421, %v1422
    %v1424 = vrot.slane %v1422, 4
    %v1425 = vrot.slane %v1250, 6
    %v1426 = vsel %vm1398, %v1424, %v1425
    %v1427 = vrot.slane %v1179, 6
    %v1428 = vrot.slane %v1427, 4
    %v1429 = vrot.slane %v1251, 6
    %v1430 = vsel %vm1398, %v1428, %v1429
    %v1431 = vrot.slane %v1429, 4
    %v1432 = vrot.slane %v1180, 6
    %v1433 = vsel %vm1398, %v1431, %v1432
    %v1434 = vrot.slane %v1252, 6
    %v1435 = vrot.slane %v1434, 4
    %v1436 = vrot.slane %v1181, 6
    %v1437 = vsel %vm1398, %v1435, %v1436
    %v1438 = vrot.slane %v1436, 4
    %v1439 = vrot.slane %v1253, 6
    %v1440 = vsel %vm1398, %v1438, %v1439
    %v1441 = vrot.slane %v1182, 6
    %v1442 = vrot.slane %v1441, 4
    %v1443 = vrot.slane %v1254, 6
    %v1444 = vsel %vm1398, %v1442, %v1443
    %v1445 = vrot.slane %v1443, 4
    %v1446 = vrot.slane %v1183, 6
    %v1447 = vsel %vm1398, %v1445, %v1446
    %v1448 = vrot.slane %v1255, 6
    %v1449 = vrot.slane %v1448, 4
    %v1450 = vrot.slane %v1184, 6
    %v1451 = vsel %vm1398, %v1449, %v1450
    %v1452 = vrot.slane %v1450, 4
    %v1453 = vrot.slane %v1256, 6
    %v1454 = vsel %vm1398, %v1452, %v1453
    %v1455 = vrot.slane %v1191, 6
    %v1456 = vrot.slane %v1455, 4
    %v1457 = vrot.slane %v1263, 6
    %v1458 = vsel %vm1398, %v1456, %v1457
    %v1459 = vrot.slane %v1457, 4
    %v1460 = vrot.slane %v1192, 6
    %v1461 = vsel %vm1398, %v1459, %v1460
    %v1462 = vrot.slane %v1264, 6
    %v1463 = vrot.slane %v1462, 4
    %v1464 = vrot.slane %v1193, 6
    %v1465 = vsel %vm1398, %v1463, %v1464
    %v1466 = vrot.slane %v1464, 4
    %v1467 = vrot.slane %v1265, 6
    %v1468 = vsel %vm1398, %v1466, %v1467
    %v1469 = vrot.slane %v1194, 6
    %v1470 = vrot.slane %v1469, 4
    %v1471 = vrot.slane %v1266, 6
    %v1472 = vsel %vm1398, %v1470, %v1471
    %v1473 = vrot.slane %v1471, 4
    %v1474 = vrot.slane %v1195, 6
    %v1475 = vsel %vm1398, %v1473, %v1474
    %v1476 = vrot.slane %v1267, 6
    %v1477 = vrot.slane %v1476, 4
    %v1478 = vrot.slane %v1196, 6
    %v1479 = vsel %vm1398, %v1477, %v1478
    %v1480 = vrot.slane %v1478, 4
    %v1481 = vrot.slane %v1268, 6
    %v1482 = vsel %vm1398, %v1480, %v1481
    %v1483 = vrot.slane %v1197, 6
    %v1484 = vrot.slane %v1483, 4
    %v1485 = vrot.slane %v1269, 6
    %v1486 = vsel %vm1398, %v1484, %v1485
    %v1487 = vrot.slane %v1485, 4
    %v1488 = vrot.slane %v1198, 6
    %v1489 = vsel %vm1398, %v1487, %v1488
    %v1490 = vrot.slane %v1270, 6
    %v1491 = vrot.slane %v1490, 4
    %v1492 = vrot.slane %v1199, 6
    %v1493 = vsel %vm1398, %v1491, %v1492
    %v1494 = vrot.slane %v1492, 4
    %v1495 = vrot.slane %v1271, 6
    %v1496 = vsel %vm1398, %v1494, %v1495
    %v1497 = vrot.slane %v1200, 6
    %v1498 = vrot.slane %v1497, 4
    %v1499 = vrot.slane %v1272, 6
    %v1500 = vsel %vm1398, %v1498, %v1499
    %v1501 = vrot.slane %v1499, 4
    %v1502 = vrot.slane %v1201, 6
    %v1503 = vsel %vm1398, %v1501, %v1502
    %v1504 = vrot.slane %v1273, 6
    %v1505 = vrot.slane %v1504, 4
    %v1506 = vrot.slane %v1202, 6
    %v1507 = vsel %vm1398, %v1505, %v1506
    %v1508 = vrot.slane %v1506, 4
    %v1509 = vrot.slane %v1274, 6
    %v1510 = vsel %vm1398, %v1508, %v1509
    %vm1511 = vcmask 1044484
    %vm1512 = vmor %vm612, %vm1511
    %v1513 = vrot.slane %v1173, 7
    %v1514 = vrot.slane %v1513, 4
    %v1515 = vrot.slane %v1245, 7
    %v1516 = vsel %vm1512, %v1514, %v1515
    %v1517 = vrot.slane %v1515, 4
    %v1518 = vrot.slane %v1174, 7
    %v1519 = vsel %vm1512, %v1517, %v1518
    %v1520 = vrot.slane %v1246, 7
    %v1521 = vrot.slane %v1520, 4
    %v1522 = vrot.slane %v1175, 7
    %v1523 = vsel %vm1512, %v1521, %v1522
    %v1524 = vrot.slane %v1522, 4
    %v1525 = vrot.slane %v1247, 7
    %v1526 = vsel %vm1512, %v1524, %v1525
    %v1527 = vrot.slane %v1176, 7
    %v1528 = vrot.slane %v1527, 4
    %v1529 = vrot.slane %v1248, 7
    %v1530 = vsel %vm1512, %v1528, %v1529
    %v1531 = vrot.slane %v1529, 4
    %v1532 = vrot.slane %v1177, 7
    %v1533 = vsel %vm1512, %v1531, %v1532
    %v1534 = vrot.slane %v1249, 7
    %v1535 = vrot.slane %v1534, 4
    %v1536 = vrot.slane %v1178, 7
    %v1537 = vsel %vm1512, %v1535, %v1536
    %v1538 = vrot.slane %v1536, 4
    %v1539 = vrot.slane %v1250, 7
    %v1540 = vsel %vm1512, %v1538, %v1539
    %v1541 = vrot.slane %v1179, 7
    %v1542 = vrot.slane %v1541, 4
    %v1543 = vrot.slane %v1251, 7
    %v1544 = vsel %vm1512, %v1542, %v1543
    %v1545 = vrot.slane %v1543, 4
    %v1546 = vrot.slane %v1180, 7
    %v1547 = vsel %vm1512, %v1545, %v1546
    %v1548 = vrot.slane %v1252, 7
    %v1549 = vrot.slane %v1548, 4
    %v1550 = vrot.slane %v1181, 7
    %v1551 = vsel %vm1512, %v1549, %v1550
    %v1552 = vrot.slane %v1550, 4
    %v1553 = vrot.slane %v1253, 7
    %v1554 = vsel %vm1512, %v1552, %v1553
    %v1555 = vrot.slane %v1182, 7
    %v1556 = vrot.slane %v1555, 4
    %v1557 = vrot.slane %v1254, 7
    %v1558 = vsel %vm1512, %v1556, %v1557
    %v1559 = vrot.slane %v1557, 4
    %v1560 = vrot.slane %v1183, 7
    %v1561 = vsel %vm1512, %v1559, %v1560
    %v1562 = vrot.slane %v1255, 7
    %v1563 = vrot.slane %v1562, 4
    %v1564 = vrot.slane %v1184, 7
    %v1565 = vsel %vm1512, %v1563, %v1564
    %v1566 = vrot.slane %v1564, 4
    %v1567 = vrot.slane %v1256, 7
    %v1568 = vsel %vm1512, %v1566, %v1567
    %v1569 = vrot.slane %v1191, 7
    %v1570 = vrot.slane %v1569, 4
    %v1571 = vrot.slane %v1263, 7
    %v1572 = vsel %vm1512, %v1570, %v1571
    %v1573 = vrot.slane %v1571, 4
    %v1574 = vrot.slane %v1192, 7
    %v1575 = vsel %vm1512, %v1573, %v1574
    %v1576 = vrot.slane %v1264, 7
    %v1577 = vrot.slane %v1576, 4
    %v1578 = vrot.slane %v1193, 7
    %v1579 = vsel %vm1512, %v1577, %v1578
    %v1580 = vrot.slane %v1578, 4
    %v1581 = vrot.slane %v1265, 7
    %v1582 = vsel %vm1512, %v1580, %v1581
    %v1583 = vrot.slane %v1194, 7
    %v1584 = vrot.slane %v1583, 4
    %v1585 = vrot.slane %v1266, 7
    %v1586 = vsel %vm1512, %v1584, %v1585
    %v1587 = vrot.slane %v1585, 4
    %v1588 = vrot.slane %v1195, 7
    %v1589 = vsel %vm1512, %v1587, %v1588
    %v1590 = vrot.slane %v1267, 7
    %v1591 = vrot.slane %v1590, 4
    %v1592 = vrot.slane %v1196, 7
    %v1593 = vsel %vm1512, %v1591, %v1592
    %v1594 = vrot.slane %v1592, 4
    %v1595 = vrot.slane %v1268, 7
    %v1596 = vsel %vm1512, %v1594, %v1595
    %v1597 = vrot.slane %v1197, 7
    %v1598 = vrot.slane %v1597, 4
    %v1599 = vrot.slane %v1269, 7
    %v1600 = vsel %vm1512, %v1598, %v1599
    %v1601 = vrot.slane %v1599, 4
    %v1602 = vrot.slane %v1198, 7
    %v1603 = vsel %vm1512, %v1601, %v1602
    %v1604 = vrot.slane %v1270, 7
    %v1605 = vrot.slane %v1604, 4
    %v1606 = vrot.slane %v1199, 7
    %v1607 = vsel %vm1512, %v1605, %v1606
    %v1608 = vrot.slane %v1606, 4
    %v1609 = vrot.slane %v1271, 7
    %v1610 = vsel %vm1512, %v1608, %v1609
    %v1611 = vrot.slane %v1200, 7
    %v1612 = vrot.slane %v1611, 4
    %v1613 = vrot.slane %v1272, 7
    %v1614 = vsel %vm1512, %v1612, %v1613
    %v1615 = vrot.slane %v1613, 4
    %v1616 = vrot.slane %v1201, 7
    %v1617 = vsel %vm1512, %v1615, %v1616
    %v1618 = vrot.slane %v1273, 7
    %v1619 = vrot.slane %v1618, 4
    %v1620 = vrot.slane %v1202, 7
    %v1621 = vsel %vm1512, %v1619, %v1620
    %v1622 = vrot.slane %v1620, 4
    %v1623 = vrot.slane %v1274, 7
    %v1624 = vsel %vm1512, %v1622, %v1623
    %v1625 = vrot.slane %v1185, 5
    %v1626 = vrot.slane %v1625, 4
    %v1627 = vrot.slane %v1257, 5
    %v1628 = vsel %vm1283, %v1626, %v1627
    %v1629 = vrot.slane %v1627, 4
    %v1630 = vrot.slane %v1186, 5
    %v1631 = vsel %vm1283, %v1629, %v1630
    %v1632 = vrot.slane %v1203, 5
    %v1633 = vrot.slane %v1632, 4
    %v1634 = vrot.slane %v1275, 5
    %v1635 = vsel %vm1283, %v1633, %v1634
    %v1636 = vrot.slane %v1634, 4
    %v1637 = vrot.slane %v1204, 5
    %v1638 = vsel %vm1283, %v1636, %v1637
    %v1639 = vrot.slane %v1185, 6
    %v1640 = vrot.slane %v1639, 4
    %v1641 = vrot.slane %v1257, 6
    %v1642 = vsel %vm1398, %v1640, %v1641
    %v1643 = vrot.slane %v1641, 4
    %v1644 = vrot.slane %v1186, 6
    %v1645 = vsel %vm1398, %v1643, %v1644
    %v1646 = vrot.slane %v1203, 6
    %v1647 = vrot.slane %v1646, 4
    %v1648 = vrot.slane %v1275, 6
    %v1649 = vsel %vm1398, %v1647, %v1648
    %v1650 = vrot.slane %v1648, 4
    %v1651 = vrot.slane %v1204, 6
    %v1652 = vsel %vm1398, %v1650, %v1651
    %v1653 = vrot.slane %v1185, 7
    %v1654 = vrot.slane %v1653, 4
    %v1655 = vrot.slane %v1257, 7
    %v1656 = vsel %vm1512, %v1654, %v1655
    %v1657 = vrot.slane %v1655, 4
    %v1658 = vrot.slane %v1186, 7
    %v1659 = vsel %vm1512, %v1657, %v1658
    %v1660 = vrot.slane %v1203, 7
    %v1661 = vrot.slane %v1660, 4
    %v1662 = vrot.slane %v1275, 7
    %v1663 = vsel %vm1512, %v1661, %v1662
    %v1664 = vrot.slane %v1662, 4
    %v1665 = vrot.slane %v1204, 7
    %v1666 = vsel %vm1512, %v1664, %v1665
    %v1667 = vrot.slane %v1258, 5
    %v1668 = vrot.slane %v1667, 4
    %v1669 = vrot.slane %v1187, 5
    %v1670 = vsel %vm1283, %v1668, %v1669
    %v1671 = vrot.slane %v1669, 4
    %v1672 = vrot.slane %v1259, 5
    %v1673 = vsel %vm1283, %v1671, %v1672
    %v1674 = vrot.slane %v1276, 5
    %v1675 = vrot.slane %v1674, 4
    %v1676 = vrot.slane %v1205, 5
    %v1677 = vsel %vm1283, %v1675, %v1676
    %v1678 = vrot.slane %v1676, 4
    %v1679 = vrot.slane %v1277, 5
    %v1680 = vsel %vm1283, %v1678, %v1679
    %v1681 = vrot.slane %v1258, 6
    %v1682 = vrot.slane %v1681, 4
    %v1683 = vrot.slane %v1187, 6
    %v1684 = vsel %vm1398, %v1682, %v1683
    %v1685 = vrot.slane %v1683, 4
    %v1686 = vrot.slane %v1259, 6
    %v1687 = vsel %vm1398, %v1685, %v1686
    %v1688 = vrot.slane %v1276, 6
    %v1689 = vrot.slane %v1688, 4
    %v1690 = vrot.slane %v1205, 6
    %v1691 = vsel %vm1398, %v1689, %v1690
    %v1692 = vrot.slane %v1690, 4
    %v1693 = vrot.slane %v1277, 6
    %v1694 = vsel %vm1398, %v1692, %v1693
    %v1695 = vrot.slane %v1258, 7
    %v1696 = vrot.slane %v1695, 4
    %v1697 = vrot.slane %v1187, 7
    %v1698 = vsel %vm1512, %v1696, %v1697
    %v1699 = vrot.slane %v1697, 4
    %v1700 = vrot.slane %v1259, 7
    %v1701 = vsel %vm1512, %v1699, %v1700
    %v1702 = vrot.slane %v1276, 7
    %v1703 = vrot.slane %v1702, 4
    %v1704 = vrot.slane %v1205, 7
    %v1705 = vsel %vm1512, %v1703, %v1704
    %v1706 = vrot.slane %v1704, 4
    %v1707 = vrot.slane %v1277, 7
    %v1708 = vsel %vm1512, %v1706, %v1707
    %v1709 = vrot.slane %v1188, 5
    %v1710 = vrot.slane %v1709, 4
    %v1711 = vrot.slane %v1260, 5
    %v1712 = vsel %vm1283, %v1710, %v1711
    %v1713 = vrot.slane %v1711, 4
    %v1714 = vrot.slane %v1189, 5
    %v1715 = vsel %vm1283, %v1713, %v1714
    %v1716 = vrot.slane %v1206, 5
    %v1717 = vrot.slane %v1716, 4
    %v1718 = vrot.slane %v1278, 5
    %v1719 = vsel %vm1283, %v1717, %v1718
    %v1720 = vrot.slane %v1718, 4
    %v1721 = vrot.slane %v1207, 5
    %v1722 = vsel %vm1283, %v1720, %v1721
    %v1723 = vrot.slane %v1188, 6
    %v1724 = vrot.slane %v1723, 4
    %v1725 = vrot.slane %v1260, 6
    %v1726 = vsel %vm1398, %v1724, %v1725
    %v1727 = vrot.slane %v1725, 4
    %v1728 = vrot.slane %v1189, 6
    %v1729 = vsel %vm1398, %v1727, %v1728
    %v1730 = vrot.slane %v1206, 6
    %v1731 = vrot.slane %v1730, 4
    %v1732 = vrot.slane %v1278, 6
    %v1733 = vsel %vm1398, %v1731, %v1732
    %v1734 = vrot.slane %v1732, 4
    %v1735 = vrot.slane %v1207, 6
    %v1736 = vsel %vm1398, %v1734, %v1735
    %v1737 = vrot.slane %v1188, 7
    %v1738 = vrot.slane %v1737, 4
    %v1739 = vrot.slane %v1260, 7
    %v1740 = vsel %vm1512, %v1738, %v1739
    %v1741 = vrot.slane %v1739, 4
    %v1742 = vrot.slane %v1189, 7
    %v1743 = vsel %vm1512, %v1741, %v1742
    %v1744 = vrot.slane %v1206, 7
    %v1745 = vrot.slane %v1744, 4
    %v1746 = vrot.slane %v1278, 7
    %v1747 = vsel %vm1512, %v1745, %v1746
    %v1748 = vrot.slane %v1746, 4
    %v1749 = vrot.slane %v1207, 7
    %v1750 = vsel %vm1512, %v1748, %v1749
    %v1751 = vrot.slane %v1261, 5
    %v1752 = vrot.slane %v1751, 4
    %v1753 = vrot.slane %v1190, 5
    %v1754 = vsel %vm1283, %v1752, %v1753
    %v1755 = vrot.slane %v1753, 4
    %v1756 = vrot.slane %v1262, 5
    %v1757 = vsel %vm1283, %v1755, %v1756
    %v1758 = vrot.slane %v1279, 5
    %v1759 = vrot.slane %v1758, 4
    %v1760 = vrot.slane %v1208, 5
    %v1761 = vsel %vm1283, %v1759, %v1760
    %v1762 = vrot.slane %v1760, 4
    %v1763 = vrot.slane %v1280, 5
    %v1764 = vsel %vm1283, %v1762, %v1763
    %v1765 = vrot.slane %v1261, 6
    %v1766 = vrot.slane %v1765, 4
    %v1767 = vrot.slane %v1190, 6
    %v1768 = vsel %vm1398, %v1766, %v1767
    %v1769 = vrot.slane %v1767, 4
    %v1770 = vrot.slane %v1262, 6
    %v1771 = vsel %vm1398, %v1769, %v1770
    %v1772 = vrot.slane %v1279, 6
    %v1773 = vrot.slane %v1772, 4
    %v1774 = vrot.slane %v1208, 6
    %v1775 = vsel %vm1398, %v1773, %v1774
    %v1776 = vrot.slane %v1774, 4
    %v1777 = vrot.slane %v1280, 6
    %v1778 = vsel %vm1398, %v1776, %v1777
    %v1779 = vrot.slane %v1261, 7
    %v1780 = vrot.slane %v1779, 4
    %v1781 = vrot.slane %v1190, 7
    %v1782 = vsel %vm1512, %v1780, %v1781
    %v1783 = vrot.slane %v1781, 4
    %v1784 = vrot.slane %v1262, 7
    %v1785 = vsel %vm1512, %v1783, %v1784
    %v1786 = vrot.slane %v1279, 7
    %v1787 = vrot.slane %v1786, 4
    %v1788 = vrot.slane %v1208, 7
    %v1789 = vsel %vm1512, %v1787, %v1788
    %v1790 = vrot.slane %v1788, 4
    %v1791 = vrot.slane %v1280, 7
    %v1792 = vsel %vm1512, %v1790, %v1791
    %1793 = vst [vmem:[#allocation1] ss:$2 sm:$0xff] %v1173
    %s1794 = scalar_lea.vmem [#allocation1], 1
    %1795 = vst [vmem:[%s1794] ss:$2 sm:$0xff] %v1245
    %s1796 = scalar_lea.vmem [#allocation1], 16
    %1797 = vst [vmem:[%s1796] ss:$2 sm:$0xff] %v1246
    %s1798 = scalar_lea.vmem [#allocation1], 17
    %1799 = vst [vmem:[%s1798] ss:$2 sm:$0xff] %v1175
    %s1800 = scalar_lea.vmem [#allocation1], 32
    %1801 = vst [vmem:[%s1800] ss:$2 sm:$0xff] %v1176
    %s1802 = scalar_lea.vmem [#allocation1], 33
    %1803 = vst [vmem:[%s1802] ss:$2 sm:$0xff] %v1248
    %s1804 = scalar_lea.vmem [#allocation1], 48
    %1805 = vst [vmem:[%s1804] ss:$2 sm:$0xff] %v1249
    %s1806 = scalar_lea.vmem [#allocation1], 49
    %1807 = vst [vmem:[%s1806] ss:$2 sm:$0xff] %v1178
    %v1808 = vld.sshfl [vmem:[#allocation1] sm:$0xff pattern:$0x75316420]
    %v1809 = vld.sshfl [vmem:[#allocation1 + $0x10] sm:$0xff pattern:$0x75316420]
    %v1810 = vld.sshfl [vmem:[#allocation1 + $0x20] sm:$0xff pattern:$0x75316420]
    %v1811 = vld.sshfl [vmem:[#allocation1 + $0x30] sm:$0xff pattern:$0x75316420]
    %1812 = vst [vmem:[#allocation1] ss:$2 sm:$0xff] %v1179
    %1813 = vst [vmem:[%s1794] ss:$2 sm:$0xff] %v1251
    %1814 = vst [vmem:[%s1796] ss:$2 sm:$0xff] %v1252
    %1815 = vst [vmem:[%s1798] ss:$2 sm:$0xff] %v1181
    %1816 = vst [vmem:[%s1800] ss:$2 sm:$0xff] %v1182
    %1817 = vst [vmem:[%s1802] ss:$2 sm:$0xff] %v1254
    %1818 = vst [vmem:[%s1804] ss:$2 sm:$0xff] %v1255
    %1819 = vst [vmem:[%s1806] ss:$2 sm:$0xff] %v1184
    %v1820 = vld.sshfl [vmem:[#allocation1] sm:$0xff pattern:$0x75316420]
    %v1821 = vld.sshfl [vmem:[#allocation1 + $0x10] sm:$0xff pattern:$0x75316420]
    %v1822 = vld.sshfl [vmem:[#allocation1 + $0x20] sm:$0xff pattern:$0x75316420]
    %v1823 = vld.sshfl [vmem:[#allocation1 + $0x30] sm:$0xff pattern:$0x75316420]
    %1824 = vst [vmem:[#allocation1] ss:$2 sm:$0xff] %v1191
    %1825 = vst [vmem:[%s1794] ss:$2 sm:$0xff] %v1263
    %1826 = vst [vmem:[%s1796] ss:$2 sm:$0xff] %v1264
    %1827 = vst [vmem:[%s1798] ss:$2 sm:$0xff] %v1193
    %1828 = vst [vmem:[%s1800] ss:$2 sm:$0xff] %v1194
    %1829 = vst [vmem:[%s1802] ss:$2 sm:$0xff] %v1266
    %1830 = vst [vmem:[%s1804] ss:$2 sm:$0xff] %v1267
    %1831 = vst [vmem:[%s1806] ss:$2 sm:$0xff] %v1196
    %v1832 = vld.sshfl [vmem:[#allocation1] sm:$0xff pattern:$0x75316420]
    %v1833 = vld.sshfl [vmem:[#allocation1 + $0x10] sm:$0xff pattern:$0x75316420]
    %v1834 = vld.sshfl [vmem:[#allocation1 + $0x20] sm:$0xff pattern:$0x75316420]
    %v1835 = vld.sshfl [vmem:[#allocation1 + $0x30] sm:$0xff pattern:$0x75316420]
    %1836 = vst [vmem:[#allocation1] ss:$2 sm:$0xff] %v1197
    %1837 = vst [vmem:[%s1794] ss:$2 sm:$0xff] %v1269
    %1838 = vst [vmem:[%s1796] ss:$2 sm:$0xff] %v1270
    %1839 = vst [vmem:[%s1798] ss:$2 sm:$0xff] %v1199
    %1840 = vst [vmem:[%s1800] ss:$2 sm:$0xff] %v1200
    %1841 = vst [vmem:[%s1802] ss:$2 sm:$0xff] %v1272
    %1842 = vst [vmem:[%s1804] ss:$2 sm:$0xff] %v1273
    %1843 = vst [vmem:[%s1806] ss:$2 sm:$0xff] %v1202
    %v1844 = vld.sshfl [vmem:[#allocation1] sm:$0xff pattern:$0x75316420]
    %v1845 = vld.sshfl [vmem:[#allocation1 + $0x10] sm:$0xff pattern:$0x75316420]
    %v1846 = vld.sshfl [vmem:[#allocation1 + $0x20] sm:$0xff pattern:$0x75316420]
    %v1847 = vld.sshfl [vmem:[#allocation1 + $0x30] sm:$0xff pattern:$0x75316420]
    %1864 = vst [vmem:[#allocation1] ss:$2 sm:$0xff] %v1287
    %s1865 = scalar_lea.vmem [#allocation1], 1
    %1866 = vst [vmem:[%s1865] ss:$2 sm:$0xff] %v1290
    %s1867 = scalar_lea.vmem [#allocation1], 16
    %1868 = vst [vmem:[%s1867] ss:$2 sm:$0xff] %v1294
    %s1869 = scalar_lea.vmem [#allocation1], 17
    %1870 = vst [vmem:[%s1869] ss:$2 sm:$0xff] %v1297
    %s1871 = scalar_lea.vmem [#allocation1], 32
    %1872 = vst [vmem:[%s1871] ss:$2 sm:$0xff] %v1301
    %s1873 = scalar_lea.vmem [#allocation1], 33
    %1874 = vst [vmem:[%s1873] ss:$2 sm:$0xff] %v1304
    %s1875 = scalar_lea.vmem [#allocation1], 48
    %1876 = vst [vmem:[%s1875] ss:$2 sm:$0xff] %v1308
    %s1877 = scalar_lea.vmem [#allocation1], 49
    %1878 = vst [vmem:[%s1877] ss:$2 sm:$0xff] %v1311
    %v1879 = vld.sshfl [vmem:[#allocation1] sm:$0xff pattern:$0x75316420]
    %v1880 = vld.sshfl [vmem:[#allocation1 + $0x10] sm:$0xff pattern:$0x75316420]
    %v1881 = vld.sshfl [vmem:[#allocation1 + $0x20] sm:$0xff pattern:$0x75316420]
    %v1882 = vld.sshfl [vmem:[#allocation1 + $0x30] sm:$0xff pattern:$0x75316420]
    %1883 = vst [vmem:[#allocation1] ss:$2 sm:$0xff] %v1315
    %1884 = vst [vmem:[%s1865] ss:$2 sm:$0xff] %v1318
    %1885 = vst [vmem:[%s1867] ss:$2 sm:$0xff] %v1322
    %1886 = vst [vmem:[%s1869] ss:$2 sm:$0xff] %v1325
    %1887 = vst [vmem:[%s1871] ss:$2 sm:$0xff] %v1329
    %1888 = vst [vmem:[%s1873] ss:$2 sm:$0xff] %v1332
    %1889 = vst [vmem:[%s1875] ss:$2 sm:$0xff] %v1336
    %1890 = vst [vmem:[%s1877] ss:$2 sm:$0xff] %v1339
    %v1891 = vld.sshfl [vmem:[#allocation1] sm:$0xff pattern:$0x75316420]
    %v1892 = vld.sshfl [vmem:[#allocation1 + $0x10] sm:$0xff pattern:$0x75316420]
    %v1893 = vld.sshfl [vmem:[#allocation1 + $0x20] sm:$0xff pattern:$0x75316420]
    %v1894 = vld.sshfl [vmem:[#allocation1 + $0x30] sm:$0xff pattern:$0x75316420]
    %1895 = vst [vmem:[#allocation1] ss:$2 sm:$0xff] %v1343
    %1896 = vst [vmem:[%s1865] ss:$2 sm:$0xff] %v1346
    %1897 = vst [vmem:[%s1867] ss:$2 sm:$0xff] %v1350
    %1898 = vst [vmem:[%s1869] ss:$2 sm:$0xff] %v1353
    %1899 = vst [vmem:[%s1871] ss:$2 sm:$0xff] %v1357
    %1900 = vst [vmem:[%s1873] ss:$2 sm:$0xff] %v1360
    %1901 = vst [vmem:[%s1875] ss:$2 sm:$0xff] %v1364
    %1902 = vst [vmem:[%s1877] ss:$2 sm:$0xff] %v1367
    %v1903 = vld.sshfl [vmem:[#allocation1] sm:$0xff pattern:$0x75316420]
    %v1904 = vld.sshfl [vmem:[#allocation1 + $0x10] sm:$0xff pattern:$0x75316420]
    %v1905 = vld.sshfl [vmem:[#allocation1 + $0x20] sm:$0xff pattern:$0x75316420]
    %v1906 = vld.sshfl [vmem:[#allocation1 + $0x30] sm:$0xff pattern:$0x75316420]
    %1907 = vst [vmem:[#allocation1] ss:$2 sm:$0xff] %v1371
    %1908 = vst [vmem:[%s1865] ss:$2 sm:$0xff] %v1374
    %1909 = vst [vmem:[%s1867] ss:$2 sm:$0xff] %v1378
    %1910 = vst [vmem:[%s1869] ss:$2 sm:$0xff] %v1381
    %1911 = vst [vmem:[%s1871] ss:$2 sm:$0xff] %v1385
    %1912 = vst [vmem:[%s1873] ss:$2 sm:$0xff] %v1388
    %1913 = vst [vmem:[%s1875] ss:$2 sm:$0xff] %v1392
    %1914 = vst [vmem:[%s1877] ss:$2 sm:$0xff] %v1395
    %v1915 = vld.sshfl [vmem:[#allocation1] sm:$0xff pattern:$0x75316420]
    %v1916 = vld.sshfl [vmem:[#allocation1 + $0x10] sm:$0xff pattern:$0x75316420]
    %v1917 = vld.sshfl [vmem:[#allocation1 + $0x20] sm:$0xff pattern:$0x75316420]
    %v1918 = vld.sshfl [vmem:[#allocation1 + $0x30] sm:$0xff pattern:$0x75316420]
    %1919 = vrot.lane.b32.xlu0 %v1879, 10
    %v1920 = vpop.permute.xlu0 %1919
    %1921 = vrot.lane.b32.xlu0 %v1880, 10
    %v1922 = vpop.permute.xlu0 %1921
    %1923 = vrot.lane.b32.xlu0 %v1881, 10
    %v1924 = vpop.permute.xlu0 %1923
    %1925 = vrot.lane.b32.xlu0 %v1882, 10
    %v1926 = vpop.permute.xlu0 %1925
    %1927 = vrot.lane.b32.xlu0 %v1891, 10
    %v1928 = vpop.permute.xlu0 %1927
    %1929 = vrot.lane.b32.xlu0 %v1892, 10
    %v1930 = vpop.permute.xlu0 %1929
    %1931 = vrot.lane.b32.xlu0 %v1893, 10
    %v1932 = vpop.permute.xlu0 %1931
    %1933 = vrot.lane.b32.xlu0 %v1894, 10
    %v1934 = vpop.permute.xlu0 %1933
    %1935 = vrot.lane.b32.xlu0 %v1903, 10
    %v1936 = vpop.permute.xlu0 %1935
    %1937 = vrot.lane.b32.xlu0 %v1904, 10
    %v1938 = vpop.permute.xlu0 %1937
    %1939 = vrot.lane.b32.xlu0 %v1905, 10
    %v1940 = vpop.permute.xlu0 %1939
    %1941 = vrot.lane.b32.xlu0 %v1906, 10
    %v1942 = vpop.permute.xlu0 %1941
    %1943 = vrot.lane.b32.xlu0 %v1915, 10
    %v1944 = vpop.permute.xlu0 %1943
    %1945 = vrot.lane.b32.xlu0 %v1916, 10
    %v1946 = vpop.permute.xlu0 %1945
    %1947 = vrot.lane.b32.xlu0 %v1917, 10
    %v1948 = vpop.permute.xlu0 %1947
    %1949 = vrot.lane.b32.xlu0 %v1918, 10
    %v1950 = vpop.permute.xlu0 %1949
    %1967 = vst [vmem:[#allocation1] ss:$2 sm:$0xff] %v1402
    %s1968 = scalar_lea.vmem [#allocation1], 1
    %1969 = vst [vmem:[%s1968] ss:$2 sm:$0xff] %v1405
    %s1970 = scalar_lea.vmem [#allocation1], 16
    %1971 = vst [vmem:[%s1970] ss:$2 sm:$0xff] %v1409
    %s1972 = scalar_lea.vmem [#allocation1], 17
    %1973 = vst [vmem:[%s1972] ss:$2 sm:$0xff] %v1412
    %s1974 = scalar_lea.vmem [#allocation1], 32
    %1975 = vst [vmem:[%s1974] ss:$2 sm:$0xff] %v1416
    %s1976 = scalar_lea.vmem [#allocation1], 33
    %1977 = vst [vmem:[%s1976] ss:$2 sm:$0xff] %v1419
    %s1978 = scalar_lea.vmem [#allocation1], 48
    %1979 = vst [vmem:[%s1978] ss:$2 sm:$0xff] %v1423
    %s1980 = scalar_lea.vmem [#allocation1], 49
    %1981 = vst [vmem:[%s1980] ss:$2 sm:$0xff] %v1426
    %v1982 = vld.sshfl [vmem:[#allocation1] sm:$0xff pattern:$0x75316420]
    %v1983 = vld.sshfl [vmem:[#allocation1 + $0x10] sm:$0xff pattern:$0x75316420]
    %v1984 = vld.sshfl [vmem:[#allocation1 + $0x20] sm:$0xff pattern:$0x75316420]
    %v1985 = vld.sshfl [vmem:[#allocation1 + $0x30] sm:$0xff pattern:$0x75316420]
    %1986 = vst [vmem:[#allocation1] ss:$2 sm:$0xff] %v1430
    %1987 = vst [vmem:[%s1968] ss:$2 sm:$0xff] %v1433
    %1988 = vst [vmem:[%s1970] ss:$2 sm:$0xff] %v1437
    %1989 = vst [vmem:[%s1972] ss:$2 sm:$0xff] %v1440
    %1990 = vst [vmem:[%s1974] ss:$2 sm:$0xff] %v1444
    %1991 = vst [vmem:[%s1976] ss:$2 sm:$0xff] %v1447
    %1992 = vst [vmem:[%s1978] ss:$2 sm:$0xff] %v1451
    %1993 = vst [vmem:[%s1980] ss:$2 sm:$0xff] %v1454
    %v1994 = vld.sshfl [vmem:[#allocation1] sm:$0xff pattern:$0x75316420]
    %v1995 = vld.sshfl [vmem:[#allocation1 + $0x10] sm:$0xff pattern:$0x75316420]
    %v1996 = vld.sshfl [vmem:[#allocation1 + $0x20] sm:$0xff pattern:$0x75316420]
    %v1997 = vld.sshfl [vmem:[#allocation1 + $0x30] sm:$0xff pattern:$0x75316420]
    %1998 = vst [vmem:[#allocation1] ss:$2 sm:$0xff] %v1458
    %1999 = vst [vmem:[%s1968] ss:$2 sm:$0xff] %v1461
    %2000 = vst [vmem:[%s1970] ss:$2 sm:$0xff] %v1465
    %2001 = vst [vmem:[%s1972] ss:$2 sm:$0xff] %v1468
    %2002 = vst [vmem:[%s1974] ss:$2 sm:$0xff] %v1472
    %2003 = vst [vmem:[%s1976] ss:$2 sm:$0xff] %v1475
    %2004 = vst [vmem:[%s1978] ss:$2 sm:$0xff] %v1479
    %2005 = vst [vmem:[%s1980] ss:$2 sm:$0xff] %v1482
    %v2006 = vld.sshfl [vmem:[#allocation1] sm:$0xff pattern:$0x75316420]
    %v2007 = vld.sshfl [vmem:[#allocation1 + $0x10] sm:$0xff pattern:$0x75316420]
    %v2008 = vld.sshfl [vmem:[#allocation1 + $0x20] sm:$0xff pattern:$0x75316420]
    %v2009 = vld.sshfl [vmem:[#allocation1 + $0x30] sm:$0xff pattern:$0x75316420]
    %2010 = vst [vmem:[#allocation1] ss:$2 sm:$0xff] %v1486
    %2011 = vst [vmem:[%s1968] ss:$2 sm:$0xff] %v1489
    %2012 = vst [vmem:[%s1970] ss:$2 sm:$0xff] %v1493
    %2013 = vst [vmem:[%s1972] ss:$2 sm:$0xff] %v1496
    %2014 = vst [vmem:[%s1974] ss:$2 sm:$0xff] %v1500
    %2015 = vst [vmem:[%s1976] ss:$2 sm:$0xff] %v1503
    %2016 = vst [vmem:[%s1978] ss:$2 sm:$0xff] %v1507
    %2017 = vst [vmem:[%s1980] ss:$2 sm:$0xff] %v1510
    %v2018 = vld.sshfl [vmem:[#allocation1] sm:$0xff pattern:$0x75316420]
    %v2019 = vld.sshfl [vmem:[#allocation1 + $0x10] sm:$0xff pattern:$0x75316420]
    %v2020 = vld.sshfl [vmem:[#allocation1 + $0x20] sm:$0xff pattern:$0x75316420]
    %v2021 = vld.sshfl [vmem:[#allocation1 + $0x30] sm:$0xff pattern:$0x75316420]
    %2022 = vrot.lane.b32.xlu0 %v1982, 20
    %v2023 = vpop.permute.xlu0 %2022
    %2024 = vrot.lane.b32.xlu0 %v1983, 20
    %v2025 = vpop.permute.xlu0 %2024
    %2026 = vrot.lane.b32.xlu0 %v1984, 20
    %v2027 = vpop.permute.xlu0 %2026
    %2028 = vrot.lane.b32.xlu0 %v1985, 20
    %v2029 = vpop.permute.xlu0 %2028
    %2030 = vrot.lane.b32.xlu0 %v1994, 20
    %v2031 = vpop.permute.xlu0 %2030
    %2032 = vrot.lane.b32.xlu0 %v1995, 20
    %v2033 = vpop.permute.xlu0 %2032
    %2034 = vrot.lane.b32.xlu0 %v1996, 20
    %v2035 = vpop.permute.xlu0 %2034
    %2036 = vrot.lane.b32.xlu0 %v1997, 20
    %v2037 = vpop.permute.xlu0 %2036
    %2038 = vrot.lane.b32.xlu0 %v2006, 20
    %v2039 = vpop.permute.xlu0 %2038
    %2040 = vrot.lane.b32.xlu0 %v2007, 20
    %v2041 = vpop.permute.xlu0 %2040
    %2042 = vrot.lane.b32.xlu0 %v2008, 20
    %v2043 = vpop.permute.xlu0 %2042
    %2044 = vrot.lane.b32.xlu0 %v2009, 20
    %v2045 = vpop.permute.xlu0 %2044
    %2046 = vrot.lane.b32.xlu0 %v2018, 20
    %v2047 = vpop.permute.xlu0 %2046
    %2048 = vrot.lane.b32.xlu0 %v2019, 20
    %v2049 = vpop.permute.xlu0 %2048
    %2050 = vrot.lane.b32.xlu0 %v2020, 20
    %v2051 = vpop.permute.xlu0 %2050
    %2052 = vrot.lane.b32.xlu0 %v2021, 20
    %v2053 = vpop.permute.xlu0 %2052
    %2070 = vst [vmem:[#allocation1] ss:$2 sm:$0xff] %v1516
    %s2071 = scalar_lea.vmem [#allocation1], 1
    %2072 = vst [vmem:[%s2071] ss:$2 sm:$0xff] %v1519
    %s2073 = scalar_lea.vmem [#allocation1], 16
    %2074 = vst [vmem:[%s2073] ss:$2 sm:$0xff] %v1523
    %s2075 = scalar_lea.vmem [#allocation1], 17
    %2076 = vst [vmem:[%s2075] ss:$2 sm:$0xff] %v1526
    %s2077 = scalar_lea.vmem [#allocation1], 32
    %2078 = vst [vmem:[%s2077] ss:$2 sm:$0xff] %v1530
    %s2079 = scalar_lea.vmem [#allocation1], 33
    %2080 = vst [vmem:[%s2079] ss:$2 sm:$0xff] %v1533
    %s2081 = scalar_lea.vmem [#allocation1], 48
    %2082 = vst [vmem:[%s2081] ss:$2 sm:$0xff] %v1537
    %s2083 = scalar_lea.vmem [#allocation1], 49
    %2084 = vst [vmem:[%s2083] ss:$2 sm:$0xff] %v1540
    %v2085 = vld.sshfl [vmem:[#allocation1] sm:$0xff pattern:$0x75316420]
    %v2086 = vld.sshfl [vmem:[#allocation1 + $0x10] sm:$0xff pattern:$0x75316420]
    %v2087 = vld.sshfl [vmem:[#allocation1 + $0x20] sm:$0xff pattern:$0x75316420]
    %v2088 = vld.sshfl [vmem:[#allocation1 + $0x30] sm:$0xff pattern:$0x75316420]
    %2089 = vst [vmem:[#allocation1] ss:$2 sm:$0xff] %v1544
    %2090 = vst [vmem:[%s2071] ss:$2 sm:$0xff] %v1547
    %2091 = vst [vmem:[%s2073] ss:$2 sm:$0xff] %v1551
    %2092 = vst [vmem:[%s2075] ss:$2 sm:$0xff] %v1554
    %2093 = vst [vmem:[%s2077] ss:$2 sm:$0xff] %v1558
    %2094 = vst [vmem:[%s2079] ss:$2 sm:$0xff] %v1561
    %2095 = vst [vmem:[%s2081] ss:$2 sm:$0xff] %v1565
    %2096 = vst [vmem:[%s2083] ss:$2 sm:$0xff] %v1568
    %v2097 = vld.sshfl [vmem:[#allocation1] sm:$0xff pattern:$0x75316420]
    %v2098 = vld.sshfl [vmem:[#allocation1 + $0x10] sm:$0xff pattern:$0x75316420]
    %v2099 = vld.sshfl [vmem:[#allocation1 + $0x20] sm:$0xff pattern:$0x75316420]
    %v2100 = vld.sshfl [vmem:[#allocation1 + $0x30] sm:$0xff pattern:$0x75316420]
    %2101 = vst [vmem:[#allocation1] ss:$2 sm:$0xff] %v1572
    %2102 = vst [vmem:[%s2071] ss:$2 sm:$0xff] %v1575
    %2103 = vst [vmem:[%s2073] ss:$2 sm:$0xff] %v1579
    %2104 = vst [vmem:[%s2075] ss:$2 sm:$0xff] %v1582
    %2105 = vst [vmem:[%s2077] ss:$2 sm:$0xff] %v1586
    %2106 = vst [vmem:[%s2079] ss:$2 sm:$0xff] %v1589
    %2107 = vst [vmem:[%s2081] ss:$2 sm:$0xff] %v1593
    %2108 = vst [vmem:[%s2083] ss:$2 sm:$0xff] %v1596
    %v2109 = vld.sshfl [vmem:[#allocation1] sm:$0xff pattern:$0x75316420]
    %v2110 = vld.sshfl [vmem:[#allocation1 + $0x10] sm:$0xff pattern:$0x75316420]
    %v2111 = vld.sshfl [vmem:[#allocation1 + $0x20] sm:$0xff pattern:$0x75316420]
    %v2112 = vld.sshfl [vmem:[#allocation1 + $0x30] sm:$0xff pattern:$0x75316420]
    %2113 = vst [vmem:[#allocation1] ss:$2 sm:$0xff] %v1600
    %2114 = vst [vmem:[%s2071] ss:$2 sm:$0xff] %v1603
    %2115 = vst [vmem:[%s2073] ss:$2 sm:$0xff] %v1607
    %2116 = vst [vmem:[%s2075] ss:$2 sm:$0xff] %v1610
    %2117 = vst [vmem:[%s2077] ss:$2 sm:$0xff] %v1614
    %2118 = vst [vmem:[%s2079] ss:$2 sm:$0xff] %v1617
    %2119 = vst [vmem:[%s2081] ss:$2 sm:$0xff] %v1621
    %2120 = vst [vmem:[%s2083] ss:$2 sm:$0xff] %v1624
    %v2121 = vld.sshfl [vmem:[#allocation1] sm:$0xff pattern:$0x75316420]
    %v2122 = vld.sshfl [vmem:[#allocation1 + $0x10] sm:$0xff pattern:$0x75316420]
    %v2123 = vld.sshfl [vmem:[#allocation1 + $0x20] sm:$0xff pattern:$0x75316420]
    %v2124 = vld.sshfl [vmem:[#allocation1 + $0x30] sm:$0xff pattern:$0x75316420]
    %2125 = vrot.lane.b32.xlu0 %v2085, 30
    %v2126 = vpop.permute.xlu0 %2125
    %2127 = vrot.lane.b32.xlu0 %v2086, 30
    %v2128 = vpop.permute.xlu0 %2127
    %2129 = vrot.lane.b32.xlu0 %v2087, 30
    %v2130 = vpop.permute.xlu0 %2129
    %2131 = vrot.lane.b32.xlu0 %v2088, 30
    %v2132 = vpop.permute.xlu0 %2131
    %2133 = vrot.lane.b32.xlu0 %v2097, 30
    %v2134 = vpop.permute.xlu0 %2133
    %2135 = vrot.lane.b32.xlu0 %v2098, 30
    %v2136 = vpop.permute.xlu0 %2135
    %2137 = vrot.lane.b32.xlu0 %v2099, 30
    %v2138 = vpop.permute.xlu0 %2137
    %2139 = vrot.lane.b32.xlu0 %v2100, 30
    %v2140 = vpop.permute.xlu0 %2139
    %2141 = vrot.lane.b32.xlu0 %v2109, 30
    %v2142 = vpop.permute.xlu0 %2141
    %2143 = vrot.lane.b32.xlu0 %v2110, 30
    %v2144 = vpop.permute.xlu0 %2143
    %2145 = vrot.lane.b32.xlu0 %v2111, 30
    %v2146 = vpop.permute.xlu0 %2145
    %2147 = vrot.lane.b32.xlu0 %v2112, 30
    %v2148 = vpop.permute.xlu0 %2147
    %2149 = vrot.lane.b32.xlu0 %v2121, 30
    %v2150 = vpop.permute.xlu0 %2149
    %2151 = vrot.lane.b32.xlu0 %v2122, 30
    %v2152 = vpop.permute.xlu0 %2151
    %2153 = vrot.lane.b32.xlu0 %v2123, 30
    %v2154 = vpop.permute.xlu0 %2153
    %2155 = vrot.lane.b32.xlu0 %v2124, 30
    %v2156 = vpop.permute.xlu0 %2155
    %2173 = vst [vmem:[#allocation1] ss:$2 sm:$0xff] %v1245
    %s2174 = scalar_lea.vmem [#allocation1], 1
    %2175 = vst [vmem:[%s2174] ss:$2 sm:$0xff] %v1174
    %s2176 = scalar_lea.vmem [#allocation1], 16
    %2177 = vst [vmem:[%s2176] ss:$2 sm:$0xff] %v1175
    %s2178 = scalar_lea.vmem [#allocation1], 17
    %2179 = vst [vmem:[%s2178] ss:$2 sm:$0xff] %v1247
    %s2180 = scalar_lea.vmem [#allocation1], 32
    %2181 = vst [vmem:[%s2180] ss:$2 sm:$0xff] %v1248
    %s2182 = scalar_lea.vmem [#allocation1], 33
    %2183 = vst [vmem:[%s2182] ss:$2 sm:$0xff] %v1177
    %s2184 = scalar_lea.vmem [#allocation1], 48
    %2185 = vst [vmem:[%s2184] ss:$2 sm:$0xff] %v1178
    %s2186 = scalar_lea.vmem [#allocation1], 49
    %2187 = vst [vmem:[%s2186] ss:$2 sm:$0xff] %v1250
    %v2188 = vld.sshfl [vmem:[#allocation1] sm:$0xff pattern:$0x75316420]
    %v2189 = vld.sshfl [vmem:[#allocation1 + $0x10] sm:$0xff pattern:$0x75316420]
    %v2190 = vld.sshfl [vmem:[#allocation1 + $0x20] sm:$0xff pattern:$0x75316420]
    %v2191 = vld.sshfl [vmem:[#allocation1 + $0x30] sm:$0xff pattern:$0x75316420]
    %2192 = vst [vmem:[#allocation1] ss:$2 sm:$0xff] %v1251
    %2193 = vst [vmem:[%s2174] ss:$2 sm:$0xff] %v1180
    %2194 = vst [vmem:[%s2176] ss:$2 sm:$0xff] %v1181
    %2195 = vst [vmem:[%s2178] ss:$2 sm:$0xff] %v1253
    %2196 = vst [vmem:[%s2180] ss:$2 sm:$0xff] %v1254
    %2197 = vst [vmem:[%s2182] ss:$2 sm:$0xff] %v1183
    %2198 = vst [vmem:[%s2184] ss:$2 sm:$0xff] %v1184
    %2199 = vst [vmem:[%s2186] ss:$2 sm:$0xff] %v1256
    %v2200 = vld.sshfl [vmem:[#allocation1] sm:$0xff pattern:$0x75316420]
    %v2201 = vld.sshfl [vmem:[#allocation1 + $0x10] sm:$0xff pattern:$0x75316420]
    %v2202 = vld.sshfl [vmem:[#allocation1 + $0x20] sm:$0xff pattern:$0x75316420]
    %v2203 = vld.sshfl [vmem:[#allocation1 + $0x30] sm:$0xff pattern:$0x75316420]
    %2204 = vst [vmem:[#allocation1] ss:$2 sm:$0xff] %v1263
    %2205 = vst [vmem:[%s2174] ss:$2 sm:$0xff] %v1192
    %2206 = vst [vmem:[%s2176] ss:$2 sm:$0xff] %v1193
    %2207 = vst [vmem:[%s2178] ss:$2 sm:$0xff] %v1265
    %2208 = vst [vmem:[%s2180] ss:$2 sm:$0xff] %v1266
    %2209 = vst [vmem:[%s2182] ss:$2 sm:$0xff] %v1195
    %2210 = vst [vmem:[%s2184] ss:$2 sm:$0xff] %v1196
    %2211 = vst [vmem:[%s2186] ss:$2 sm:$0xff] %v1268
    %v2212 = vld.sshfl [vmem:[#allocation1] sm:$0xff pattern:$0x75316420]
    %v2213 = vld.sshfl [vmem:[#allocation1 + $0x10] sm:$0xff pattern:$0x75316420]
    %v2214 = vld.sshfl [vmem:[#allocation1 + $0x20] sm:$0xff pattern:$0x75316420]
    %v2215 = vld.sshfl [vmem:[#allocation1 + $0x30] sm:$0xff pattern:$0x75316420]
    %2216 = vst [vmem:[#allocation1] ss:$2 sm:$0xff] %v1269
    %2217 = vst [vmem:[%s2174] ss:$2 sm:$0xff] %v1198
    %2218 = vst [vmem:[%s2176] ss:$2 sm:$0xff] %v1199
    %2219 = vst [vmem:[%s2178] ss:$2 sm:$0xff] %v1271
    %2220 = vst [vmem:[%s2180] ss:$2 sm:$0xff] %v1272
    %2221 = vst [vmem:[%s2182] ss:$2 sm:$0xff] %v1201
    %2222 = vst [vmem:[%s2184] ss:$2 sm:$0xff] %v1202
    %2223 = vst [vmem:[%s2186] ss:$2 sm:$0xff] %v1274
    %v2224 = vld.sshfl [vmem:[#allocation1] sm:$0xff pattern:$0x75316420]
    %v2225 = vld.sshfl [vmem:[#allocation1 + $0x10] sm:$0xff pattern:$0x75316420]
    %v2226 = vld.sshfl [vmem:[#allocation1 + $0x20] sm:$0xff pattern:$0x75316420]
    %v2227 = vld.sshfl [vmem:[#allocation1 + $0x30] sm:$0xff pattern:$0x75316420]
    %2228 = vrot.lane.b32.xlu0 %v2188, 40
    %v2229 = vpop.permute.xlu0 %2228
    %2230 = vrot.lane.b32.xlu0 %v2189, 40
    %v2231 = vpop.permute.xlu0 %2230
    %2232 = vrot.lane.b32.xlu0 %v2190, 40
    %v2233 = vpop.permute.xlu0 %2232
    %2234 = vrot.lane.b32.xlu0 %v2191, 40
    %v2235 = vpop.permute.xlu0 %2234
    %2236 = vrot.lane.b32.xlu0 %v2200, 40
    %v2237 = vpop.permute.xlu0 %2236
    %2238 = vrot.lane.b32.xlu0 %v2201, 40
    %v2239 = vpop.permute.xlu0 %2238
    %2240 = vrot.lane.b32.xlu0 %v2202, 40
    %v2241 = vpop.permute.xlu0 %2240
    %2242 = vrot.lane.b32.xlu0 %v2203, 40
    %v2243 = vpop.permute.xlu0 %2242
    %2244 = vrot.lane.b32.xlu0 %v2212, 40
    %v2245 = vpop.permute.xlu0 %2244
    %2246 = vrot.lane.b32.xlu0 %v2213, 40
    %v2247 = vpop.permute.xlu0 %2246
    %2248 = vrot.lane.b32.xlu0 %v2214, 40
    %v2249 = vpop.permute.xlu0 %2248
    %2250 = vrot.lane.b32.xlu0 %v2215, 40
    %v2251 = vpop.permute.xlu0 %2250
    %2252 = vrot.lane.b32.xlu0 %v2224, 40
    %v2253 = vpop.permute.xlu0 %2252
    %2254 = vrot.lane.b32.xlu0 %v2225, 40
    %v2255 = vpop.permute.xlu0 %2254
    %2256 = vrot.lane.b32.xlu0 %v2226, 40
    %v2257 = vpop.permute.xlu0 %2256
    %2258 = vrot.lane.b32.xlu0 %v2227, 40
    %v2259 = vpop.permute.xlu0 %2258
    %2276 = vst [vmem:[#allocation1] ss:$2 sm:$0xff] %v1246
    %s2277 = scalar_lea.vmem [#allocation1], 1
    %2278 = vst [vmem:[%s2277] ss:$2 sm:$0xff] %v1175
    %s2279 = scalar_lea.vmem [#allocation1], 16
    %2280 = vst [vmem:[%s2279] ss:$2 sm:$0xff] %v1176
    %s2281 = scalar_lea.vmem [#allocation1], 17
    %2282 = vst [vmem:[%s2281] ss:$2 sm:$0xff] %v1248
    %s2283 = scalar_lea.vmem [#allocation1], 32
    %2284 = vst [vmem:[%s2283] ss:$2 sm:$0xff] %v1249
    %s2285 = scalar_lea.vmem [#allocation1], 33
    %2286 = vst [vmem:[%s2285] ss:$2 sm:$0xff] %v1178
    %s2287 = scalar_lea.vmem [#allocation1], 48
    %2288 = vst [vmem:[%s2287] ss:$2 sm:$0xff] %v1179
    %s2289 = scalar_lea.vmem [#allocation1], 49
    %2290 = vst [vmem:[%s2289] ss:$2 sm:$0xff] %v1251
    %v2291 = vld.sshfl [vmem:[#allocation1] sm:$0xff pattern:$0x75316420]
    %v2292 = vld.sshfl [vmem:[#allocation1 + $0x10] sm:$0xff pattern:$0x75316420]
    %v2293 = vld.sshfl [vmem:[#allocation1 + $0x20] sm:$0xff pattern:$0x75316420]
    %v2294 = vld.sshfl [vmem:[#allocation1 + $0x30] sm:$0xff pattern:$0x75316420]
    %2295 = vst [vmem:[#allocation1] ss:$2 sm:$0xff] %v1252
    %2296 = vst [vmem:[%s2277] ss:$2 sm:$0xff] %v1181
    %2297 = vst [vmem:[%s2279] ss:$2 sm:$0xff] %v1182
    %2298 = vst [vmem:[%s2281] ss:$2 sm:$0xff] %v1254
    %2299 = vst [vmem:[%s2283] ss:$2 sm:$0xff] %v1255
    %2300 = vst [vmem:[%s2285] ss:$2 sm:$0xff] %v1184
    %2301 = vst [vmem:[%s2287] ss:$2 sm:$0xff] %v1185
    %2302 = vst [vmem:[%s2289] ss:$2 sm:$0xff] %v1257
    %v2303 = vld.sshfl [vmem:[#allocation1] sm:$0xff pattern:$0x75316420]
    %v2304 = vld.sshfl [vmem:[#allocation1 + $0x10] sm:$0xff pattern:$0x75316420]
    %v2305 = vld.sshfl [vmem:[#allocation1 + $0x20] sm:$0xff pattern:$0x75316420]
    %v2306 = vld.sshfl [vmem:[#allocation1 + $0x30] sm:$0xff pattern:$0x75316420]
    %2307 = vst [vmem:[#allocation1] ss:$2 sm:$0xff] %v1264
    %2308 = vst [vmem:[%s2277] ss:$2 sm:$0xff] %v1193
    %2309 = vst [vmem:[%s2279] ss:$2 sm:$0xff] %v1194
    %2310 = vst [vmem:[%s2281] ss:$2 sm:$0xff] %v1266
    %2311 = vst [vmem:[%s2283] ss:$2 sm:$0xff] %v1267
    %2312 = vst [vmem:[%s2285] ss:$2 sm:$0xff] %v1196
    %2313 = vst [vmem:[%s2287] ss:$2 sm:$0xff] %v1197
    %2314 = vst [vmem:[%s2289] ss:$2 sm:$0xff] %v1269
    %v2315 = vld.sshfl [vmem:[#allocation1] sm:$0xff pattern:$0x75316420]
    %v2316 = vld.sshfl [vmem:[#allocation1 + $0x10] sm:$0xff pattern:$0x75316420]
    %v2317 = vld.sshfl [vmem:[#allocation1 + $0x20] sm:$0xff pattern:$0x75316420]
    %v2318 = vld.sshfl [vmem:[#allocation1 + $0x30] sm:$0xff pattern:$0x75316420]
    %2319 = vst [vmem:[#allocation1] ss:$2 sm:$0xff] %v1270
    %2320 = vst [vmem:[%s2277] ss:$2 sm:$0xff] %v1199
    %2321 = vst [vmem:[%s2279] ss:$2 sm:$0xff] %v1200
    %2322 = vst [vmem:[%s2281] ss:$2 sm:$0xff] %v1272
    %2323 = vst [vmem:[%s2283] ss:$2 sm:$0xff] %v1273
    %2324 = vst [vmem:[%s2285] ss:$2 sm:$0xff] %v1202
    %2325 = vst [vmem:[%s2287] ss:$2 sm:$0xff] %v1203
    %2326 = vst [vmem:[%s2289] ss:$2 sm:$0xff] %v1275
    %v2327 = vld.sshfl [vmem:[#allocation1] sm:$0xff pattern:$0x75316420]
    %v2328 = vld.sshfl [vmem:[#allocation1 + $0x10] sm:$0xff pattern:$0x75316420]
    %v2329 = vld.sshfl [vmem:[#allocation1 + $0x20] sm:$0xff pattern:$0x75316420]
    %v2330 = vld.sshfl [vmem:[#allocation1 + $0x30] sm:$0xff pattern:$0x75316420]
    %2331 = vrot.lane.b32.xlu0 %v2291, 50
    %v2332 = vpop.permute.xlu0 %2331
    %2333 = vrot.lane.b32.xlu0 %v2292, 50
    %v2334 = vpop.permute.xlu0 %2333
    %2335 = vrot.lane.b32.xlu0 %v2293, 50
    %v2336 = vpop.permute.xlu0 %2335
    %2337 = vrot.lane.b32.xlu0 %v2294, 50
    %v2338 = vpop.permute.xlu0 %2337
    %2339 = vrot.lane.b32.xlu0 %v2303, 50
    %v2340 = vpop.permute.xlu0 %2339
    %2341 = vrot.lane.b32.xlu0 %v2304, 50
    %v2342 = vpop.permute.xlu0 %2341
    %2343 = vrot.lane.b32.xlu0 %v2305, 50
    %v2344 = vpop.permute.xlu0 %2343
    %2345 = vrot.lane.b32.xlu0 %v2306, 50
    %v2346 = vpop.permute.xlu0 %2345
    %2347 = vrot.lane.b32.xlu0 %v2315, 50
    %v2348 = vpop.permute.xlu0 %2347
    %2349 = vrot.lane.b32.xlu0 %v2316, 50
    %v2350 = vpop.permute.xlu0 %2349
    %2351 = vrot.lane.b32.xlu0 %v2317, 50
    %v2352 = vpop.permute.xlu0 %2351
    %2353 = vrot.lane.b32.xlu0 %v2318, 50
    %v2354 = vpop.permute.xlu0 %2353
    %2355 = vrot.lane.b32.xlu0 %v2327, 50
    %v2356 = vpop.permute.xlu0 %2355
    %2357 = vrot.lane.b32.xlu0 %v2328, 50
    %v2358 = vpop.permute.xlu0 %2357
    %2359 = vrot.lane.b32.xlu0 %v2329, 50
    %v2360 = vpop.permute.xlu0 %2359
    %2361 = vrot.lane.b32.xlu0 %v2330, 50
    %v2362 = vpop.permute.xlu0 %2361
    %2379 = vst [vmem:[#allocation1] ss:$2 sm:$0xff] %v1294
    %s2380 = scalar_lea.vmem [#allocation1], 1
    %2381 = vst [vmem:[%s2380] ss:$2 sm:$0xff] %v1297
    %s2382 = scalar_lea.vmem [#allocation1], 16
    %2383 = vst [vmem:[%s2382] ss:$2 sm:$0xff] %v1301
    %s2384 = scalar_lea.vmem [#allocation1], 17
    %2385 = vst [vmem:[%s2384] ss:$2 sm:$0xff] %v1304
    %s2386 = scalar_lea.vmem [#allocation1], 32
    %2387 = vst [vmem:[%s2386] ss:$2 sm:$0xff] %v1308
    %s2388 = scalar_lea.vmem [#allocation1], 33
    %2389 = vst [vmem:[%s2388] ss:$2 sm:$0xff] %v1311
    %s2390 = scalar_lea.vmem [#allocation1], 48
    %2391 = vst [vmem:[%s2390] ss:$2 sm:$0xff] %v1315
    %s2392 = scalar_lea.vmem [#allocation1], 49
    %2393 = vst [vmem:[%s2392] ss:$2 sm:$0xff] %v1318
    %v2394 = vld.sshfl [vmem:[#allocation1] sm:$0xff pattern:$0x75316420]
    %v2395 = vld.sshfl [vmem:[#allocation1 + $0x10] sm:$0xff pattern:$0x75316420]
    %v2396 = vld.sshfl [vmem:[#allocation1 + $0x20] sm:$0xff pattern:$0x75316420]
    %v2397 = vld.sshfl [vmem:[#allocation1 + $0x30] sm:$0xff pattern:$0x75316420]
    %2398 = vst [vmem:[#allocation1] ss:$2 sm:$0xff] %v1322
    %2399 = vst [vmem:[%s2380] ss:$2 sm:$0xff] %v1325
    %2400 = vst [vmem:[%s2382] ss:$2 sm:$0xff] %v1329
    %2401 = vst [vmem:[%s2384] ss:$2 sm:$0xff] %v1332
    %2402 = vst [vmem:[%s2386] ss:$2 sm:$0xff] %v1336
    %2403 = vst [vmem:[%s2388] ss:$2 sm:$0xff] %v1339
    %2404 = vst [vmem:[%s2390] ss:$2 sm:$0xff] %v1628
    %2405 = vst [vmem:[%s2392] ss:$2 sm:$0xff] %v1631
    %v2406 = vld.sshfl [vmem:[#allocation1] sm:$0xff pattern:$0x75316420]
    %v2407 = vld.sshfl [vmem:[#allocation1 + $0x10] sm:$0xff pattern:$0x75316420]
    %v2408 = vld.sshfl [vmem:[#allocation1 + $0x20] sm:$0xff pattern:$0x75316420]
    %v2409 = vld.sshfl [vmem:[#allocation1 + $0x30] sm:$0xff pattern:$0x75316420]
    %2410 = vst [vmem:[#allocation1] ss:$2 sm:$0xff] %v1350
    %2411 = vst [vmem:[%s2380] ss:$2 sm:$0xff] %v1353
    %2412 = vst [vmem:[%s2382] ss:$2 sm:$0xff] %v1357
    %2413 = vst [vmem:[%s2384] ss:$2 sm:$0xff] %v1360
    %2414 = vst [vmem:[%s2386] ss:$2 sm:$0xff] %v1364
    %2415 = vst [vmem:[%s2388] ss:$2 sm:$0xff] %v1367
    %2416 = vst [vmem:[%s2390] ss:$2 sm:$0xff] %v1371
    %2417 = vst [vmem:[%s2392] ss:$2 sm:$0xff] %v1374
    %v2418 = vld.sshfl [vmem:[#allocation1] sm:$0xff pattern:$0x75316420]
    %v2419 = vld.sshfl [vmem:[#allocation1 + $0x10] sm:$0xff pattern:$0x75316420]
    %v2420 = vld.sshfl [vmem:[#allocation1 + $0x20] sm:$0xff pattern:$0x75316420]
    %v2421 = vld.sshfl [vmem:[#allocation1 + $0x30] sm:$0xff pattern:$0x75316420]
    %2422 = vst [vmem:[#allocation1] ss:$2 sm:$0xff] %v1378
    %2423 = vst [vmem:[%s2380] ss:$2 sm:$0xff] %v1381
    %2424 = vst [vmem:[%s2382] ss:$2 sm:$0xff] %v1385
    %2425 = vst [vmem:[%s2384] ss:$2 sm:$0xff] %v1388
    %2426 = vst [vmem:[%s2386] ss:$2 sm:$0xff] %v1392
    %2427 = vst [vmem:[%s2388] ss:$2 sm:$0xff] %v1395
    %2428 = vst [vmem:[%s2390] ss:$2 sm:$0xff] %v1635
    %2429 = vst [vmem:[%s2392] ss:$2 sm:$0xff] %v1638
    %v2430 = vld.sshfl [vmem:[#allocation1] sm:$0xff pattern:$0x75316420]
    %v2431 = vld.sshfl [vmem:[#allocation1 + $0x10] sm:$0xff pattern:$0x75316420]
    %v2432 = vld.sshfl [vmem:[#allocation1 + $0x20] sm:$0xff pattern:$0x75316420]
    %v2433 = vld.sshfl [vmem:[#allocation1 + $0x30] sm:$0xff pattern:$0x75316420]
    %2434 = vrot.lane.b32.xlu0 %v2394, 60
    %v2435 = vpop.permute.xlu0 %2434
    %2436 = vrot.lane.b32.xlu0 %v2395, 60
    %v2437 = vpop.permute.xlu0 %2436
    %2438 = vrot.lane.b32.xlu0 %v2396, 60
    %v2439 = vpop.permute.xlu0 %2438
    %2440 = vrot.lane.b32.xlu0 %v2397, 60
    %v2441 = vpop.permute.xlu0 %2440
    %2442 = vrot.lane.b32.xlu0 %v2406, 60
    %v2443 = vpop.permute.xlu0 %2442
    %2444 = vrot.lane.b32.xlu0 %v2407, 60
    %v2445 = vpop.permute.xlu0 %2444
    %2446 = vrot.lane.b32.xlu0 %v2408, 60
    %v2447 = vpop.permute.xlu0 %2446
    %2448 = vrot.lane.b32.xlu0 %v2409, 60
    %v2449 = vpop.permute.xlu0 %2448
    %2450 = vrot.lane.b32.xlu0 %v2418, 60
    %v2451 = vpop.permute.xlu0 %2450
    %2452 = vrot.lane.b32.xlu0 %v2419, 60
    %v2453 = vpop.permute.xlu0 %2452
    %2454 = vrot.lane.b32.xlu0 %v2420, 60
    %v2455 = vpop.permute.xlu0 %2454
    %2456 = vrot.lane.b32.xlu0 %v2421, 60
    %v2457 = vpop.permute.xlu0 %2456
    %2458 = vrot.lane.b32.xlu0 %v2430, 60
    %v2459 = vpop.permute.xlu0 %2458
    %2460 = vrot.lane.b32.xlu0 %v2431, 60
    %v2461 = vpop.permute.xlu0 %2460
    %2462 = vrot.lane.b32.xlu0 %v2432, 60
    %v2463 = vpop.permute.xlu0 %2462
    %2464 = vrot.lane.b32.xlu0 %v2433, 60
    %v2465 = vpop.permute.xlu0 %2464
    %2482 = vst [vmem:[#allocation1] ss:$2 sm:$0xff] %v1409
    %s2483 = scalar_lea.vmem [#allocation1], 1
    %2484 = vst [vmem:[%s2483] ss:$2 sm:$0xff] %v1412
    %s2485 = scalar_lea.vmem [#allocation1], 16
    %2486 = vst [vmem:[%s2485] ss:$2 sm:$0xff] %v1416
    %s2487 = scalar_lea.vmem [#allocation1], 17
    %2488 = vst [vmem:[%s2487] ss:$2 sm:$0xff] %v1419
    %s2489 = scalar_lea.vmem [#allocation1], 32
    %2490 = vst [vmem:[%s2489] ss:$2 sm:$0xff] %v1423
    %s2491 = scalar_lea.vmem [#allocation1], 33
    %2492 = vst [vmem:[%s2491] ss:$2 sm:$0xff] %v1426
    %s2493 = scalar_lea.vmem [#allocation1], 48
    %2494 = vst [vmem:[%s2493] ss:$2 sm:$0xff] %v1430
    %s2495 = scalar_lea.vmem [#allocation1], 49
    %2496 = vst [vmem:[%s2495] ss:$2 sm:$0xff] %v1433
    %v2497 = vld.sshfl [vmem:[#allocation1] sm:$0xff pattern:$0x75316420]
    %v2498 = vld.sshfl [vmem:[#allocation1 + $0x10] sm:$0xff pattern:$0x75316420]
    %v2499 = vld.sshfl [vmem:[#allocation1 + $0x20] sm:$0xff pattern:$0x75316420]
    %v2500 = vld.sshfl [vmem:[#allocation1 + $0x30] sm:$0xff pattern:$0x75316420]
    %2501 = vst [vmem:[#allocation1] ss:$2 sm:$0xff] %v1437
    %2502 = vst [vmem:[%s2483] ss:$2 sm:$0xff] %v1440
    %2503 = vst [vmem:[%s2485] ss:$2 sm:$0xff] %v1444
    %2504 = vst [vmem:[%s2487] ss:$2 sm:$0xff] %v1447
    %2505 = vst [vmem:[%s2489] ss:$2 sm:$0xff] %v1451
    %2506 = vst [vmem:[%s2491] ss:$2 sm:$0xff] %v1454
    %2507 = vst [vmem:[%s2493] ss:$2 sm:$0xff] %v1642
    %2508 = vst [vmem:[%s2495] ss:$2 sm:$0xff] %v1645
    %v2509 = vld.sshfl [vmem:[#allocation1] sm:$0xff pattern:$0x75316420]
    %v2510 = vld.sshfl [vmem:[#allocation1 + $0x10] sm:$0xff pattern:$0x75316420]
    %v2511 = vld.sshfl [vmem:[#allocation1 + $0x20] sm:$0xff pattern:$0x75316420]
    %v2512 = vld.sshfl [vmem:[#allocation1 + $0x30] sm:$0xff pattern:$0x75316420]
    %2513 = vst [vmem:[#allocation1] ss:$2 sm:$0xff] %v1465
    %2514 = vst [vmem:[%s2483] ss:$2 sm:$0xff] %v1468
    %2515 = vst [vmem:[%s2485] ss:$2 sm:$0xff] %v1472
    %2516 = vst [vmem:[%s2487] ss:$2 sm:$0xff] %v1475
    %2517 = vst [vmem:[%s2489] ss:$2 sm:$0xff] %v1479
    %2518 = vst [vmem:[%s2491] ss:$2 sm:$0xff] %v1482
    %2519 = vst [vmem:[%s2493] ss:$2 sm:$0xff] %v1486
    %2520 = vst [vmem:[%s2495] ss:$2 sm:$0xff] %v1489
    %v2521 = vld.sshfl [vmem:[#allocation1] sm:$0xff pattern:$0x75316420]
    %v2522 = vld.sshfl [vmem:[#allocation1 + $0x10] sm:$0xff pattern:$0x75316420]
    %v2523 = vld.sshfl [vmem:[#allocation1 + $0x20] sm:$0xff pattern:$0x75316420]
    %v2524 = vld.sshfl [vmem:[#allocation1 + $0x30] sm:$0xff pattern:$0x75316420]
    %2525 = vst [vmem:[#allocation1] ss:$2 sm:$0xff] %v1493
    %2526 = vst [vmem:[%s2483] ss:$2 sm:$0xff] %v1496
    %2527 = vst [vmem:[%s2485] ss:$2 sm:$0xff] %v1500
    %2528 = vst [vmem:[%s2487] ss:$2 sm:$0xff] %v1503
    %2529 = vst [vmem:[%s2489] ss:$2 sm:$0xff] %v1507
    %2530 = vst [vmem:[%s2491] ss:$2 sm:$0xff] %v1510
    %2531 = vst [vmem:[%s2493] ss:$2 sm:$0xff] %v1649
    %2532 = vst [vmem:[%s2495] ss:$2 sm:$0xff] %v1652
    %v2533 = vld.sshfl [vmem:[#allocation1] sm:$0xff pattern:$0x75316420]
    %v2534 = vld.sshfl [vmem:[#allocation1 + $0x10] sm:$0xff pattern:$0x75316420]
    %v2535 = vld.sshfl [vmem:[#allocation1 + $0x20] sm:$0xff pattern:$0x75316420]
    %v2536 = vld.sshfl [vmem:[#allocation1 + $0x30] sm:$0xff pattern:$0x75316420]
    %2537 = vrot.lane.b32.xlu0 %v2497, 70
    %v2538 = vpop.permute.xlu0 %2537
    %2539 = vrot.lane.b32.xlu0 %v2498, 70
    %v2540 = vpop.permute.xlu0 %2539
    %2541 = vrot.lane.b32.xlu0 %v2499, 70
    %v2542 = vpop.permute.xlu0 %2541
    %2543 = vrot.lane.b32.xlu0 %v2500, 70
    %v2544 = vpop.permute.xlu0 %2543
    %2545 = vrot.lane.b32.xlu0 %v2509, 70
    %v2546 = vpop.permute.xlu0 %2545
    %2547 = vrot.lane.b32.xlu0 %v2510, 70
    %v2548 = vpop.permute.xlu0 %2547
    %2549 = vrot.lane.b32.xlu0 %v2511, 70
    %v2550 = vpop.permute.xlu0 %2549
    %2551 = vrot.lane.b32.xlu0 %v2512, 70
    %v2552 = vpop.permute.xlu0 %2551
    %2553 = vrot.lane.b32.xlu0 %v2521, 70
    %v2554 = vpop.permute.xlu0 %2553
    %2555 = vrot.lane.b32.xlu0 %v2522, 70
    %v2556 = vpop.permute.xlu0 %2555
    %2557 = vrot.lane.b32.xlu0 %v2523, 70
    %v2558 = vpop.permute.xlu0 %2557
    %2559 = vrot.lane.b32.xlu0 %v2524, 70
    %v2560 = vpop.permute.xlu0 %2559
    %2561 = vrot.lane.b32.xlu0 %v2533, 70
    %v2562 = vpop.permute.xlu0 %2561
    %2563 = vrot.lane.b32.xlu0 %v2534, 70
    %v2564 = vpop.permute.xlu0 %2563
    %2565 = vrot.lane.b32.xlu0 %v2535, 70
    %v2566 = vpop.permute.xlu0 %2565
    %2567 = vrot.lane.b32.xlu0 %v2536, 70
    %v2568 = vpop.permute.xlu0 %2567
    %2585 = vst [vmem:[#allocation1] ss:$2 sm:$0xff] %v1523
    %s2586 = scalar_lea.vmem [#allocation1], 1
    %2587 = vst [vmem:[%s2586] ss:$2 sm:$0xff] %v1526
    %s2588 = scalar_lea.vmem [#allocation1], 16
    %2589 = vst [vmem:[%s2588] ss:$2 sm:$0xff] %v1530
    %s2590 = scalar_lea.vmem [#allocation1], 17
    %2591 = vst [vmem:[%s2590] ss:$2 sm:$0xff] %v1533
    %s2592 = scalar_lea.vmem [#allocation1], 32
    %2593 = vst [vmem:[%s2592] ss:$2 sm:$0xff] %v1537
    %s2594 = scalar_lea.vmem [#allocation1], 33
    %2595 = vst [vmem:[%s2594] ss:$2 sm:$0xff] %v1540
    %s2596 = scalar_lea.vmem [#allocation1], 48
    %2597 = vst [vmem:[%s2596] ss:$2 sm:$0xff] %v1544
    %s2598 = scalar_lea.vmem [#allocation1], 49
    %2599 = vst [vmem:[%s2598] ss:$2 sm:$0xff] %v1547
    %v2600 = vld.sshfl [vmem:[#allocation1] sm:$0xff pattern:$0x75316420]
    %v2601 = vld.sshfl [vmem:[#allocation1 + $0x10] sm:$0xff pattern:$0x75316420]
    %v2602 = vld.sshfl [vmem:[#allocation1 + $0x20] sm:$0xff pattern:$0x75316420]
    %v2603 = vld.sshfl [vmem:[#allocation1 + $0x30] sm:$0xff pattern:$0x75316420]
    %2604 = vst [vmem:[#allocation1] ss:$2 sm:$0xff] %v1551
    %2605 = vst [vmem:[%s2586] ss:$2 sm:$0xff] %v1554
    %2606 = vst [vmem:[%s2588] ss:$2 sm:$0xff] %v1558
    %2607 = vst [vmem:[%s2590] ss:$2 sm:$0xff] %v1561
    %2608 = vst [vmem:[%s2592] ss:$2 sm:$0xff] %v1565
    %2609 = vst [vmem:[%s2594] ss:$2 sm:$0xff] %v1568
    %2610 = vst [vmem:[%s2596] ss:$2 sm:$0xff] %v1656
    %2611 = vst [vmem:[%s2598] ss:$2 sm:$0xff] %v1659
    %v2612 = vld.sshfl [vmem:[#allocation1] sm:$0xff pattern:$0x75316420]
    %v2613 = vld.sshfl [vmem:[#allocation1 + $0x10] sm:$0xff pattern:$0x75316420]
    %v2614 = vld.sshfl [vmem:[#allocation1 + $0x20] sm:$0xff pattern:$0x75316420]
    %v2615 = vld.sshfl [vmem:[#allocation1 + $0x30] sm:$0xff pattern:$0x75316420]
    %2616 = vst [vmem:[#allocation1] ss:$2 sm:$0xff] %v1579
    %2617 = vst [vmem:[%s2586] ss:$2 sm:$0xff] %v1582
    %2618 = vst [vmem:[%s2588] ss:$2 sm:$0xff] %v1586
    %2619 = vst [vmem:[%s2590] ss:$2 sm:$0xff] %v1589
    %2620 = vst [vmem:[%s2592] ss:$2 sm:$0xff] %v1593
    %2621 = vst [vmem:[%s2594] ss:$2 sm:$0xff] %v1596
    %2622 = vst [vmem:[%s2596] ss:$2 sm:$0xff] %v1600
    %2623 = vst [vmem:[%s2598] ss:$2 sm:$0xff] %v1603
    %v2624 = vld.sshfl [vmem:[#allocation1] sm:$0xff pattern:$0x75316420]
    %v2625 = vld.sshfl [vmem:[#allocation1 + $0x10] sm:$0xff pattern:$0x75316420]
    %v2626 = vld.sshfl [vmem:[#allocation1 + $0x20] sm:$0xff pattern:$0x75316420]
    %v2627 = vld.sshfl [vmem:[#allocation1 + $0x30] sm:$0xff pattern:$0x75316420]
    %2628 = vst [vmem:[#allocation1] ss:$2 sm:$0xff] %v1607
    %2629 = vst [vmem:[%s2586] ss:$2 sm:$0xff] %v1610
    %2630 = vst [vmem:[%s2588] ss:$2 sm:$0xff] %v1614
    %2631 = vst [vmem:[%s2590] ss:$2 sm:$0xff] %v1617
    %2632 = vst [vmem:[%s2592] ss:$2 sm:$0xff] %v1621
    %2633 = vst [vmem:[%s2594] ss:$2 sm:$0xff] %v1624
    %2634 = vst [vmem:[%s2596] ss:$2 sm:$0xff] %v1663
    %2635 = vst [vmem:[%s2598] ss:$2 sm:$0xff] %v1666
    %v2636 = vld.sshfl [vmem:[#allocation1] sm:$0xff pattern:$0x75316420]
    %v2637 = vld.sshfl [vmem:[#allocation1 + $0x10] sm:$0xff pattern:$0x75316420]
    %v2638 = vld.sshfl [vmem:[#allocation1 + $0x20] sm:$0xff pattern:$0x75316420]
    %v2639 = vld.sshfl [vmem:[#allocation1 + $0x30] sm:$0xff pattern:$0x75316420]
    %2640 = vrot.lane.b32.xlu0 %v2600, 80
    %v2641 = vpop.permute.xlu0 %2640
    %2642 = vrot.lane.b32.xlu0 %v2601, 80
    %v2643 = vpop.permute.xlu0 %2642
    %2644 = vrot.lane.b32.xlu0 %v2602, 80
    %v2645 = vpop.permute.xlu0 %2644
    %2646 = vrot.lane.b32.xlu0 %v2603, 80
    %v2647 = vpop.permute.xlu0 %2646
    %2648 = vrot.lane.b32.xlu0 %v2612, 80
    %v2649 = vpop.permute.xlu0 %2648
    %2650 = vrot.lane.b32.xlu0 %v2613, 80
    %v2651 = vpop.permute.xlu0 %2650
    %2652 = vrot.lane.b32.xlu0 %v2614, 80
    %v2653 = vpop.permute.xlu0 %2652
    %2654 = vrot.lane.b32.xlu0 %v2615, 80
    %v2655 = vpop.permute.xlu0 %2654
    %2656 = vrot.lane.b32.xlu0 %v2624, 80
    %v2657 = vpop.permute.xlu0 %2656
    %2658 = vrot.lane.b32.xlu0 %v2625, 80
    %v2659 = vpop.permute.xlu0 %2658
    %2660 = vrot.lane.b32.xlu0 %v2626, 80
    %v2661 = vpop.permute.xlu0 %2660
    %2662 = vrot.lane.b32.xlu0 %v2627, 80
    %v2663 = vpop.permute.xlu0 %2662
    %2664 = vrot.lane.b32.xlu0 %v2636, 80
    %v2665 = vpop.permute.xlu0 %2664
    %2666 = vrot.lane.b32.xlu0 %v2637, 80
    %v2667 = vpop.permute.xlu0 %2666
    %2668 = vrot.lane.b32.xlu0 %v2638, 80
    %v2669 = vpop.permute.xlu0 %2668
    %2670 = vrot.lane.b32.xlu0 %v2639, 80
    %v2671 = vpop.permute.xlu0 %2670
    %2688 = vst [vmem:[#allocation1] ss:$2 sm:$0xff] %v1175
    %s2689 = scalar_lea.vmem [#allocation1], 1
    %2690 = vst [vmem:[%s2689] ss:$2 sm:$0xff] %v1247
    %s2691 = scalar_lea.vmem [#allocation1], 16
    %2692 = vst [vmem:[%s2691] ss:$2 sm:$0xff] %v1248
    %s2693 = scalar_lea.vmem [#allocation1], 17
    %2694 = vst [vmem:[%s2693] ss:$2 sm:$0xff] %v1177
    %s2695 = scalar_lea.vmem [#allocation1], 32
    %2696 = vst [vmem:[%s2695] ss:$2 sm:$0xff] %v1178
    %s2697 = scalar_lea.vmem [#allocation1], 33
    %2698 = vst [vmem:[%s2697] ss:$2 sm:$0xff] %v1250
    %s2699 = scalar_lea.vmem [#allocation1], 48
    %2700 = vst [vmem:[%s2699] ss:$2 sm:$0xff] %v1251
    %s2701 = scalar_lea.vmem [#allocation1], 49
    %2702 = vst [vmem:[%s2701] ss:$2 sm:$0xff] %v1180
    %v2703 = vld.sshfl [vmem:[#allocation1] sm:$0xff pattern:$0x75316420]
    %v2704 = vld.sshfl [vmem:[#allocation1 + $0x10] sm:$0xff pattern:$0x75316420]
    %v2705 = vld.sshfl [vmem:[#allocation1 + $0x20] sm:$0xff pattern:$0x75316420]
    %v2706 = vld.sshfl [vmem:[#allocation1 + $0x30] sm:$0xff pattern:$0x75316420]
    %2707 = vst [vmem:[#allocation1] ss:$2 sm:$0xff] %v1181
    %2708 = vst [vmem:[%s2689] ss:$2 sm:$0xff] %v1253
    %2709 = vst [vmem:[%s2691] ss:$2 sm:$0xff] %v1254
    %2710 = vst [vmem:[%s2693] ss:$2 sm:$0xff] %v1183
    %2711 = vst [vmem:[%s2695] ss:$2 sm:$0xff] %v1184
    %2712 = vst [vmem:[%s2697] ss:$2 sm:$0xff] %v1256
    %2713 = vst [vmem:[%s2699] ss:$2 sm:$0xff] %v1257
    %2714 = vst [vmem:[%s2701] ss:$2 sm:$0xff] %v1186
    %v2715 = vld.sshfl [vmem:[#allocation1] sm:$0xff pattern:$0x75316420]
    %v2716 = vld.sshfl [vmem:[#allocation1 + $0x10] sm:$0xff pattern:$0x75316420]
    %v2717 = vld.sshfl [vmem:[#allocation1 + $0x20] sm:$0xff pattern:$0x75316420]
    %v2718 = vld.sshfl [vmem:[#allocation1 + $0x30] sm:$0xff pattern:$0x75316420]
    %2719 = vst [vmem:[#allocation1] ss:$2 sm:$0xff] %v1193
    %2720 = vst [vmem:[%s2689] ss:$2 sm:$0xff] %v1265
    %2721 = vst [vmem:[%s2691] ss:$2 sm:$0xff] %v1266
    %2722 = vst [vmem:[%s2693] ss:$2 sm:$0xff] %v1195
    %2723 = vst [vmem:[%s2695] ss:$2 sm:$0xff] %v1196
    %2724 = vst [vmem:[%s2697] ss:$2 sm:$0xff] %v1268
    %2725 = vst [vmem:[%s2699] ss:$2 sm:$0xff] %v1269
    %2726 = vst [vmem:[%s2701] ss:$2 sm:$0xff] %v1198
    %v2727 = vld.sshfl [vmem:[#allocation1] sm:$0xff pattern:$0x75316420]
    %v2728 = vld.sshfl [vmem:[#allocation1 + $0x10] sm:$0xff pattern:$0x75316420]
    %v2729 = vld.sshfl [vmem:[#allocation1 + $0x20] sm:$0xff pattern:$0x75316420]
    %v2730 = vld.sshfl [vmem:[#allocation1 + $0x30] sm:$0xff pattern:$0x75316420]
    %2731 = vst [vmem:[#allocation1] ss:$2 sm:$0xff] %v1199
    %2732 = vst [vmem:[%s2689] ss:$2 sm:$0xff] %v1271
    %2733 = vst [vmem:[%s2691] ss:$2 sm:$0xff] %v1272
    %2734 = vst [vmem:[%s2693] ss:$2 sm:$0xff] %v1201
    %2735 = vst [vmem:[%s2695] ss:$2 sm:$0xff] %v1202
    %2736 = vst [vmem:[%s2697] ss:$2 sm:$0xff] %v1274
    %2737 = vst [vmem:[%s2699] ss:$2 sm:$0xff] %v1275
    %2738 = vst [vmem:[%s2701] ss:$2 sm:$0xff] %v1204
    %v2739 = vld.sshfl [vmem:[#allocation1] sm:$0xff pattern:$0x75316420]
    %v2740 = vld.sshfl [vmem:[#allocation1 + $0x10] sm:$0xff pattern:$0x75316420]
    %v2741 = vld.sshfl [vmem:[#allocation1 + $0x20] sm:$0xff pattern:$0x75316420]
    %v2742 = vld.sshfl [vmem:[#allocation1 + $0x30] sm:$0xff pattern:$0x75316420]
    %2743 = vrot.lane.b32.xlu0 %v2703, 90
    %v2744 = vpop.permute.xlu0 %2743
    %2745 = vrot.lane.b32.xlu0 %v2704, 90
    %v2746 = vpop.permute.xlu0 %2745
    %2747 = vrot.lane.b32.xlu0 %v2705, 90
    %v2748 = vpop.permute.xlu0 %2747
    %2749 = vrot.lane.b32.xlu0 %v2706, 90
    %v2750 = vpop.permute.xlu0 %2749
    %2751 = vrot.lane.b32.xlu0 %v2715, 90
    %v2752 = vpop.permute.xlu0 %2751
    %2753 = vrot.lane.b32.xlu0 %v2716, 90
    %v2754 = vpop.permute.xlu0 %2753
    %2755 = vrot.lane.b32.xlu0 %v2717, 90
    %v2756 = vpop.permute.xlu0 %2755
    %2757 = vrot.lane.b32.xlu0 %v2718, 90
    %v2758 = vpop.permute.xlu0 %2757
    %2759 = vrot.lane.b32.xlu0 %v2727, 90
    %v2760 = vpop.permute.xlu0 %2759
    %2761 = vrot.lane.b32.xlu0 %v2728, 90
    %v2762 = vpop.permute.xlu0 %2761
    %2763 = vrot.lane.b32.xlu0 %v2729, 90
    %v2764 = vpop.permute.xlu0 %2763
    %2765 = vrot.lane.b32.xlu0 %v2730, 90
    %v2766 = vpop.permute.xlu0 %2765
    %2767 = vrot.lane.b32.xlu0 %v2739, 90
    %v2768 = vpop.permute.xlu0 %2767
    %2769 = vrot.lane.b32.xlu0 %v2740, 90
    %v2770 = vpop.permute.xlu0 %2769
    %2771 = vrot.lane.b32.xlu0 %v2741, 90
    %v2772 = vpop.permute.xlu0 %2771
    %2773 = vrot.lane.b32.xlu0 %v2742, 90
    %v2774 = vpop.permute.xlu0 %2773
    %2791 = vst [vmem:[#allocation1] ss:$2 sm:$0xff] %v1176
    %s2792 = scalar_lea.vmem [#allocation1], 1
    %2793 = vst [vmem:[%s2792] ss:$2 sm:$0xff] %v1248
    %s2794 = scalar_lea.vmem [#allocation1], 16
    %2795 = vst [vmem:[%s2794] ss:$2 sm:$0xff] %v1249
    %s2796 = scalar_lea.vmem [#allocation1], 17
    %2797 = vst [vmem:[%s2796] ss:$2 sm:$0xff] %v1178
    %s2798 = scalar_lea.vmem [#allocation1], 32
    %2799 = vst [vmem:[%s2798] ss:$2 sm:$0xff] %v1179
    %s2800 = scalar_lea.vmem [#allocation1], 33
    %2801 = vst [vmem:[%s2800] ss:$2 sm:$0xff] %v1251
    %s2802 = scalar_lea.vmem [#allocation1], 48
    %2803 = vst [vmem:[%s2802] ss:$2 sm:$0xff] %v1252
    %s2804 = scalar_lea.vmem [#allocation1], 49
    %2805 = vst [vmem:[%s2804] ss:$2 sm:$0xff] %v1181
    %v2806 = vld.sshfl [vmem:[#allocation1] sm:$0xff pattern:$0x75316420]
    %v2807 = vld.sshfl [vmem:[#allocation1 + $0x10] sm:$0xff pattern:$0x75316420]
    %v2808 = vld.sshfl [vmem:[#allocation1 + $0x20] sm:$0xff pattern:$0x75316420]
    %v2809 = vld.sshfl [vmem:[#allocation1 + $0x30] sm:$0xff pattern:$0x75316420]
    %2810 = vst [vmem:[#allocation1] ss:$2 sm:$0xff] %v1182
    %2811 = vst [vmem:[%s2792] ss:$2 sm:$0xff] %v1254
    %2812 = vst [vmem:[%s2794] ss:$2 sm:$0xff] %v1255
    %2813 = vst [vmem:[%s2796] ss:$2 sm:$0xff] %v1184
    %2814 = vst [vmem:[%s2798] ss:$2 sm:$0xff] %v1185
    %2815 = vst [vmem:[%s2800] ss:$2 sm:$0xff] %v1257
    %2816 = vst [vmem:[%s2802] ss:$2 sm:$0xff] %v1258
    %2817 = vst [vmem:[%s2804] ss:$2 sm:$0xff] %v1187
    %v2818 = vld.sshfl [vmem:[#allocation1] sm:$0xff pattern:$0x75316420]
    %v2819 = vld.sshfl [vmem:[#allocation1 + $0x10] sm:$0xff pattern:$0x75316420]
    %v2820 = vld.sshfl [vmem:[#allocation1 + $0x20] sm:$0xff pattern:$0x75316420]
    %v2821 = vld.sshfl [vmem:[#allocation1 + $0x30] sm:$0xff pattern:$0x75316420]
    %2822 = vst [vmem:[#allocation1] ss:$2 sm:$0xff] %v1194
    %2823 = vst [vmem:[%s2792] ss:$2 sm:$0xff] %v1266
    %2824 = vst [vmem:[%s2794] ss:$2 sm:$0xff] %v1267
    %2825 = vst [vmem:[%s2796] ss:$2 sm:$0xff] %v1196
    %2826 = vst [vmem:[%s2798] ss:$2 sm:$0xff] %v1197
    %2827 = vst [vmem:[%s2800] ss:$2 sm:$0xff] %v1269
    %2828 = vst [vmem:[%s2802] ss:$2 sm:$0xff] %v1270
    %2829 = vst [vmem:[%s2804] ss:$2 sm:$0xff] %v1199
    %v2830 = vld.sshfl [vmem:[#allocation1] sm:$0xff pattern:$0x75316420]
    %v2831 = vld.sshfl [vmem:[#allocation1 + $0x10] sm:$0xff pattern:$0x75316420]
    %v2832 = vld.sshfl [vmem:[#allocation1 + $0x20] sm:$0xff pattern:$0x75316420]
    %v2833 = vld.sshfl [vmem:[#allocation1 + $0x30] sm:$0xff pattern:$0x75316420]
    %2834 = vst [vmem:[#allocation1] ss:$2 sm:$0xff] %v1200
    %2835 = vst [vmem:[%s2792] ss:$2 sm:$0xff] %v1272
    %2836 = vst [vmem:[%s2794] ss:$2 sm:$0xff] %v1273
    %2837 = vst [vmem:[%s2796] ss:$2 sm:$0xff] %v1202
    %2838 = vst [vmem:[%s2798] ss:$2 sm:$0xff] %v1203
    %2839 = vst [vmem:[%s2800] ss:$2 sm:$0xff] %v1275
    %2840 = vst [vmem:[%s2802] ss:$2 sm:$0xff] %v1276
    %2841 = vst [vmem:[%s2804] ss:$2 sm:$0xff] %v1205
    %v2842 = vld.sshfl [vmem:[#allocation1] sm:$0xff pattern:$0x75316420]
    %v2843 = vld.sshfl [vmem:[#allocation1 + $0x10] sm:$0xff pattern:$0x75316420]
    %v2844 = vld.sshfl [vmem:[#allocation1 + $0x20] sm:$0xff pattern:$0x75316420]
    %v2845 = vld.sshfl [vmem:[#allocation1 + $0x30] sm:$0xff pattern:$0x75316420]
    %2846 = vrot.lane.b32.xlu0 %v2806, 100
    %v2847 = vpop.permute.xlu0 %2846
    %2848 = vrot.lane.b32.xlu0 %v2807, 100
    %v2849 = vpop.permute.xlu0 %2848
    %2850 = vrot.lane.b32.xlu0 %v2808, 100
    %v2851 = vpop.permute.xlu0 %2850
    %2852 = vrot.lane.b32.xlu0 %v2809, 100
    %v2853 = vpop.permute.xlu0 %2852
    %2854 = vrot.lane.b32.xlu0 %v2818, 100
    %v2855 = vpop.permute.xlu0 %2854
    %2856 = vrot.lane.b32.xlu0 %v2819, 100
    %v2857 = vpop.permute.xlu0 %2856
    %2858 = vrot.lane.b32.xlu0 %v2820, 100
    %v2859 = vpop.permute.xlu0 %2858
    %2860 = vrot.lane.b32.xlu0 %v2821, 100
    %v2861 = vpop.permute.xlu0 %2860
    %2862 = vrot.lane.b32.xlu0 %v2830, 100
    %v2863 = vpop.permute.xlu0 %2862
    %2864 = vrot.lane.b32.xlu0 %v2831, 100
    %v2865 = vpop.permute.xlu0 %2864
    %2866 = vrot.lane.b32.xlu0 %v2832, 100
    %v2867 = vpop.permute.xlu0 %2866
    %2868 = vrot.lane.b32.xlu0 %v2833, 100
    %v2869 = vpop.permute.xlu0 %2868
    %2870 = vrot.lane.b32.xlu0 %v2842, 100
    %v2871 = vpop.permute.xlu0 %2870
    %2872 = vrot.lane.b32.xlu0 %v2843, 100
    %v2873 = vpop.permute.xlu0 %2872
    %2874 = vrot.lane.b32.xlu0 %v2844, 100
    %v2875 = vpop.permute.xlu0 %2874
    %2876 = vrot.lane.b32.xlu0 %v2845, 100
    %v2877 = vpop.permute.xlu0 %2876
    %2894 = vst [vmem:[#allocation1] ss:$2 sm:$0xff] %v1301
    %s2895 = scalar_lea.vmem [#allocation1], 1
    %2896 = vst [vmem:[%s2895] ss:$2 sm:$0xff] %v1304
    %s2897 = scalar_lea.vmem [#allocation1], 16
    %2898 = vst [vmem:[%s2897] ss:$2 sm:$0xff] %v1308
    %s2899 = scalar_lea.vmem [#allocation1], 17
    %2900 = vst [vmem:[%s2899] ss:$2 sm:$0xff] %v1311
    %s2901 = scalar_lea.vmem [#allocation1], 32
    %2902 = vst [vmem:[%s2901] ss:$2 sm:$0xff] %v1315
    %s2903 = scalar_lea.vmem [#allocation1], 33
    %2904 = vst [vmem:[%s2903] ss:$2 sm:$0xff] %v1318
    %s2905 = scalar_lea.vmem [#allocation1], 48
    %2906 = vst [vmem:[%s2905] ss:$2 sm:$0xff] %v1322
    %s2907 = scalar_lea.vmem [#allocation1], 49
    %2908 = vst [vmem:[%s2907] ss:$2 sm:$0xff] %v1325
    %v2909 = vld.sshfl [vmem:[#allocation1] sm:$0xff pattern:$0x75316420]
    %v2910 = vld.sshfl [vmem:[#allocation1 + $0x10] sm:$0xff pattern:$0x75316420]
    %v2911 = vld.sshfl [vmem:[#allocation1 + $0x20] sm:$0xff pattern:$0x75316420]
    %v2912 = vld.sshfl [vmem:[#allocation1 + $0x30] sm:$0xff pattern:$0x75316420]
    %2913 = vst [vmem:[#allocation1] ss:$2 sm:$0xff] %v1329
    %2914 = vst [vmem:[%s2895] ss:$2 sm:$0xff] %v1332
    %2915 = vst [vmem:[%s2897] ss:$2 sm:$0xff] %v1336
    %2916 = vst [vmem:[%s2899] ss:$2 sm:$0xff] %v1339
    %2917 = vst [vmem:[%s2901] ss:$2 sm:$0xff] %v1628
    %2918 = vst [vmem:[%s2903] ss:$2 sm:$0xff] %v1631
    %2919 = vst [vmem:[%s2905] ss:$2 sm:$0xff] %v1670
    %2920 = vst [vmem:[%s2907] ss:$2 sm:$0xff] %v1673
    %v2921 = vld.sshfl [vmem:[#allocation1] sm:$0xff pattern:$0x75316420]
    %v2922 = vld.sshfl [vmem:[#allocation1 + $0x10] sm:$0xff pattern:$0x75316420]
    %v2923 = vld.sshfl [vmem:[#allocation1 + $0x20] sm:$0xff pattern:$0x75316420]
    %v2924 = vld.sshfl [vmem:[#allocation1 + $0x30] sm:$0xff pattern:$0x75316420]
    %2925 = vst [vmem:[#allocation1] ss:$2 sm:$0xff] %v1357
    %2926 = vst [vmem:[%s2895] ss:$2 sm:$0xff] %v1360
    %2927 = vst [vmem:[%s2897] ss:$2 sm:$0xff] %v1364
    %2928 = vst [vmem:[%s2899] ss:$2 sm:$0xff] %v1367
    %2929 = vst [vmem:[%s2901] ss:$2 sm:$0xff] %v1371
    %2930 = vst [vmem:[%s2903] ss:$2 sm:$0xff] %v1374
    %2931 = vst [vmem:[%s2905] ss:$2 sm:$0xff] %v1378
    %2932 = vst [vmem:[%s2907] ss:$2 sm:$0xff] %v1381
    %v2933 = vld.sshfl [vmem:[#allocation1] sm:$0xff pattern:$0x75316420]
    %v2934 = vld.sshfl [vmem:[#allocation1 + $0x10] sm:$0xff pattern:$0x75316420]
    %v2935 = vld.sshfl [vmem:[#allocation1 + $0x20] sm:$0xff pattern:$0x75316420]
    %v2936 = vld.sshfl [vmem:[#allocation1 + $0x30] sm:$0xff pattern:$0x75316420]
    %2937 = vst [vmem:[#allocation1] ss:$2 sm:$0xff] %v1385
    %2938 = vst [vmem:[%s2895] ss:$2 sm:$0xff] %v1388
    %2939 = vst [vmem:[%s2897] ss:$2 sm:$0xff] %v1392
    %2940 = vst [vmem:[%s2899] ss:$2 sm:$0xff] %v1395
    %2941 = vst [vmem:[%s2901] ss:$2 sm:$0xff] %v1635
    %2942 = vst [vmem:[%s2903] ss:$2 sm:$0xff] %v1638
    %2943 = vst [vmem:[%s2905] ss:$2 sm:$0xff] %v1677
    %2944 = vst [vmem:[%s2907] ss:$2 sm:$0xff] %v1680
    %v2945 = vld.sshfl [vmem:[#allocation1] sm:$0xff pattern:$0x75316420]
    %v2946 = vld.sshfl [vmem:[#allocation1 + $0x10] sm:$0xff pattern:$0x75316420]
    %v2947 = vld.sshfl [vmem:[#allocation1 + $0x20] sm:$0xff pattern:$0x75316420]
    %v2948 = vld.sshfl [vmem:[#allocation1 + $0x30] sm:$0xff pattern:$0x75316420]
    %2949 = vrot.lane.b32.xlu0 %v2909, 110
    %v2950 = vpop.permute.xlu0 %2949
    %2951 = vrot.lane.b32.xlu0 %v2910, 110
    %v2952 = vpop.permute.xlu0 %2951
    %2953 = vrot.lane.b32.xlu0 %v2911, 110
    %v2954 = vpop.permute.xlu0 %2953
    %2955 = vrot.lane.b32.xlu0 %v2912, 110
    %v2956 = vpop.permute.xlu0 %2955
    %2957 = vrot.lane.b32.xlu0 %v2921, 110
    %v2958 = vpop.permute.xlu0 %2957
    %2959 = vrot.lane.b32.xlu0 %v2922, 110
    %v2960 = vpop.permute.xlu0 %2959
    %2961 = vrot.lane.b32.xlu0 %v2923, 110
    %v2962 = vpop.permute.xlu0 %2961
    %2963 = vrot.lane.b32.xlu0 %v2924, 110
    %v2964 = vpop.permute.xlu0 %2963
    %2965 = vrot.lane.b32.xlu0 %v2933, 110
    %v2966 = vpop.permute.xlu0 %2965
    %2967 = vrot.lane.b32.xlu0 %v2934, 110
    %v2968 = vpop.permute.xlu0 %2967
    %2969 = vrot.lane.b32.xlu0 %v2935, 110
    %v2970 = vpop.permute.xlu0 %2969
    %2971 = vrot.lane.b32.xlu0 %v2936, 110
    %v2972 = vpop.permute.xlu0 %2971
    %2973 = vrot.lane.b32.xlu0 %v2945, 110
    %v2974 = vpop.permute.xlu0 %2973
    %2975 = vrot.lane.b32.xlu0 %v2946, 110
    %v2976 = vpop.permute.xlu0 %2975
    %2977 = vrot.lane.b32.xlu0 %v2947, 110
    %v2978 = vpop.permute.xlu0 %2977
    %2979 = vrot.lane.b32.xlu0 %v2948, 110
    %v2980 = vpop.permute.xlu0 %2979
    %2997 = vst [vmem:[#allocation1] ss:$2 sm:$0xff] %v1416
    %s2998 = scalar_lea.vmem [#allocation1], 1
    %2999 = vst [vmem:[%s2998] ss:$2 sm:$0xff] %v1419
    %s3000 = scalar_lea.vmem [#allocation1], 16
    %3001 = vst [vmem:[%s3000] ss:$2 sm:$0xff] %v1423
    %s3002 = scalar_lea.vmem [#allocation1], 17
    %3003 = vst [vmem:[%s3002] ss:$2 sm:$0xff] %v1426
    %s3004 = scalar_lea.vmem [#allocation1], 32
    %3005 = vst [vmem:[%s3004] ss:$2 sm:$0xff] %v1430
    %s3006 = scalar_lea.vmem [#allocation1], 33
    %3007 = vst [vmem:[%s3006] ss:$2 sm:$0xff] %v1433
    %s3008 = scalar_lea.vmem [#allocation1], 48
    %3009 = vst [vmem:[%s3008] ss:$2 sm:$0xff] %v1437
    %s3010 = scalar_lea.vmem [#allocation1], 49
    %3011 = vst [vmem:[%s3010] ss:$2 sm:$0xff] %v1440
    %v3012 = vld.sshfl [vmem:[#allocation1] sm:$0xff pattern:$0x75316420]
    %v3013 = vld.sshfl [vmem:[#allocation1 + $0x10] sm:$0xff pattern:$0x75316420]
    %v3014 = vld.sshfl [vmem:[#allocation1 + $0x20] sm:$0xff pattern:$0x75316420]
    %v3015 = vld.sshfl [vmem:[#allocation1 + $0x30] sm:$0xff pattern:$0x75316420]
    %3016 = vst [vmem:[#allocation1] ss:$2 sm:$0xff] %v1444
    %3017 = vst [vmem:[%s2998] ss:$2 sm:$0xff] %v1447
    %3018 = vst [vmem:[%s3000] ss:$2 sm:$0xff] %v1451
    %3019 = vst [vmem:[%s3002] ss:$2 sm:$0xff] %v1454
    %3020 = vst [vmem:[%s3004] ss:$2 sm:$0xff] %v1642
    %3021 = vst [vmem:[%s3006] ss:$2 sm:$0xff] %v1645
    %3022 = vst [vmem:[%s3008] ss:$2 sm:$0xff] %v1684
    %3023 = vst [vmem:[%s3010] ss:$2 sm:$0xff] %v1687
    %v3024 = vld.sshfl [vmem:[#allocation1] sm:$0xff pattern:$0x75316420]
    %v3025 = vld.sshfl [vmem:[#allocation1 + $0x10] sm:$0xff pattern:$0x75316420]
    %v3026 = vld.sshfl [vmem:[#allocation1 + $0x20] sm:$0xff pattern:$0x75316420]
    %v3027 = vld.sshfl [vmem:[#allocation1 + $0x30] sm:$0xff pattern:$0x75316420]
    %3028 = vst [vmem:[#allocation1] ss:$2 sm:$0xff] %v1472
    %3029 = vst [vmem:[%s2998] ss:$2 sm:$0xff] %v1475
    %3030 = vst [vmem:[%s3000] ss:$2 sm:$0xff] %v1479
    %3031 = vst [vmem:[%s3002] ss:$2 sm:$0xff] %v1482
    %3032 = vst [vmem:[%s3004] ss:$2 sm:$0xff] %v1486
    %3033 = vst [vmem:[%s3006] ss:$2 sm:$0xff] %v1489
    %3034 = vst [vmem:[%s3008] ss:$2 sm:$0xff] %v1493
    %3035 = vst [vmem:[%s3010] ss:$2 sm:$0xff] %v1496
    %v3036 = vld.sshfl [vmem:[#allocation1] sm:$0xff pattern:$0x75316420]
    %v3037 = vld.sshfl [vmem:[#allocation1 + $0x10] sm:$0xff pattern:$0x75316420]
    %v3038 = vld.sshfl [vmem:[#allocation1 + $0x20] sm:$0xff pattern:$0x75316420]
    %v3039 = vld.sshfl [vmem:[#allocation1 + $0x30] sm:$0xff pattern:$0x75316420]
    %3040 = vst [vmem:[#allocation1] ss:$2 sm:$0xff] %v1500
    %3041 = vst [vmem:[%s2998] ss:$2 sm:$0xff] %v1503
    %3042 = vst [vmem:[%s3000] ss:$2 sm:$0xff] %v1507
    %3043 = vst [vmem:[%s3002] ss:$2 sm:$0xff] %v1510
    %3044 = vst [vmem:[%s3004] ss:$2 sm:$0xff] %v1649
    %3045 = vst [vmem:[%s3006] ss:$2 sm:$0xff] %v1652
    %3046 = vst [vmem:[%s3008] ss:$2 sm:$0xff] %v1691
    %3047 = vst [vmem:[%s3010] ss:$2 sm:$0xff] %v1694
    %v3048 = vld.sshfl [vmem:[#allocation1] sm:$0xff pattern:$0x75316420]
    %v3049 = vld.sshfl [vmem:[#allocation1 + $0x10] sm:$0xff pattern:$0x75316420]
    %v3050 = vld.sshfl [vmem:[#allocation1 + $0x20] sm:$0xff pattern:$0x75316420]
    %v3051 = vld.sshfl [vmem:[#allocation1 + $0x30] sm:$0xff pattern:$0x75316420]
    %3052 = vrot.lane.b32.xlu0 %v3012, 120
    %v3053 = vpop.permute.xlu0 %3052
    %3054 = vrot.lane.b32.xlu0 %v3013, 120
    %v3055 = vpop.permute.xlu0 %3054
    %3056 = vrot.lane.b32.xlu0 %v3014, 120
    %v3057 = vpop.permute.xlu0 %3056
    %3058 = vrot.lane.b32.xlu0 %v3015, 120
    %v3059 = vpop.permute.xlu0 %3058
    %3060 = vrot.lane.b32.xlu0 %v3024, 120
    %v3061 = vpop.permute.xlu0 %3060
    %3062 = vrot.lane.b32.xlu0 %v3025, 120
    %v3063 = vpop.permute.xlu0 %3062
    %3064 = vrot.lane.b32.xlu0 %v3026, 120
    %v3065 = vpop.permute.xlu0 %3064
    %3066 = vrot.lane.b32.xlu0 %v3027, 120
    %v3067 = vpop.permute.xlu0 %3066
    %3068 = vrot.lane.b32.xlu0 %v3036, 120
    %v3069 = vpop.permute.xlu0 %3068
    %3070 = vrot.lane.b32.xlu0 %v3037, 120
    %v3071 = vpop.permute.xlu0 %3070
    %3072 = vrot.lane.b32.xlu0 %v3038, 120
    %v3073 = vpop.permute.xlu0 %3072
    %3074 = vrot.lane.b32.xlu0 %v3039, 120
    %v3075 = vpop.permute.xlu0 %3074
    %3076 = vrot.lane.b32.xlu0 %v3048, 120
    %v3077 = vpop.permute.xlu0 %3076
    %3078 = vrot.lane.b32.xlu0 %v3049, 120
    %v3079 = vpop.permute.xlu0 %3078
    %3080 = vrot.lane.b32.xlu0 %v3050, 120
    %v3081 = vpop.permute.xlu0 %3080
    %3082 = vrot.lane.b32.xlu0 %v3051, 120
    %v3083 = vpop.permute.xlu0 %3082
    %3100 = vst [vmem:[#allocation1] ss:$2 sm:$0xff] %v1530
    %s3101 = scalar_lea.vmem [#allocation1], 1
    %3102 = vst [vmem:[%s3101] ss:$2 sm:$0xff] %v1533
    %s3103 = scalar_lea.vmem [#allocation1], 16
    %3104 = vst [vmem:[%s3103] ss:$2 sm:$0xff] %v1537
    %s3105 = scalar_lea.vmem [#allocation1], 17
    %3106 = vst [vmem:[%s3105] ss:$2 sm:$0xff] %v1540
    %s3107 = scalar_lea.vmem [#allocation1], 32
    %3108 = vst [vmem:[%s3107] ss:$2 sm:$0xff] %v1544
    %s3109 = scalar_lea.vmem [#allocation1], 33
    %3110 = vst [vmem:[%s3109] ss:$2 sm:$0xff] %v1547
    %s3111 = scalar_lea.vmem [#allocation1], 48
    %3112 = vst [vmem:[%s3111] ss:$2 sm:$0xff] %v1551
    %s3113 = scalar_lea.vmem [#allocation1], 49
    %3114 = vst [vmem:[%s3113] ss:$2 sm:$0xff] %v1554
    %v3115 = vld.sshfl [vmem:[#allocation1] sm:$0xff pattern:$0x75316420]
    %v3116 = vld.sshfl [vmem:[#allocation1 + $0x10] sm:$0xff pattern:$0x75316420]
    %v3117 = vld.sshfl [vmem:[#allocation1 + $0x20] sm:$0xff pattern:$0x75316420]
    %v3118 = vld.sshfl [vmem:[#allocation1 + $0x30] sm:$0xff pattern:$0x75316420]
    %3119 = vst [vmem:[#allocation1] ss:$2 sm:$0xff] %v1558
    %3120 = vst [vmem:[%s3101] ss:$2 sm:$0xff] %v1561
    %3121 = vst [vmem:[%s3103] ss:$2 sm:$0xff] %v1565
    %3122 = vst [vmem:[%s3105] ss:$2 sm:$0xff] %v1568
    %3123 = vst [vmem:[%s3107] ss:$2 sm:$0xff] %v1656
    %3124 = vst [vmem:[%s3109] ss:$2 sm:$0xff] %v1659
    %3125 = vst [vmem:[%s3111] ss:$2 sm:$0xff] %v1698
    %3126 = vst [vmem:[%s3113] ss:$2 sm:$0xff] %v1701
    %v3127 = vld.sshfl [vmem:[#allocation1] sm:$0xff pattern:$0x75316420]
    %v3128 = vld.sshfl [vmem:[#allocation1 + $0x10] sm:$0xff pattern:$0x75316420]
    %v3129 = vld.sshfl [vmem:[#allocation1 + $0x20] sm:$0xff pattern:$0x75316420]
    %v3130 = vld.sshfl [vmem:[#allocation1 + $0x30] sm:$0xff pattern:$0x75316420]
    %3131 = vst [vmem:[#allocation1] ss:$2 sm:$0xff] %v1586
    %3132 = vst [vmem:[%s3101] ss:$2 sm:$0xff] %v1589
    %3133 = vst [vmem:[%s3103] ss:$2 sm:$0xff] %v1593
    %3134 = vst [vmem:[%s3105] ss:$2 sm:$0xff] %v1596
    %3135 = vst [vmem:[%s3107] ss:$2 sm:$0xff] %v1600
    %3136 = vst [vmem:[%s3109] ss:$2 sm:$0xff] %v1603
    %3137 = vst [vmem:[%s3111] ss:$2 sm:$0xff] %v1607
    %3138 = vst [vmem:[%s3113] ss:$2 sm:$0xff] %v1610
    %v3139 = vld.sshfl [vmem:[#allocation1] sm:$0xff pattern:$0x75316420]
    %v3140 = vld.sshfl [vmem:[#allocation1 + $0x10] sm:$0xff pattern:$0x75316420]
    %v3141 = vld.sshfl [vmem:[#allocation1 + $0x20] sm:$0xff pattern:$0x75316420]
    %v3142 = vld.sshfl [vmem:[#allocation1 + $0x30] sm:$0xff pattern:$0x75316420]
    %3143 = vst [vmem:[#allocation1] ss:$2 sm:$0xff] %v1614
    %3144 = vst [vmem:[%s3101] ss:$2 sm:$0xff] %v1617
    %3145 = vst [vmem:[%s3103] ss:$2 sm:$0xff] %v1621
    %3146 = vst [vmem:[%s3105] ss:$2 sm:$0xff] %v1624
    %3147 = vst [vmem:[%s3107] ss:$2 sm:$0xff] %v1663
    %3148 = vst [vmem:[%s3109] ss:$2 sm:$0xff] %v1666
    %3149 = vst [vmem:[%s3111] ss:$2 sm:$0xff] %v1705
    %3150 = vst [vmem:[%s3113] ss:$2 sm:$0xff] %v1708
    %v3151 = vld.sshfl [vmem:[#allocation1] sm:$0xff pattern:$0x75316420]
    %v3152 = vld.sshfl [vmem:[#allocation1 + $0x10] sm:$0xff pattern:$0x75316420]
    %v3153 = vld.sshfl [vmem:[#allocation1 + $0x20] sm:$0xff pattern:$0x75316420]
    %v3154 = vld.sshfl [vmem:[#allocation1 + $0x30] sm:$0xff pattern:$0x75316420]
    %3155 = vrot.lane.b32.xlu0 %v3115, 2
    %v3156 = vpop.permute.xlu0 %3155
    %3157 = vrot.lane.b32.xlu0 %v3116, 2
    %v3158 = vpop.permute.xlu0 %3157
    %3159 = vrot.lane.b32.xlu0 %v3117, 2
    %v3160 = vpop.permute.xlu0 %3159
    %3161 = vrot.lane.b32.xlu0 %v3118, 2
    %v3162 = vpop.permute.xlu0 %3161
    %3163 = vrot.lane.b32.xlu0 %v3127, 2
    %v3164 = vpop.permute.xlu0 %3163
    %3165 = vrot.lane.b32.xlu0 %v3128, 2
    %v3166 = vpop.permute.xlu0 %3165
    %3167 = vrot.lane.b32.xlu0 %v3129, 2
    %v3168 = vpop.permute.xlu0 %3167
    %3169 = vrot.lane.b32.xlu0 %v3130, 2
    %v3170 = vpop.permute.xlu0 %3169
    %3171 = vrot.lane.b32.xlu0 %v3139, 2
    %v3172 = vpop.permute.xlu0 %3171
    %3173 = vrot.lane.b32.xlu0 %v3140, 2
    %v3174 = vpop.permute.xlu0 %3173
    %3175 = vrot.lane.b32.xlu0 %v3141, 2
    %v3176 = vpop.permute.xlu0 %3175
    %3177 = vrot.lane.b32.xlu0 %v3142, 2
    %v3178 = vpop.permute.xlu0 %3177
    %3179 = vrot.lane.b32.xlu0 %v3151, 2
    %v3180 = vpop.permute.xlu0 %3179
    %3181 = vrot.lane.b32.xlu0 %v3152, 2
    %v3182 = vpop.permute.xlu0 %3181
    %3183 = vrot.lane.b32.xlu0 %v3153, 2
    %v3184 = vpop.permute.xlu0 %3183
    %3185 = vrot.lane.b32.xlu0 %v3154, 2
    %v3186 = vpop.permute.xlu0 %3185
    %3203 = vst [vmem:[#allocation1] ss:$2 sm:$0xff] %v1248
    %s3204 = scalar_lea.vmem [#allocation1], 1
    %3205 = vst [vmem:[%s3204] ss:$2 sm:$0xff] %v1177
    %s3206 = scalar_lea.vmem [#allocation1], 16
    %3207 = vst [vmem:[%s3206] ss:$2 sm:$0xff] %v1178
    %s3208 = scalar_lea.vmem [#allocation1], 17
    %3209 = vst [vmem:[%s3208] ss:$2 sm:$0xff] %v1250
    %s3210 = scalar_lea.vmem [#allocation1], 32
    %3211 = vst [vmem:[%s3210] ss:$2 sm:$0xff] %v1251
    %s3212 = scalar_lea.vmem [#allocation1], 33
    %3213 = vst [vmem:[%s3212] ss:$2 sm:$0xff] %v1180
    %s3214 = scalar_lea.vmem [#allocation1], 48
    %3215 = vst [vmem:[%s3214] ss:$2 sm:$0xff] %v1181
    %s3216 = scalar_lea.vmem [#allocation1], 49
    %3217 = vst [vmem:[%s3216] ss:$2 sm:$0xff] %v1253
    %v3218 = vld.sshfl [vmem:[#allocation1] sm:$0xff pattern:$0x75316420]
    %v3219 = vld.sshfl [vmem:[#allocation1 + $0x10] sm:$0xff pattern:$0x75316420]
    %v3220 = vld.sshfl [vmem:[#allocation1 + $0x20] sm:$0xff pattern:$0x75316420]
    %v3221 = vld.sshfl [vmem:[#allocation1 + $0x30] sm:$0xff pattern:$0x75316420]
    %3222 = vst [vmem:[#allocation1] ss:$2 sm:$0xff] %v1254
    %3223 = vst [vmem:[%s3204] ss:$2 sm:$0xff] %v1183
    %3224 = vst [vmem:[%s3206] ss:$2 sm:$0xff] %v1184
    %3225 = vst [vmem:[%s3208] ss:$2 sm:$0xff] %v1256
    %3226 = vst [vmem:[%s3210] ss:$2 sm:$0xff] %v1257
    %3227 = vst [vmem:[%s3212] ss:$2 sm:$0xff] %v1186
    %3228 = vst [vmem:[%s3214] ss:$2 sm:$0xff] %v1187
    %3229 = vst [vmem:[%s3216] ss:$2 sm:$0xff] %v1259
    %v3230 = vld.sshfl [vmem:[#allocation1] sm:$0xff pattern:$0x75316420]
    %v3231 = vld.sshfl [vmem:[#allocation1 + $0x10] sm:$0xff pattern:$0x75316420]
    %v3232 = vld.sshfl [vmem:[#allocation1 + $0x20] sm:$0xff pattern:$0x75316420]
    %v3233 = vld.sshfl [vmem:[#allocation1 + $0x30] sm:$0xff pattern:$0x75316420]
    %3234 = vst [vmem:[#allocation1] ss:$2 sm:$0xff] %v1266
    %3235 = vst [vmem:[%s3204] ss:$2 sm:$0xff] %v1195
    %3236 = vst [vmem:[%s3206] ss:$2 sm:$0xff] %v1196
    %3237 = vst [vmem:[%s3208] ss:$2 sm:$0xff] %v1268
    %3238 = vst [vmem:[%s3210] ss:$2 sm:$0xff] %v1269
    %3239 = vst [vmem:[%s3212] ss:$2 sm:$0xff] %v1198
    %3240 = vst [vmem:[%s3214] ss:$2 sm:$0xff] %v1199
    %3241 = vst [vmem:[%s3216] ss:$2 sm:$0xff] %v1271
    %v3242 = vld.sshfl [vmem:[#allocation1] sm:$0xff pattern:$0x75316420]
    %v3243 = vld.sshfl [vmem:[#allocation1 + $0x10] sm:$0xff pattern:$0x75316420]
    %v3244 = vld.sshfl [vmem:[#allocation1 + $0x20] sm:$0xff pattern:$0x75316420]
    %v3245 = vld.sshfl [vmem:[#allocation1 + $0x30] sm:$0xff pattern:$0x75316420]
    %3246 = vst [vmem:[#allocation1] ss:$2 sm:$0xff] %v1272
    %3247 = vst [vmem:[%s3204] ss:$2 sm:$0xff] %v1201
    %3248 = vst [vmem:[%s3206] ss:$2 sm:$0xff] %v1202
    %3249 = vst [vmem:[%s3208] ss:$2 sm:$0xff] %v1274
    %3250 = vst [vmem:[%s3210] ss:$2 sm:$0xff] %v1275
    %3251 = vst [vmem:[%s3212] ss:$2 sm:$0xff] %v1204
    %3252 = vst [vmem:[%s3214] ss:$2 sm:$0xff] %v1205
    %3253 = vst [vmem:[%s3216] ss:$2 sm:$0xff] %v1277
    %v3254 = vld.sshfl [vmem:[#allocation1] sm:$0xff pattern:$0x75316420]
    %v3255 = vld.sshfl [vmem:[#allocation1 + $0x10] sm:$0xff pattern:$0x75316420]
    %v3256 = vld.sshfl [vmem:[#allocation1 + $0x20] sm:$0xff pattern:$0x75316420]
    %v3257 = vld.sshfl [vmem:[#allocation1 + $0x30] sm:$0xff pattern:$0x75316420]
    %3258 = vrot.lane.b32.xlu0 %v3218, 12
    %v3259 = vpop.permute.xlu0 %3258
    %3260 = vrot.lane.b32.xlu0 %v3219, 12
    %v3261 = vpop.permute.xlu0 %3260
    %3262 = vrot.lane.b32.xlu0 %v3220, 12
    %v3263 = vpop.permute.xlu0 %3262
    %3264 = vrot.lane.b32.xlu0 %v3221, 12
    %v3265 = vpop.permute.xlu0 %3264
    %3266 = vrot.lane.b32.xlu0 %v3230, 12
    %v3267 = vpop.permute.xlu0 %3266
    %3268 = vrot.lane.b32.xlu0 %v3231, 12
    %v3269 = vpop.permute.xlu0 %3268
    %3270 = vrot.lane.b32.xlu0 %v3232, 12
    %v3271 = vpop.permute.xlu0 %3270
    %3272 = vrot.lane.b32.xlu0 %v3233, 12
    %v3273 = vpop.permute.xlu0 %3272
    %3274 = vrot.lane.b32.xlu0 %v3242, 12
    %v3275 = vpop.permute.xlu0 %3274
    %3276 = vrot.lane.b32.xlu0 %v3243, 12
    %v3277 = vpop.permute.xlu0 %3276
    %3278 = vrot.lane.b32.xlu0 %v3244, 12
    %v3279 = vpop.permute.xlu0 %3278
    %3280 = vrot.lane.b32.xlu0 %v3245, 12
    %v3281 = vpop.permute.xlu0 %3280
    %3282 = vrot.lane.b32.xlu0 %v3254, 12
    %v3283 = vpop.permute.xlu0 %3282
    %3284 = vrot.lane.b32.xlu0 %v3255, 12
    %v3285 = vpop.permute.xlu0 %3284
    %3286 = vrot.lane.b32.xlu0 %v3256, 12
    %v3287 = vpop.permute.xlu0 %3286
    %3288 = vrot.lane.b32.xlu0 %v3257, 12
    %v3289 = vpop.permute.xlu0 %3288
    %3306 = vst [vmem:[#allocation1] ss:$2 sm:$0xff] %v1249
    %s3307 = scalar_lea.vmem [#allocation1], 1
    %3308 = vst [vmem:[%s3307] ss:$2 sm:$0xff] %v1178
    %s3309 = scalar_lea.vmem [#allocation1], 16
    %3310 = vst [vmem:[%s3309] ss:$2 sm:$0xff] %v1179
    %s3311 = scalar_lea.vmem [#allocation1], 17
    %3312 = vst [vmem:[%s3311] ss:$2 sm:$0xff] %v1251
    %s3313 = scalar_lea.vmem [#allocation1], 32
    %3314 = vst [vmem:[%s3313] ss:$2 sm:$0xff] %v1252
    %s3315 = scalar_lea.vmem [#allocation1], 33
    %3316 = vst [vmem:[%s3315] ss:$2 sm:$0xff] %v1181
    %s3317 = scalar_lea.vmem [#allocation1], 48
    %3318 = vst [vmem:[%s3317] ss:$2 sm:$0xff] %v1182
    %s3319 = scalar_lea.vmem [#allocation1], 49
    %3320 = vst [vmem:[%s3319] ss:$2 sm:$0xff] %v1254
    %v3321 = vld.sshfl [vmem:[#allocation1] sm:$0xff pattern:$0x75316420]
    %v3322 = vld.sshfl [vmem:[#allocation1 + $0x10] sm:$0xff pattern:$0x75316420]
    %v3323 = vld.sshfl [vmem:[#allocation1 + $0x20] sm:$0xff pattern:$0x75316420]
    %v3324 = vld.sshfl [vmem:[#allocation1 + $0x30] sm:$0xff pattern:$0x75316420]
    %3325 = vst [vmem:[#allocation1] ss:$2 sm:$0xff] %v1255
    %3326 = vst [vmem:[%s3307] ss:$2 sm:$0xff] %v1184
    %3327 = vst [vmem:[%s3309] ss:$2 sm:$0xff] %v1185
    %3328 = vst [vmem:[%s3311] ss:$2 sm:$0xff] %v1257
    %3329 = vst [vmem:[%s3313] ss:$2 sm:$0xff] %v1258
    %3330 = vst [vmem:[%s3315] ss:$2 sm:$0xff] %v1187
    %3331 = vst [vmem:[%s3317] ss:$2 sm:$0xff] %v1188
    %3332 = vst [vmem:[%s3319] ss:$2 sm:$0xff] %v1260
    %v3333 = vld.sshfl [vmem:[#allocation1] sm:$0xff pattern:$0x75316420]
    %v3334 = vld.sshfl [vmem:[#allocation1 + $0x10] sm:$0xff pattern:$0x75316420]
    %v3335 = vld.sshfl [vmem:[#allocation1 + $0x20] sm:$0xff pattern:$0x75316420]
    %v3336 = vld.sshfl [vmem:[#allocation1 + $0x30] sm:$0xff pattern:$0x75316420]
    %3337 = vst [vmem:[#allocation1] ss:$2 sm:$0xff] %v1267
    %3338 = vst [vmem:[%s3307] ss:$2 sm:$0xff] %v1196
    %3339 = vst [vmem:[%s3309] ss:$2 sm:$0xff] %v1197
    %3340 = vst [vmem:[%s3311] ss:$2 sm:$0xff] %v1269
    %3341 = vst [vmem:[%s3313] ss:$2 sm:$0xff] %v1270
    %3342 = vst [vmem:[%s3315] ss:$2 sm:$0xff] %v1199
    %3343 = vst [vmem:[%s3317] ss:$2 sm:$0xff] %v1200
    %3344 = vst [vmem:[%s3319] ss:$2 sm:$0xff] %v1272
    %v3345 = vld.sshfl [vmem:[#allocation1] sm:$0xff pattern:$0x75316420]
    %v3346 = vld.sshfl [vmem:[#allocation1 + $0x10] sm:$0xff pattern:$0x75316420]
    %v3347 = vld.sshfl [vmem:[#allocation1 + $0x20] sm:$0xff pattern:$0x75316420]
    %v3348 = vld.sshfl [vmem:[#allocation1 + $0x30] sm:$0xff pattern:$0x75316420]
    %3349 = vst [vmem:[#allocation1] ss:$2 sm:$0xff] %v1273
    %3350 = vst [vmem:[%s3307] ss:$2 sm:$0xff] %v1202
    %3351 = vst [vmem:[%s3309] ss:$2 sm:$0xff] %v1203
    %3352 = vst [vmem:[%s3311] ss:$2 sm:$0xff] %v1275
    %3353 = vst [vmem:[%s3313] ss:$2 sm:$0xff] %v1276
    %3354 = vst [vmem:[%s3315] ss:$2 sm:$0xff] %v1205
    %3355 = vst [vmem:[%s3317] ss:$2 sm:$0xff] %v1206
    %3356 = vst [vmem:[%s3319] ss:$2 sm:$0xff] %v1278
    %v3357 = vld.sshfl [vmem:[#allocation1] sm:$0xff pattern:$0x75316420]
    %v3358 = vld.sshfl [vmem:[#allocation1 + $0x10] sm:$0xff pattern:$0x75316420]
    %v3359 = vld.sshfl [vmem:[#allocation1 + $0x20] sm:$0xff pattern:$0x75316420]
    %v3360 = vld.sshfl [vmem:[#allocation1 + $0x30] sm:$0xff pattern:$0x75316420]
    %3361 = vrot.lane.b32.xlu0 %v3321, 22
    %v3362 = vpop.permute.xlu0 %3361
    %3363 = vrot.lane.b32.xlu0 %v3322, 22
    %v3364 = vpop.permute.xlu0 %3363
    %3365 = vrot.lane.b32.xlu0 %v3323, 22
    %v3366 = vpop.permute.xlu0 %3365
    %3367 = vrot.lane.b32.xlu0 %v3324, 22
    %v3368 = vpop.permute.xlu0 %3367
    %3369 = vrot.lane.b32.xlu0 %v3333, 22
    %v3370 = vpop.permute.xlu0 %3369
    %3371 = vrot.lane.b32.xlu0 %v3334, 22
    %v3372 = vpop.permute.xlu0 %3371
    %3373 = vrot.lane.b32.xlu0 %v3335, 22
    %v3374 = vpop.permute.xlu0 %3373
    %3375 = vrot.lane.b32.xlu0 %v3336, 22
    %v3376 = vpop.permute.xlu0 %3375
    %3377 = vrot.lane.b32.xlu0 %v3345, 22
    %v3378 = vpop.permute.xlu0 %3377
    %3379 = vrot.lane.b32.xlu0 %v3346, 22
    %v3380 = vpop.permute.xlu0 %3379
    %3381 = vrot.lane.b32.xlu0 %v3347, 22
    %v3382 = vpop.permute.xlu0 %3381
    %3383 = vrot.lane.b32.xlu0 %v3348, 22
    %v3384 = vpop.permute.xlu0 %3383
    %3385 = vrot.lane.b32.xlu0 %v3357, 22
    %v3386 = vpop.permute.xlu0 %3385
    %3387 = vrot.lane.b32.xlu0 %v3358, 22
    %v3388 = vpop.permute.xlu0 %3387
    %3389 = vrot.lane.b32.xlu0 %v3359, 22
    %v3390 = vpop.permute.xlu0 %3389
    %3391 = vrot.lane.b32.xlu0 %v3360, 22
    %v3392 = vpop.permute.xlu0 %3391
    %vm3409 = vcmask 80896
    %v3410 = vsel %vm3409, %v1808, %v1920
    %v3411 = vsel %vm3409, %v1809, %v1922
    %v3412 = vsel %vm3409, %v1810, %v1924
    %v3413 = vsel %vm3409, %v1811, %v1926
    %v3414 = vsel %vm3409, %v1820, %v1928
    %v3415 = vsel %vm3409, %v1821, %v1930
    %v3416 = vsel %vm3409, %v1822, %v1932
    %v3417 = vsel %vm3409, %v1823, %v1934
    %v3418 = vsel %vm3409, %v1832, %v1936
    %v3419 = vsel %vm3409, %v1833, %v1938
    %v3420 = vsel %vm3409, %v1834, %v1940
    %v3421 = vsel %vm3409, %v1835, %v1942
    %v3422 = vsel %vm3409, %v1844, %v1944
    %v3423 = vsel %vm3409, %v1845, %v1946
    %v3424 = vsel %vm3409, %v1846, %v1948
    %v3425 = vsel %vm3409, %v1847, %v1950
    %vm3426 = vcmask 162816
    %v3427 = vsel %vm3426, %v3410, %v2023
    %v3428 = vsel %vm3426, %v3411, %v2025
    %v3429 = vsel %vm3426, %v3412, %v2027
    %v3430 = vsel %vm3426, %v3413, %v2029
    %v3431 = vsel %vm3426, %v3414, %v2031
    %v3432 = vsel %vm3426, %v3415, %v2033
    %v3433 = vsel %vm3426, %v3416, %v2035
    %v3434 = vsel %vm3426, %v3417, %v2037
    %v3435 = vsel %vm3426, %v3418, %v2039
    %v3436 = vsel %vm3426, %v3419, %v2041
    %v3437 = vsel %vm3426, %v3420, %v2043
    %v3438 = vsel %vm3426, %v3421, %v2045
    %v3439 = vsel %vm3426, %v3422, %v2047
    %v3440 = vsel %vm3426, %v3423, %v2049
    %v3441 = vsel %vm3426, %v3424, %v2051
    %v3442 = vsel %vm3426, %v3425, %v2053
    %vm3443 = vcmask 244736
    %v3444 = vsel %vm3443, %v3427, %v2126
    %v3445 = vsel %vm3443, %v3428, %v2128
    %v3446 = vsel %vm3443, %v3429, %v2130
    %v3447 = vsel %vm3443, %v3430, %v2132
    %v3448 = vsel %vm3443, %v3431, %v2134
    %v3449 = vsel %vm3443, %v3432, %v2136
    %v3450 = vsel %vm3443, %v3433, %v2138
    %v3451 = vsel %vm3443, %v3434, %v2140
    %v3452 = vsel %vm3443, %v3435, %v2142
    %v3453 = vsel %vm3443, %v3436, %v2144
    %v3454 = vsel %vm3443, %v3437, %v2146
    %v3455 = vsel %vm3443, %v3438, %v2148
    %v3456 = vsel %vm3443, %v3439, %v2150
    %v3457 = vsel %vm3443, %v3440, %v2152
    %v3458 = vsel %vm3443, %v3441, %v2154
    %v3459 = vsel %vm3443, %v3442, %v2156
    %vm3460 = vcmask 326656
    %v3461 = vsel %vm3460, %v3444, %v2229
    %v3462 = vsel %vm3460, %v3445, %v2231
    %v3463 = vsel %vm3460, %v3446, %v2233
    %v3464 = vsel %vm3460, %v3447, %v2235
    %v3465 = vsel %vm3460, %v3448, %v2237
    %v3466 = vsel %vm3460, %v3449, %v2239
    %v3467 = vsel %vm3460, %v3450, %v2241
    %v3468 = vsel %vm3460, %v3451, %v2243
    %v3469 = vsel %vm3460, %v3452, %v2245
    %v3470 = vsel %vm3460, %v3453, %v2247
    %v3471 = vsel %vm3460, %v3454, %v2249
    %v3472 = vsel %vm3460, %v3455, %v2251
    %v3473 = vsel %vm3460, %v3456, %v2253
    %v3474 = vsel %vm3460, %v3457, %v2255
    %v3475 = vsel %vm3460, %v3458, %v2257
    %v3476 = vsel %vm3460, %v3459, %v2259
    %vm3477 = vcmask 408576
    %v3478 = vsel %vm3477, %v3461, %v2332
    %v3479 = vsel %vm3477, %v3462, %v2334
    %v3480 = vsel %vm3477, %v3463, %v2336
    %v3481 = vsel %vm3477, %v3464, %v2338
    %v3482 = vsel %vm3477, %v3465, %v2340
    %v3483 = vsel %vm3477, %v3466, %v2342
    %v3484 = vsel %vm3477, %v3467, %v2344
    %v3485 = vsel %vm3477, %v3468, %v2346
    %v3486 = vsel %vm3477, %v3469, %v2348
    %v3487 = vsel %vm3477, %v3470, %v2350
    %v3488 = vsel %vm3477, %v3471, %v2352
    %v3489 = vsel %vm3477, %v3472, %v2354
    %v3490 = vsel %vm3477, %v3473, %v2356
    %v3491 = vsel %vm3477, %v3474, %v2358
    %v3492 = vsel %vm3477, %v3475, %v2360
    %v3493 = vsel %vm3477, %v3476, %v2362
    %vm3494 = vcmask 490496
    %v3495 = vsel %vm3494, %v3478, %v2435
    %v3496 = vsel %vm3494, %v3479, %v2437
    %v3497 = vsel %vm3494, %v3480, %v2439
    %v3498 = vsel %vm3494, %v3481, %v2441
    %v3499 = vsel %vm3494, %v3482, %v2443
    %v3500 = vsel %vm3494, %v3483, %v2445
    %v3501 = vsel %vm3494, %v3484, %v2447
    %v3502 = vsel %vm3494, %v3485, %v2449
    %v3503 = vsel %vm3494, %v3486, %v2451
    %v3504 = vsel %vm3494, %v3487, %v2453
    %v3505 = vsel %vm3494, %v3488, %v2455
    %v3506 = vsel %vm3494, %v3489, %v2457
    %v3507 = vsel %vm3494, %v3490, %v2459
    %v3508 = vsel %vm3494, %v3491, %v2461
    %v3509 = vsel %vm3494, %v3492, %v2463
    %v3510 = vsel %vm3494, %v3493, %v2465
    %vm3511 = vcmask 572416
    %v3512 = vsel %vm3511, %v3495, %v2538
    %v3513 = vsel %vm3511, %v3496, %v2540
    %v3514 = vsel %vm3511, %v3497, %v2542
    %v3515 = vsel %vm3511, %v3498, %v2544
    %v3516 = vsel %vm3511, %v3499, %v2546
    %v3517 = vsel %vm3511, %v3500, %v2548
    %v3518 = vsel %vm3511, %v3501, %v2550
    %v3519 = vsel %vm3511, %v3502, %v2552
    %v3520 = vsel %vm3511, %v3503, %v2554
    %v3521 = vsel %vm3511, %v3504, %v2556
    %v3522 = vsel %vm3511, %v3505, %v2558
    %v3523 = vsel %vm3511, %v3506, %v2560
    %v3524 = vsel %vm3511, %v3507, %v2562
    %v3525 = vsel %vm3511, %v3508, %v2564
    %v3526 = vsel %vm3511, %v3509, %v2566
    %v3527 = vsel %vm3511, %v3510, %v2568
    %vm3528 = vcmask 654336
    %v3529 = vsel %vm3528, %v3512, %v2641
    %v3530 = vsel %vm3528, %v3513, %v2643
    %v3531 = vsel %vm3528, %v3514, %v2645
    %v3532 = vsel %vm3528, %v3515, %v2647
    %v3533 = vsel %vm3528, %v3516, %v2649
    %v3534 = vsel %vm3528, %v3517, %v2651
    %v3535 = vsel %vm3528, %v3518, %v2653
    %v3536 = vsel %vm3528, %v3519, %v2655
    %v3537 = vsel %vm3528, %v3520, %v2657
    %v3538 = vsel %vm3528, %v3521, %v2659
    %v3539 = vsel %vm3528, %v3522, %v2661
    %v3540 = vsel %vm3528, %v3523, %v2663
    %v3541 = vsel %vm3528, %v3524, %v2665
    %v3542 = vsel %vm3528, %v3525, %v2667
    %v3543 = vsel %vm3528, %v3526, %v2669
    %v3544 = vsel %vm3528, %v3527, %v2671
    %vm3545 = vcmask 736256
    %v3546 = vsel %vm3545, %v3529, %v2744
    %v3547 = vsel %vm3545, %v3530, %v2746
    %v3548 = vsel %vm3545, %v3531, %v2748
    %v3549 = vsel %vm3545, %v3532, %v2750
    %v3550 = vsel %vm3545, %v3533, %v2752
    %v3551 = vsel %vm3545, %v3534, %v2754
    %v3552 = vsel %vm3545, %v3535, %v2756
    %v3553 = vsel %vm3545, %v3536, %v2758
    %v3554 = vsel %vm3545, %v3537, %v2760
    %v3555 = vsel %vm3545, %v3538, %v2762
    %v3556 = vsel %vm3545, %v3539, %v2764
    %v3557 = vsel %vm3545, %v3540, %v2766
    %v3558 = vsel %vm3545, %v3541, %v2768
    %v3559 = vsel %vm3545, %v3542, %v2770
    %v3560 = vsel %vm3545, %v3543, %v2772
    %v3561 = vsel %vm3545, %v3544, %v2774
    %vm3562 = vcmask 818176
    %v3563 = vsel %vm3562, %v3546, %v2847
    %v3564 = vsel %vm3562, %v3547, %v2849
    %v3565 = vsel %vm3562, %v3548, %v2851
    %v3566 = vsel %vm3562, %v3549, %v2853
    %v3567 = vsel %vm3562, %v3550, %v2855
    %v3568 = vsel %vm3562, %v3551, %v2857
    %v3569 = vsel %vm3562, %v3552, %v2859
    %v3570 = vsel %vm3562, %v3553, %v2861
    %v3571 = vsel %vm3562, %v3554, %v2863
    %v3572 = vsel %vm3562, %v3555, %v2865
    %v3573 = vsel %vm3562, %v3556, %v2867
    %v3574 = vsel %vm3562, %v3557, %v2869
    %v3575 = vsel %vm3562, %v3558, %v2871
    %v3576 = vsel %vm3562, %v3559, %v2873
    %v3577 = vsel %vm3562, %v3560, %v2875
    %v3578 = vsel %vm3562, %v3561, %v2877
    %vm3579 = vcmask 900096
    %v3580 = vsel %vm3579, %v3563, %v2950
    %v3581 = vsel %vm3579, %v3564, %v2952
    %v3582 = vsel %vm3579, %v3565, %v2954
    %v3583 = vsel %vm3579, %v3566, %v2956
    %v3584 = vsel %vm3579, %v3567, %v2958
    %v3585 = vsel %vm3579, %v3568, %v2960
    %v3586 = vsel %vm3579, %v3569, %v2962
    %v3587 = vsel %vm3579, %v3570, %v2964
    %v3588 = vsel %vm3579, %v3571, %v2966
    %v3589 = vsel %vm3579, %v3572, %v2968
    %v3590 = vsel %vm3579, %v3573, %v2970
    %v3591 = vsel %vm3579, %v3574, %v2972
    %v3592 = vsel %vm3579, %v3575, %v2974
    %v3593 = vsel %vm3579, %v3576, %v2976
    %v3594 = vsel %vm3579, %v3577, %v2978
    %v3595 = vsel %vm3579, %v3578, %v2980
    %vm3596 = vcmask 982016
    %v3597 = vsel %vm3596, %v3580, %v3053
    %v3598 = vsel %vm3596, %v3581, %v3055
    %v3599 = vsel %vm3596, %v3582, %v3057
    %v3600 = vsel %vm3596, %v3583, %v3059
    %v3601 = vsel %vm3596, %v3584, %v3061
    %v3602 = vsel %vm3596, %v3585, %v3063
    %v3603 = vsel %vm3596, %v3586, %v3065
    %v3604 = vsel %vm3596, %v3587, %v3067
    %v3605 = vsel %vm3596, %v3588, %v3069
    %v3606 = vsel %vm3596, %v3589, %v3071
    %v3607 = vsel %vm3596, %v3590, %v3073
    %v3608 = vsel %vm3596, %v3591, %v3075
    %v3609 = vsel %vm3596, %v3592, %v3077
    %v3610 = vsel %vm3596, %v3593, %v3079
    %v3611 = vsel %vm3596, %v3594, %v3081
    %v3612 = vsel %vm3596, %v3595, %v3083
    %vm3613 = vcmask 15360
    %v3614 = vsel %vm3613, %v3053, %v3156
    %v3615 = vsel %vm3613, %v3055, %v3158
    %v3616 = vsel %vm3613, %v3057, %v3160
    %v3617 = vsel %vm3613, %v3059, %v3162
    %v3618 = vsel %vm3613, %v3061, %v3164
    %v3619 = vsel %vm3613, %v3063, %v3166
    %v3620 = vsel %vm3613, %v3065, %v3168
    %v3621 = vsel %vm3613, %v3067, %v3170
    %v3622 = vsel %vm3613, %v3069, %v3172
    %v3623 = vsel %vm3613, %v3071, %v3174
    %v3624 = vsel %vm3613, %v3073, %v3176
    %v3625 = vsel %vm3613, %v3075, %v3178
    %v3626 = vsel %vm3613, %v3077, %v3180
    %v3627 = vsel %vm3613, %v3079, %v3182
    %v3628 = vsel %vm3613, %v3081, %v3184
    %v3629 = vsel %vm3613, %v3083, %v3186
    %vm3630 = vcmask 97280
    %v3631 = vsel %vm3630, %v3614, %v3259
    %v3632 = vsel %vm3630, %v3615, %v3261
    %v3633 = vsel %vm3630, %v3616, %v3263
    %v3634 = vsel %vm3630, %v3617, %v3265
    %v3635 = vsel %vm3630, %v3618, %v3267
    %v3636 = vsel %vm3630, %v3619, %v3269
    %v3637 = vsel %vm3630, %v3620, %v3271
    %v3638 = vsel %vm3630, %v3621, %v3273
    %v3639 = vsel %vm3630, %v3622, %v3275
    %v3640 = vsel %vm3630, %v3623, %v3277
    %v3641 = vsel %vm3630, %v3624, %v3279
    %v3642 = vsel %vm3630, %v3625, %v3281
    %v3643 = vsel %vm3630, %v3626, %v3283
    %v3644 = vsel %vm3630, %v3627, %v3285
    %v3645 = vsel %vm3630, %v3628, %v3287
    %v3646 = vsel %vm3630, %v3629, %v3289
    %vm3647 = vcmask 179200
    %v3648 = vsel %vm3647, %v3631, %v3362
    %v3649 = vsel %vm3647, %v3632, %v3364
    %v3650 = vsel %vm3647, %v3633, %v3366
    %v3651 = vsel %vm3647, %v3634, %v3368
    %v3652 = vsel %vm3647, %v3635, %v3370
    %v3653 = vsel %vm3647, %v3636, %v3372
    %v3654 = vsel %vm3647, %v3637, %v3374
    %v3655 = vsel %vm3647, %v3638, %v3376
    %v3656 = vsel %vm3647, %v3639, %v3378
    %v3657 = vsel %vm3647, %v3640, %v3380
    %v3658 = vsel %vm3647, %v3641, %v3382
    %v3659 = vsel %vm3647, %v3642, %v3384
    %v3660 = vsel %vm3647, %v3643, %v3386
    %v3661 = vsel %vm3647, %v3644, %v3388
    %v3662 = vsel %vm3647, %v3645, %v3390
    %v3663 = vsel %vm3647, %v3646, %v3392
    %3664 = vst [vmem:[#allocation1] ss:$2 sm:$0xff] %v1308
    %s3665 = scalar_lea.vmem [#allocation1], 1
    %3666 = vst [vmem:[%s3665] ss:$2 sm:$0xff] %v1311
    %s3667 = scalar_lea.vmem [#allocation1], 16
    %3668 = vst [vmem:[%s3667] ss:$2 sm:$0xff] %v1315
    %s3669 = scalar_lea.vmem [#allocation1], 17
    %3670 = vst [vmem:[%s3669] ss:$2 sm:$0xff] %v1318
    %s3671 = scalar_lea.vmem [#allocation1], 32
    %3672 = vst [vmem:[%s3671] ss:$2 sm:$0xff] %v1322
    %s3673 = scalar_lea.vmem [#allocation1], 33
    %3674 = vst [vmem:[%s3673] ss:$2 sm:$0xff] %v1325
    %s3675 = scalar_lea.vmem [#allocation1], 48
    %3676 = vst [vmem:[%s3675] ss:$2 sm:$0xff] %v1329
    %s3677 = scalar_lea.vmem [#allocation1], 49
    %3678 = vst [vmem:[%s3677] ss:$2 sm:$0xff] %v1332
    %v3679 = vld.sshfl [vmem:[#allocation1] sm:$0xff pattern:$0x75316420]
    %v3680 = vld.sshfl [vmem:[#allocation1 + $0x10] sm:$0xff pattern:$0x75316420]
    %v3681 = vld.sshfl [vmem:[#allocation1 + $0x20] sm:$0xff pattern:$0x75316420]
    %v3682 = vld.sshfl [vmem:[#allocation1 + $0x30] sm:$0xff pattern:$0x75316420]
    %3683 = vst [vmem:[#allocation1] ss:$2 sm:$0xff] %v1336
    %3684 = vst [vmem:[%s3665] ss:$2 sm:$0xff] %v1339
    %3685 = vst [vmem:[%s3667] ss:$2 sm:$0xff] %v1628
    %3686 = vst [vmem:[%s3669] ss:$2 sm:$0xff] %v1631
    %3687 = vst [vmem:[%s3671] ss:$2 sm:$0xff] %v1670
    %3688 = vst [vmem:[%s3673] ss:$2 sm:$0xff] %v1673
    %3689 = vst [vmem:[%s3675] ss:$2 sm:$0xff] %v1712
    %3690 = vst [vmem:[%s3677] ss:$2 sm:$0xff] %v1715
    %v3691 = vld.sshfl [vmem:[#allocation1] sm:$0xff pattern:$0x75316420]
    %v3692 = vld.sshfl [vmem:[#allocation1 + $0x10] sm:$0xff pattern:$0x75316420]
    %v3693 = vld.sshfl [vmem:[#allocation1 + $0x20] sm:$0xff pattern:$0x75316420]
    %v3694 = vld.sshfl [vmem:[#allocation1 + $0x30] sm:$0xff pattern:$0x75316420]
    %3695 = vst [vmem:[#allocation1] ss:$2 sm:$0xff] %v1364
    %3696 = vst [vmem:[%s3665] ss:$2 sm:$0xff] %v1367
    %3697 = vst [vmem:[%s3667] ss:$2 sm:$0xff] %v1371
    %3698 = vst [vmem:[%s3669] ss:$2 sm:$0xff] %v1374
    %3699 = vst [vmem:[%s3671] ss:$2 sm:$0xff] %v1378
    %3700 = vst [vmem:[%s3673] ss:$2 sm:$0xff] %v1381
    %3701 = vst [vmem:[%s3675] ss:$2 sm:$0xff] %v1385
    %3702 = vst [vmem:[%s3677] ss:$2 sm:$0xff] %v1388
    %v3703 = vld.sshfl [vmem:[#allocation1] sm:$0xff pattern:$0x75316420]
    %v3704 = vld.sshfl [vmem:[#allocation1 + $0x10] sm:$0xff pattern:$0x75316420]
    %v3705 = vld.sshfl [vmem:[#allocation1 + $0x20] sm:$0xff pattern:$0x75316420]
    %v3706 = vld.sshfl [vmem:[#allocation1 + $0x30] sm:$0xff pattern:$0x75316420]
    %3707 = vst [vmem:[#allocation1] ss:$2 sm:$0xff] %v1392
    %3708 = vst [vmem:[%s3665] ss:$2 sm:$0xff] %v1395
    %3709 = vst [vmem:[%s3667] ss:$2 sm:$0xff] %v1635
    %3710 = vst [vmem:[%s3669] ss:$2 sm:$0xff] %v1638
    %3711 = vst [vmem:[%s3671] ss:$2 sm:$0xff] %v1677
    %3712 = vst [vmem:[%s3673] ss:$2 sm:$0xff] %v1680
    %3713 = vst [vmem:[%s3675] ss:$2 sm:$0xff] %v1719
    %3714 = vst [vmem:[%s3677] ss:$2 sm:$0xff] %v1722
    %v3715 = vld.sshfl [vmem:[#allocation1] sm:$0xff pattern:$0x75316420]
    %v3716 = vld.sshfl [vmem:[#allocation1 + $0x10] sm:$0xff pattern:$0x75316420]
    %v3717 = vld.sshfl [vmem:[#allocation1 + $0x20] sm:$0xff pattern:$0x75316420]
    %v3718 = vld.sshfl [vmem:[#allocation1 + $0x30] sm:$0xff pattern:$0x75316420]
    %3735 = vst [vmem:[#allocation1] ss:$2 sm:$0xff] %v1423
    %s3736 = scalar_lea.vmem [#allocation1], 1
    %3737 = vst [vmem:[%s3736] ss:$2 sm:$0xff] %v1426
    %s3738 = scalar_lea.vmem [#allocation1], 16
    %3739 = vst [vmem:[%s3738] ss:$2 sm:$0xff] %v1430
    %s3740 = scalar_lea.vmem [#allocation1], 17
    %3741 = vst [vmem:[%s3740] ss:$2 sm:$0xff] %v1433
    %s3742 = scalar_lea.vmem [#allocation1], 32
    %3743 = vst [vmem:[%s3742] ss:$2 sm:$0xff] %v1437
    %s3744 = scalar_lea.vmem [#allocation1], 33
    %3745 = vst [vmem:[%s3744] ss:$2 sm:$0xff] %v1440
    %s3746 = scalar_lea.vmem [#allocation1], 48
    %3747 = vst [vmem:[%s3746] ss:$2 sm:$0xff] %v1444
    %s3748 = scalar_lea.vmem [#allocation1], 49
    %3749 = vst [vmem:[%s3748] ss:$2 sm:$0xff] %v1447
    %v3750 = vld.sshfl [vmem:[#allocation1] sm:$0xff pattern:$0x75316420]
    %v3751 = vld.sshfl [vmem:[#allocation1 + $0x10] sm:$0xff pattern:$0x75316420]
    %v3752 = vld.sshfl [vmem:[#allocation1 + $0x20] sm:$0xff pattern:$0x75316420]
    %v3753 = vld.sshfl [vmem:[#allocation1 + $0x30] sm:$0xff pattern:$0x75316420]
    %3754 = vst [vmem:[#allocation1] ss:$2 sm:$0xff] %v1451
    %3755 = vst [vmem:[%s3736] ss:$2 sm:$0xff] %v1454
    %3756 = vst [vmem:[%s3738] ss:$2 sm:$0xff] %v1642
    %3757 = vst [vmem:[%s3740] ss:$2 sm:$0xff] %v1645
    %3758 = vst [vmem:[%s3742] ss:$2 sm:$0xff] %v1684
    %3759 = vst [vmem:[%s3744] ss:$2 sm:$0xff] %v1687
    %3760 = vst [vmem:[%s3746] ss:$2 sm:$0xff] %v1726
    %3761 = vst [vmem:[%s3748] ss:$2 sm:$0xff] %v1729
    %v3762 = vld.sshfl [vmem:[#allocation1] sm:$0xff pattern:$0x75316420]
    %v3763 = vld.sshfl [vmem:[#allocation1 + $0x10] sm:$0xff pattern:$0x75316420]
    %v3764 = vld.sshfl [vmem:[#allocation1 + $0x20] sm:$0xff pattern:$0x75316420]
    %v3765 = vld.sshfl [vmem:[#allocation1 + $0x30] sm:$0xff pattern:$0x75316420]
    %3766 = vst [vmem:[#allocation1] ss:$2 sm:$0xff] %v1479
    %3767 = vst [vmem:[%s3736] ss:$2 sm:$0xff] %v1482
    %3768 = vst [vmem:[%s3738] ss:$2 sm:$0xff] %v1486
    %3769 = vst [vmem:[%s3740] ss:$2 sm:$0xff] %v1489
    %3770 = vst [vmem:[%s3742] ss:$2 sm:$0xff] %v1493
    %3771 = vst [vmem:[%s3744] ss:$2 sm:$0xff] %v1496
    %3772 = vst [vmem:[%s3746] ss:$2 sm:$0xff] %v1500
    %3773 = vst [vmem:[%s3748] ss:$2 sm:$0xff] %v1503
    %v3774 = vld.sshfl [vmem:[#allocation1] sm:$0xff pattern:$0x75316420]
    %v3775 = vld.sshfl [vmem:[#allocation1 + $0x10] sm:$0xff pattern:$0x75316420]
    %v3776 = vld.sshfl [vmem:[#allocation1 + $0x20] sm:$0xff pattern:$0x75316420]
    %v3777 = vld.sshfl [vmem:[#allocation1 + $0x30] sm:$0xff pattern:$0x75316420]
    %3778 = vst [vmem:[#allocation1] ss:$2 sm:$0xff] %v1507
    %3779 = vst [vmem:[%s3736] ss:$2 sm:$0xff] %v1510
    %3780 = vst [vmem:[%s3738] ss:$2 sm:$0xff] %v1649
    %3781 = vst [vmem:[%s3740] ss:$2 sm:$0xff] %v1652
    %3782 = vst [vmem:[%s3742] ss:$2 sm:$0xff] %v1691
    %3783 = vst [vmem:[%s3744] ss:$2 sm:$0xff] %v1694
    %3784 = vst [vmem:[%s3746] ss:$2 sm:$0xff] %v1733
    %3785 = vst [vmem:[%s3748] ss:$2 sm:$0xff] %v1736
    %v3786 = vld.sshfl [vmem:[#allocation1] sm:$0xff pattern:$0x75316420]
    %v3787 = vld.sshfl [vmem:[#allocation1 + $0x10] sm:$0xff pattern:$0x75316420]
    %v3788 = vld.sshfl [vmem:[#allocation1 + $0x20] sm:$0xff pattern:$0x75316420]
    %v3789 = vld.sshfl [vmem:[#allocation1 + $0x30] sm:$0xff pattern:$0x75316420]
    %3790 = vrot.lane.b32.xlu0 %v3750, 10
    %v3791 = vpop.permute.xlu0 %3790
    %3792 = vrot.lane.b32.xlu0 %v3751, 10
    %v3793 = vpop.permute.xlu0 %3792
    %3794 = vrot.lane.b32.xlu0 %v3752, 10
    %v3795 = vpop.permute.xlu0 %3794
    %3796 = vrot.lane.b32.xlu0 %v3753, 10
    %v3797 = vpop.permute.xlu0 %3796
    %3798 = vrot.lane.b32.xlu0 %v3762, 10
    %v3799 = vpop.permute.xlu0 %3798
    %3800 = vrot.lane.b32.xlu0 %v3763, 10
    %v3801 = vpop.permute.xlu0 %3800
    %3802 = vrot.lane.b32.xlu0 %v3764, 10
    %v3803 = vpop.permute.xlu0 %3802
    %3804 = vrot.lane.b32.xlu0 %v3765, 10
    %v3805 = vpop.permute.xlu0 %3804
    %3806 = vrot.lane.b32.xlu0 %v3774, 10
    %v3807 = vpop.permute.xlu0 %3806
    %3808 = vrot.lane.b32.xlu0 %v3775, 10
    %v3809 = vpop.permute.xlu0 %3808
    %3810 = vrot.lane.b32.xlu0 %v3776, 10
    %v3811 = vpop.permute.xlu0 %3810
    %3812 = vrot.lane.b32.xlu0 %v3777, 10
    %v3813 = vpop.permute.xlu0 %3812
    %3814 = vrot.lane.b32.xlu0 %v3786, 10
    %v3815 = vpop.permute.xlu0 %3814
    %3816 = vrot.lane.b32.xlu0 %v3787, 10
    %v3817 = vpop.permute.xlu0 %3816
    %3818 = vrot.lane.b32.xlu0 %v3788, 10
    %v3819 = vpop.permute.xlu0 %3818
    %3820 = vrot.lane.b32.xlu0 %v3789, 10
    %v3821 = vpop.permute.xlu0 %3820
    %3838 = vst [vmem:[#allocation1] ss:$2 sm:$0xff] %v1537
    %s3839 = scalar_lea.vmem [#allocation1], 1
    %3840 = vst [vmem:[%s3839] ss:$2 sm:$0xff] %v1540
    %s3841 = scalar_lea.vmem [#allocation1], 16
    %3842 = vst [vmem:[%s3841] ss:$2 sm:$0xff] %v1544
    %s3843 = scalar_lea.vmem [#allocation1], 17
    %3844 = vst [vmem:[%s3843] ss:$2 sm:$0xff] %v1547
    %s3845 = scalar_lea.vmem [#allocation1], 32
    %3846 = vst [vmem:[%s3845] ss:$2 sm:$0xff] %v1551
    %s3847 = scalar_lea.vmem [#allocation1], 33
    %3848 = vst [vmem:[%s3847] ss:$2 sm:$0xff] %v1554
    %s3849 = scalar_lea.vmem [#allocation1], 48
    %3850 = vst [vmem:[%s3849] ss:$2 sm:$0xff] %v1558
    %s3851 = scalar_lea.vmem [#allocation1], 49
    %3852 = vst [vmem:[%s3851] ss:$2 sm:$0xff] %v1561
    %v3853 = vld.sshfl [vmem:[#allocation1] sm:$0xff pattern:$0x75316420]
    %v3854 = vld.sshfl [vmem:[#allocation1 + $0x10] sm:$0xff pattern:$0x75316420]
    %v3855 = vld.sshfl [vmem:[#allocation1 + $0x20] sm:$0xff pattern:$0x75316420]
    %v3856 = vld.sshfl [vmem:[#allocation1 + $0x30] sm:$0xff pattern:$0x75316420]
    %3857 = vst [vmem:[#allocation1] ss:$2 sm:$0xff] %v1565
    %3858 = vst [vmem:[%s3839] ss:$2 sm:$0xff] %v1568
    %3859 = vst [vmem:[%s3841] ss:$2 sm:$0xff] %v1656
    %3860 = vst [vmem:[%s3843] ss:$2 sm:$0xff] %v1659
    %3861 = vst [vmem:[%s3845] ss:$2 sm:$0xff] %v1698
    %3862 = vst [vmem:[%s3847] ss:$2 sm:$0xff] %v1701
    %3863 = vst [vmem:[%s3849] ss:$2 sm:$0xff] %v1740
    %3864 = vst [vmem:[%s3851] ss:$2 sm:$0xff] %v1743
    %v3865 = vld.sshfl [vmem:[#allocation1] sm:$0xff pattern:$0x75316420]
    %v3866 = vld.sshfl [vmem:[#allocation1 + $0x10] sm:$0xff pattern:$0x75316420]
    %v3867 = vld.sshfl [vmem:[#allocation1 + $0x20] sm:$0xff pattern:$0x75316420]
    %v3868 = vld.sshfl [vmem:[#allocation1 + $0x30] sm:$0xff pattern:$0x75316420]
    %3869 = vst [vmem:[#allocation1] ss:$2 sm:$0xff] %v1593
    %3870 = vst [vmem:[%s3839] ss:$2 sm:$0xff] %v1596
    %3871 = vst [vmem:[%s3841] ss:$2 sm:$0xff] %v1600
    %3872 = vst [vmem:[%s3843] ss:$2 sm:$0xff] %v1603
    %3873 = vst [vmem:[%s3845] ss:$2 sm:$0xff] %v1607
    %3874 = vst [vmem:[%s3847] ss:$2 sm:$0xff] %v1610
    %3875 = vst [vmem:[%s3849] ss:$2 sm:$0xff] %v1614
    %3876 = vst [vmem:[%s3851] ss:$2 sm:$0xff] %v1617
    %v3877 = vld.sshfl [vmem:[#allocation1] sm:$0xff pattern:$0x75316420]
    %v3878 = vld.sshfl [vmem:[#allocation1 + $0x10] sm:$0xff pattern:$0x75316420]
    %v3879 = vld.sshfl [vmem:[#allocation1 + $0x20] sm:$0xff pattern:$0x75316420]
    %v3880 = vld.sshfl [vmem:[#allocation1 + $0x30] sm:$0xff pattern:$0x75316420]
    %3881 = vst [vmem:[#allocation1] ss:$2 sm:$0xff] %v1621
    %3882 = vst [vmem:[%s3839] ss:$2 sm:$0xff] %v1624
    %3883 = vst [vmem:[%s3841] ss:$2 sm:$0xff] %v1663
    %3884 = vst [vmem:[%s3843] ss:$2 sm:$0xff] %v1666
    %3885 = vst [vmem:[%s3845] ss:$2 sm:$0xff] %v1705
    %3886 = vst [vmem:[%s3847] ss:$2 sm:$0xff] %v1708
    %3887 = vst [vmem:[%s3849] ss:$2 sm:$0xff] %v1747
    %3888 = vst [vmem:[%s3851] ss:$2 sm:$0xff] %v1750
    %v3889 = vld.sshfl [vmem:[#allocation1] sm:$0xff pattern:$0x75316420]
    %v3890 = vld.sshfl [vmem:[#allocation1 + $0x10] sm:$0xff pattern:$0x75316420]
    %v3891 = vld.sshfl [vmem:[#allocation1 + $0x20] sm:$0xff pattern:$0x75316420]
    %v3892 = vld.sshfl [vmem:[#allocation1 + $0x30] sm:$0xff pattern:$0x75316420]
    %3893 = vrot.lane.b32.xlu0 %v3853, 20
    %v3894 = vpop.permute.xlu0 %3893
    %3895 = vrot.lane.b32.xlu0 %v3854, 20
    %v3896 = vpop.permute.xlu0 %3895
    %3897 = vrot.lane.b32.xlu0 %v3855, 20
    %v3898 = vpop.permute.xlu0 %3897
    %3899 = vrot.lane.b32.xlu0 %v3856, 20
    %v3900 = vpop.permute.xlu0 %3899
    %3901 = vrot.lane.b32.xlu0 %v3865, 20
    %v3902 = vpop.permute.xlu0 %3901
    %3903 = vrot.lane.b32.xlu0 %v3866, 20
    %v3904 = vpop.permute.xlu0 %3903
    %3905 = vrot.lane.b32.xlu0 %v3867, 20
    %v3906 = vpop.permute.xlu0 %3905
    %3907 = vrot.lane.b32.xlu0 %v3868, 20
    %v3908 = vpop.permute.xlu0 %3907
    %3909 = vrot.lane.b32.xlu0 %v3877, 20
    %v3910 = vpop.permute.xlu0 %3909
    %3911 = vrot.lane.b32.xlu0 %v3878, 20
    %v3912 = vpop.permute.xlu0 %3911
    %3913 = vrot.lane.b32.xlu0 %v3879, 20
    %v3914 = vpop.permute.xlu0 %3913
    %3915 = vrot.lane.b32.xlu0 %v3880, 20
    %v3916 = vpop.permute.xlu0 %3915
    %3917 = vrot.lane.b32.xlu0 %v3889, 20
    %v3918 = vpop.permute.xlu0 %3917
    %3919 = vrot.lane.b32.xlu0 %v3890, 20
    %v3920 = vpop.permute.xlu0 %3919
    %3921 = vrot.lane.b32.xlu0 %v3891, 20
    %v3922 = vpop.permute.xlu0 %3921
    %3923 = vrot.lane.b32.xlu0 %v3892, 20
    %v3924 = vpop.permute.xlu0 %3923
    %3941 = vst [vmem:[#allocation1] ss:$2 sm:$0xff] %v1178
    %s3942 = scalar_lea.vmem [#allocation1], 1
    %3943 = vst [vmem:[%s3942] ss:$2 sm:$0xff] %v1250
    %s3944 = scalar_lea.vmem [#allocation1], 16
    %3945 = vst [vmem:[%s3944] ss:$2 sm:$0xff] %v1251
    %s3946 = scalar_lea.vmem [#allocation1], 17
    %3947 = vst [vmem:[%s3946] ss:$2 sm:$0xff] %v1180
    %s3948 = scalar_lea.vmem [#allocation1], 32
    %3949 = vst [vmem:[%s3948] ss:$2 sm:$0xff] %v1181
    %s3950 = scalar_lea.vmem [#allocation1], 33
    %3951 = vst [vmem:[%s3950] ss:$2 sm:$0xff] %v1253
    %s3952 = scalar_lea.vmem [#allocation1], 48
    %3953 = vst [vmem:[%s3952] ss:$2 sm:$0xff] %v1254
    %s3954 = scalar_lea.vmem [#allocation1], 49
    %3955 = vst [vmem:[%s3954] ss:$2 sm:$0xff] %v1183
    %v3956 = vld.sshfl [vmem:[#allocation1] sm:$0xff pattern:$0x75316420]
    %v3957 = vld.sshfl [vmem:[#allocation1 + $0x10] sm:$0xff pattern:$0x75316420]
    %v3958 = vld.sshfl [vmem:[#allocation1 + $0x20] sm:$0xff pattern:$0x75316420]
    %v3959 = vld.sshfl [vmem:[#allocation1 + $0x30] sm:$0xff pattern:$0x75316420]
    %3960 = vst [vmem:[#allocation1] ss:$2 sm:$0xff] %v1184
    %3961 = vst [vmem:[%s3942] ss:$2 sm:$0xff] %v1256
    %3962 = vst [vmem:[%s3944] ss:$2 sm:$0xff] %v1257
    %3963 = vst [vmem:[%s3946] ss:$2 sm:$0xff] %v1186
    %3964 = vst [vmem:[%s3948] ss:$2 sm:$0xff] %v1187
    %3965 = vst [vmem:[%s3950] ss:$2 sm:$0xff] %v1259
    %3966 = vst [vmem:[%s3952] ss:$2 sm:$0xff] %v1260
    %3967 = vst [vmem:[%s3954] ss:$2 sm:$0xff] %v1189
    %v3968 = vld.sshfl [vmem:[#allocation1] sm:$0xff pattern:$0x75316420]
    %v3969 = vld.sshfl [vmem:[#allocation1 + $0x10] sm:$0xff pattern:$0x75316420]
    %v3970 = vld.sshfl [vmem:[#allocation1 + $0x20] sm:$0xff pattern:$0x75316420]
    %v3971 = vld.sshfl [vmem:[#allocation1 + $0x30] sm:$0xff pattern:$0x75316420]
    %3972 = vst [vmem:[#allocation1] ss:$2 sm:$0xff] %v1196
    %3973 = vst [vmem:[%s3942] ss:$2 sm:$0xff] %v1268
    %3974 = vst [vmem:[%s3944] ss:$2 sm:$0xff] %v1269
    %3975 = vst [vmem:[%s3946] ss:$2 sm:$0xff] %v1198
    %3976 = vst [vmem:[%s3948] ss:$2 sm:$0xff] %v1199
    %3977 = vst [vmem:[%s3950] ss:$2 sm:$0xff] %v1271
    %3978 = vst [vmem:[%s3952] ss:$2 sm:$0xff] %v1272
    %3979 = vst [vmem:[%s3954] ss:$2 sm:$0xff] %v1201
    %v3980 = vld.sshfl [vmem:[#allocation1] sm:$0xff pattern:$0x75316420]
    %v3981 = vld.sshfl [vmem:[#allocation1 + $0x10] sm:$0xff pattern:$0x75316420]
    %v3982 = vld.sshfl [vmem:[#allocation1 + $0x20] sm:$0xff pattern:$0x75316420]
    %v3983 = vld.sshfl [vmem:[#allocation1 + $0x30] sm:$0xff pattern:$0x75316420]
    %3984 = vst [vmem:[#allocation1] ss:$2 sm:$0xff] %v1202
    %3985 = vst [vmem:[%s3942] ss:$2 sm:$0xff] %v1274
    %3986 = vst [vmem:[%s3944] ss:$2 sm:$0xff] %v1275
    %3987 = vst [vmem:[%s3946] ss:$2 sm:$0xff] %v1204
    %3988 = vst [vmem:[%s3948] ss:$2 sm:$0xff] %v1205
    %3989 = vst [vmem:[%s3950] ss:$2 sm:$0xff] %v1277
    %3990 = vst [vmem:[%s3952] ss:$2 sm:$0xff] %v1278
    %3991 = vst [vmem:[%s3954] ss:$2 sm:$0xff] %v1207
    %v3992 = vld.sshfl [vmem:[#allocation1] sm:$0xff pattern:$0x75316420]
    %v3993 = vld.sshfl [vmem:[#allocation1 + $0x10] sm:$0xff pattern:$0x75316420]
    %v3994 = vld.sshfl [vmem:[#allocation1 + $0x20] sm:$0xff pattern:$0x75316420]
    %v3995 = vld.sshfl [vmem:[#allocation1 + $0x30] sm:$0xff pattern:$0x75316420]
    %3996 = vrot.lane.b32.xlu0 %v3956, 30
    %v3997 = vpop.permute.xlu0 %3996
    %3998 = vrot.lane.b32.xlu0 %v3957, 30
    %v3999 = vpop.permute.xlu0 %3998
    %4000 = vrot.lane.b32.xlu0 %v3958, 30
    %v4001 = vpop.permute.xlu0 %4000
    %4002 = vrot.lane.b32.xlu0 %v3959, 30
    %v4003 = vpop.permute.xlu0 %4002
    %4004 = vrot.lane.b32.xlu0 %v3968, 30
    %v4005 = vpop.permute.xlu0 %4004
    %4006 = vrot.lane.b32.xlu0 %v3969, 30
    %v4007 = vpop.permute.xlu0 %4006
    %4008 = vrot.lane.b32.xlu0 %v3970, 30
    %v4009 = vpop.permute.xlu0 %4008
    %4010 = vrot.lane.b32.xlu0 %v3971, 30
    %v4011 = vpop.permute.xlu0 %4010
    %4012 = vrot.lane.b32.xlu0 %v3980, 30
    %v4013 = vpop.permute.xlu0 %4012
    %4014 = vrot.lane.b32.xlu0 %v3981, 30
    %v4015 = vpop.permute.xlu0 %4014
    %4016 = vrot.lane.b32.xlu0 %v3982, 30
    %v4017 = vpop.permute.xlu0 %4016
    %4018 = vrot.lane.b32.xlu0 %v3983, 30
    %v4019 = vpop.permute.xlu0 %4018
    %4020 = vrot.lane.b32.xlu0 %v3992, 30
    %v4021 = vpop.permute.xlu0 %4020
    %4022 = vrot.lane.b32.xlu0 %v3993, 30
    %v4023 = vpop.permute.xlu0 %4022
    %4024 = vrot.lane.b32.xlu0 %v3994, 30
    %v4025 = vpop.permute.xlu0 %4024
    %4026 = vrot.lane.b32.xlu0 %v3995, 30
    %v4027 = vpop.permute.xlu0 %4026
    %4044 = vst [vmem:[#allocation1] ss:$2 sm:$0xff] %v1179
    %s4045 = scalar_lea.vmem [#allocation1], 1
    %4046 = vst [vmem:[%s4045] ss:$2 sm:$0xff] %v1251
    %s4047 = scalar_lea.vmem [#allocation1], 16
    %4048 = vst [vmem:[%s4047] ss:$2 sm:$0xff] %v1252
    %s4049 = scalar_lea.vmem [#allocation1], 17
    %4050 = vst [vmem:[%s4049] ss:$2 sm:$0xff] %v1181
    %s4051 = scalar_lea.vmem [#allocation1], 32
    %4052 = vst [vmem:[%s4051] ss:$2 sm:$0xff] %v1182
    %s4053 = scalar_lea.vmem [#allocation1], 33
    %4054 = vst [vmem:[%s4053] ss:$2 sm:$0xff] %v1254
    %s4055 = scalar_lea.vmem [#allocation1], 48
    %4056 = vst [vmem:[%s4055] ss:$2 sm:$0xff] %v1255
    %s4057 = scalar_lea.vmem [#allocation1], 49
    %4058 = vst [vmem:[%s4057] ss:$2 sm:$0xff] %v1184
    %v4059 = vld.sshfl [vmem:[#allocation1] sm:$0xff pattern:$0x75316420]
    %v4060 = vld.sshfl [vmem:[#allocation1 + $0x10] sm:$0xff pattern:$0x75316420]
    %v4061 = vld.sshfl [vmem:[#allocation1 + $0x20] sm:$0xff pattern:$0x75316420]
    %v4062 = vld.sshfl [vmem:[#allocation1 + $0x30] sm:$0xff pattern:$0x75316420]
    %4063 = vst [vmem:[#allocation1] ss:$2 sm:$0xff] %v1185
    %4064 = vst [vmem:[%s4045] ss:$2 sm:$0xff] %v1257
    %4065 = vst [vmem:[%s4047] ss:$2 sm:$0xff] %v1258
    %4066 = vst [vmem:[%s4049] ss:$2 sm:$0xff] %v1187
    %4067 = vst [vmem:[%s4051] ss:$2 sm:$0xff] %v1188
    %4068 = vst [vmem:[%s4053] ss:$2 sm:$0xff] %v1260
    %4069 = vst [vmem:[%s4055] ss:$2 sm:$0xff] %v1261
    %4070 = vst [vmem:[%s4057] ss:$2 sm:$0xff] %v1190
    %v4071 = vld.sshfl [vmem:[#allocation1] sm:$0xff pattern:$0x75316420]
    %v4072 = vld.sshfl [vmem:[#allocation1 + $0x10] sm:$0xff pattern:$0x75316420]
    %v4073 = vld.sshfl [vmem:[#allocation1 + $0x20] sm:$0xff pattern:$0x75316420]
    %v4074 = vld.sshfl [vmem:[#allocation1 + $0x30] sm:$0xff pattern:$0x75316420]
    %4075 = vst [vmem:[#allocation1] ss:$2 sm:$0xff] %v1197
    %4076 = vst [vmem:[%s4045] ss:$2 sm:$0xff] %v1269
    %4077 = vst [vmem:[%s4047] ss:$2 sm:$0xff] %v1270
    %4078 = vst [vmem:[%s4049] ss:$2 sm:$0xff] %v1199
    %4079 = vst [vmem:[%s4051] ss:$2 sm:$0xff] %v1200
    %4080 = vst [vmem:[%s4053] ss:$2 sm:$0xff] %v1272
    %4081 = vst [vmem:[%s4055] ss:$2 sm:$0xff] %v1273
    %4082 = vst [vmem:[%s4057] ss:$2 sm:$0xff] %v1202
    %v4083 = vld.sshfl [vmem:[#allocation1] sm:$0xff pattern:$0x75316420]
    %v4084 = vld.sshfl [vmem:[#allocation1 + $0x10] sm:$0xff pattern:$0x75316420]
    %v4085 = vld.sshfl [vmem:[#allocation1 + $0x20] sm:$0xff pattern:$0x75316420]
    %v4086 = vld.sshfl [vmem:[#allocation1 + $0x30] sm:$0xff pattern:$0x75316420]
    %4087 = vst [vmem:[#allocation1] ss:$2 sm:$0xff] %v1203
    %4088 = vst [vmem:[%s4045] ss:$2 sm:$0xff] %v1275
    %4089 = vst [vmem:[%s4047] ss:$2 sm:$0xff] %v1276
    %4090 = vst [vmem:[%s4049] ss:$2 sm:$0xff] %v1205
    %4091 = vst [vmem:[%s4051] ss:$2 sm:$0xff] %v1206
    %4092 = vst [vmem:[%s4053] ss:$2 sm:$0xff] %v1278
    %4093 = vst [vmem:[%s4055] ss:$2 sm:$0xff] %v1279
    %4094 = vst [vmem:[%s4057] ss:$2 sm:$0xff] %v1208
    %v4095 = vld.sshfl [vmem:[#allocation1] sm:$0xff pattern:$0x75316420]
    %v4096 = vld.sshfl [vmem:[#allocation1 + $0x10] sm:$0xff pattern:$0x75316420]
    %v4097 = vld.sshfl [vmem:[#allocation1 + $0x20] sm:$0xff pattern:$0x75316420]
    %v4098 = vld.sshfl [vmem:[#allocation1 + $0x30] sm:$0xff pattern:$0x75316420]
    %4099 = vrot.lane.b32.xlu0 %v4059, 40
    %v4100 = vpop.permute.xlu0 %4099
    %4101 = vrot.lane.b32.xlu0 %v4060, 40
    %v4102 = vpop.permute.xlu0 %4101
    %4103 = vrot.lane.b32.xlu0 %v4061, 40
    %v4104 = vpop.permute.xlu0 %4103
    %4105 = vrot.lane.b32.xlu0 %v4062, 40
    %v4106 = vpop.permute.xlu0 %4105
    %4107 = vrot.lane.b32.xlu0 %v4071, 40
    %v4108 = vpop.permute.xlu0 %4107
    %4109 = vrot.lane.b32.xlu0 %v4072, 40
    %v4110 = vpop.permute.xlu0 %4109
    %4111 = vrot.lane.b32.xlu0 %v4073, 40
    %v4112 = vpop.permute.xlu0 %4111
    %4113 = vrot.lane.b32.xlu0 %v4074, 40
    %v4114 = vpop.permute.xlu0 %4113
    %4115 = vrot.lane.b32.xlu0 %v4083, 40
    %v4116 = vpop.permute.xlu0 %4115
    %4117 = vrot.lane.b32.xlu0 %v4084, 40
    %v4118 = vpop.permute.xlu0 %4117
    %4119 = vrot.lane.b32.xlu0 %v4085, 40
    %v4120 = vpop.permute.xlu0 %4119
    %4121 = vrot.lane.b32.xlu0 %v4086, 40
    %v4122 = vpop.permute.xlu0 %4121
    %4123 = vrot.lane.b32.xlu0 %v4095, 40
    %v4124 = vpop.permute.xlu0 %4123
    %4125 = vrot.lane.b32.xlu0 %v4096, 40
    %v4126 = vpop.permute.xlu0 %4125
    %4127 = vrot.lane.b32.xlu0 %v4097, 40
    %v4128 = vpop.permute.xlu0 %4127
    %4129 = vrot.lane.b32.xlu0 %v4098, 40
    %v4130 = vpop.permute.xlu0 %4129
    %4147 = vst [vmem:[#allocation1] ss:$2 sm:$0xff] %v1315
    %s4148 = scalar_lea.vmem [#allocation1], 1
    %4149 = vst [vmem:[%s4148] ss:$2 sm:$0xff] %v1318
    %s4150 = scalar_lea.vmem [#allocation1], 16
    %4151 = vst [vmem:[%s4150] ss:$2 sm:$0xff] %v1322
    %s4152 = scalar_lea.vmem [#allocation1], 17
    %4153 = vst [vmem:[%s4152] ss:$2 sm:$0xff] %v1325
    %s4154 = scalar_lea.vmem [#allocation1], 32
    %4155 = vst [vmem:[%s4154] ss:$2 sm:$0xff] %v1329
    %s4156 = scalar_lea.vmem [#allocation1], 33
    %4157 = vst [vmem:[%s4156] ss:$2 sm:$0xff] %v1332
    %s4158 = scalar_lea.vmem [#allocation1], 48
    %4159 = vst [vmem:[%s4158] ss:$2 sm:$0xff] %v1336
    %s4160 = scalar_lea.vmem [#allocation1], 49
    %4161 = vst [vmem:[%s4160] ss:$2 sm:$0xff] %v1339
    %v4162 = vld.sshfl [vmem:[#allocation1] sm:$0xff pattern:$0x75316420]
    %v4163 = vld.sshfl [vmem:[#allocation1 + $0x10] sm:$0xff pattern:$0x75316420]
    %v4164 = vld.sshfl [vmem:[#allocation1 + $0x20] sm:$0xff pattern:$0x75316420]
    %v4165 = vld.sshfl [vmem:[#allocation1 + $0x30] sm:$0xff pattern:$0x75316420]
    %4166 = vst [vmem:[#allocation1] ss:$2 sm:$0xff] %v1628
    %4167 = vst [vmem:[%s4148] ss:$2 sm:$0xff] %v1631
    %4168 = vst [vmem:[%s4150] ss:$2 sm:$0xff] %v1670
    %4169 = vst [vmem:[%s4152] ss:$2 sm:$0xff] %v1673
    %4170 = vst [vmem:[%s4154] ss:$2 sm:$0xff] %v1712
    %4171 = vst [vmem:[%s4156] ss:$2 sm:$0xff] %v1715
    %4172 = vst [vmem:[%s4158] ss:$2 sm:$0xff] %v1754
    %4173 = vst [vmem:[%s4160] ss:$2 sm:$0xff] %v1757
    %v4174 = vld.sshfl [vmem:[#allocation1] sm:$0xff pattern:$0x75316420]
    %v4175 = vld.sshfl [vmem:[#allocation1 + $0x10] sm:$0xff pattern:$0x75316420]
    %v4176 = vld.sshfl [vmem:[#allocation1 + $0x20] sm:$0xff pattern:$0x75316420]
    %v4177 = vld.sshfl [vmem:[#allocation1 + $0x30] sm:$0xff pattern:$0x75316420]
    %4178 = vst [vmem:[#allocation1] ss:$2 sm:$0xff] %v1371
    %4179 = vst [vmem:[%s4148] ss:$2 sm:$0xff] %v1374
    %4180 = vst [vmem:[%s4150] ss:$2 sm:$0xff] %v1378
    %4181 = vst [vmem:[%s4152] ss:$2 sm:$0xff] %v1381
    %4182 = vst [vmem:[%s4154] ss:$2 sm:$0xff] %v1385
    %4183 = vst [vmem:[%s4156] ss:$2 sm:$0xff] %v1388
    %4184 = vst [vmem:[%s4158] ss:$2 sm:$0xff] %v1392
    %4185 = vst [vmem:[%s4160] ss:$2 sm:$0xff] %v1395
    %v4186 = vld.sshfl [vmem:[#allocation1] sm:$0xff pattern:$0x75316420]
    %v4187 = vld.sshfl [vmem:[#allocation1 + $0x10] sm:$0xff pattern:$0x75316420]
    %v4188 = vld.sshfl [vmem:[#allocation1 + $0x20] sm:$0xff pattern:$0x75316420]
    %v4189 = vld.sshfl [vmem:[#allocation1 + $0x30] sm:$0xff pattern:$0x75316420]
    %4190 = vst [vmem:[#allocation1] ss:$2 sm:$0xff] %v1635
    %4191 = vst [vmem:[%s4148] ss:$2 sm:$0xff] %v1638
    %4192 = vst [vmem:[%s4150] ss:$2 sm:$0xff] %v1677
    %4193 = vst [vmem:[%s4152] ss:$2 sm:$0xff] %v1680
    %4194 = vst [vmem:[%s4154] ss:$2 sm:$0xff] %v1719
    %4195 = vst [vmem:[%s4156] ss:$2 sm:$0xff] %v1722
    %4196 = vst [vmem:[%s4158] ss:$2 sm:$0xff] %v1761
    %4197 = vst [vmem:[%s4160] ss:$2 sm:$0xff] %v1764
    %v4198 = vld.sshfl [vmem:[#allocation1] sm:$0xff pattern:$0x75316420]
    %v4199 = vld.sshfl [vmem:[#allocation1 + $0x10] sm:$0xff pattern:$0x75316420]
    %v4200 = vld.sshfl [vmem:[#allocation1 + $0x20] sm:$0xff pattern:$0x75316420]
    %v4201 = vld.sshfl [vmem:[#allocation1 + $0x30] sm:$0xff pattern:$0x75316420]
    %4202 = vrot.lane.b32.xlu0 %v4162, 50
    %v4203 = vpop.permute.xlu0 %4202
    %4204 = vrot.lane.b32.xlu0 %v4163, 50
    %v4205 = vpop.permute.xlu0 %4204
    %4206 = vrot.lane.b32.xlu0 %v4164, 50
    %v4207 = vpop.permute.xlu0 %4206
    %4208 = vrot.lane.b32.xlu0 %v4165, 50
    %v4209 = vpop.permute.xlu0 %4208
    %4210 = vrot.lane.b32.xlu0 %v4174, 50
    %v4211 = vpop.permute.xlu0 %4210
    %4212 = vrot.lane.b32.xlu0 %v4175, 50
    %v4213 = vpop.permute.xlu0 %4212
    %4214 = vrot.lane.b32.xlu0 %v4176, 50
    %v4215 = vpop.permute.xlu0 %4214
    %4216 = vrot.lane.b32.xlu0 %v4177, 50
    %v4217 = vpop.permute.xlu0 %4216
    %4218 = vrot.lane.b32.xlu0 %v4186, 50
    %v4219 = vpop.permute.xlu0 %4218
    %4220 = vrot.lane.b32.xlu0 %v4187, 50
    %v4221 = vpop.permute.xlu0 %4220
    %4222 = vrot.lane.b32.xlu0 %v4188, 50
    %v4223 = vpop.permute.xlu0 %4222
    %4224 = vrot.lane.b32.xlu0 %v4189, 50
    %v4225 = vpop.permute.xlu0 %4224
    %4226 = vrot.lane.b32.xlu0 %v4198, 50
    %v4227 = vpop.permute.xlu0 %4226
    %4228 = vrot.lane.b32.xlu0 %v4199, 50
    %v4229 = vpop.permute.xlu0 %4228
    %4230 = vrot.lane.b32.xlu0 %v4200, 50
    %v4231 = vpop.permute.xlu0 %4230
    %4232 = vrot.lane.b32.xlu0 %v4201, 50
    %v4233 = vpop.permute.xlu0 %4232
    %4250 = vst [vmem:[#allocation1] ss:$2 sm:$0xff] %v1430
    %s4251 = scalar_lea.vmem [#allocation1], 1
    %4252 = vst [vmem:[%s4251] ss:$2 sm:$0xff] %v1433
    %s4253 = scalar_lea.vmem [#allocation1], 16
    %4254 = vst [vmem:[%s4253] ss:$2 sm:$0xff] %v1437
    %s4255 = scalar_lea.vmem [#allocation1], 17
    %4256 = vst [vmem:[%s4255] ss:$2 sm:$0xff] %v1440
    %s4257 = scalar_lea.vmem [#allocation1], 32
    %4258 = vst [vmem:[%s4257] ss:$2 sm:$0xff] %v1444
    %s4259 = scalar_lea.vmem [#allocation1], 33
    %4260 = vst [vmem:[%s4259] ss:$2 sm:$0xff] %v1447
    %s4261 = scalar_lea.vmem [#allocation1], 48
    %4262 = vst [vmem:[%s4261] ss:$2 sm:$0xff] %v1451
    %s4263 = scalar_lea.vmem [#allocation1], 49
    %4264 = vst [vmem:[%s4263] ss:$2 sm:$0xff] %v1454
    %v4265 = vld.sshfl [vmem:[#allocation1] sm:$0xff pattern:$0x75316420]
    %v4266 = vld.sshfl [vmem:[#allocation1 + $0x10] sm:$0xff pattern:$0x75316420]
    %v4267 = vld.sshfl [vmem:[#allocation1 + $0x20] sm:$0xff pattern:$0x75316420]
    %v4268 = vld.sshfl [vmem:[#allocation1 + $0x30] sm:$0xff pattern:$0x75316420]
    %4269 = vst [vmem:[#allocation1] ss:$2 sm:$0xff] %v1642
    %4270 = vst [vmem:[%s4251] ss:$2 sm:$0xff] %v1645
    %4271 = vst [vmem:[%s4253] ss:$2 sm:$0xff] %v1684
    %4272 = vst [vmem:[%s4255] ss:$2 sm:$0xff] %v1687
    %4273 = vst [vmem:[%s4257] ss:$2 sm:$0xff] %v1726
    %4274 = vst [vmem:[%s4259] ss:$2 sm:$0xff] %v1729
    %4275 = vst [vmem:[%s4261] ss:$2 sm:$0xff] %v1768
    %4276 = vst [vmem:[%s4263] ss:$2 sm:$0xff] %v1771
    %v4277 = vld.sshfl [vmem:[#allocation1] sm:$0xff pattern:$0x75316420]
    %v4278 = vld.sshfl [vmem:[#allocation1 + $0x10] sm:$0xff pattern:$0x75316420]
    %v4279 = vld.sshfl [vmem:[#allocation1 + $0x20] sm:$0xff pattern:$0x75316420]
    %v4280 = vld.sshfl [vmem:[#allocation1 + $0x30] sm:$0xff pattern:$0x75316420]
    %4281 = vst [vmem:[#allocation1] ss:$2 sm:$0xff] %v1486
    %4282 = vst [vmem:[%s4251] ss:$2 sm:$0xff] %v1489
    %4283 = vst [vmem:[%s4253] ss:$2 sm:$0xff] %v1493
    %4284 = vst [vmem:[%s4255] ss:$2 sm:$0xff] %v1496
    %4285 = vst [vmem:[%s4257] ss:$2 sm:$0xff] %v1500
    %4286 = vst [vmem:[%s4259] ss:$2 sm:$0xff] %v1503
    %4287 = vst [vmem:[%s4261] ss:$2 sm:$0xff] %v1507
    %4288 = vst [vmem:[%s4263] ss:$2 sm:$0xff] %v1510
    %v4289 = vld.sshfl [vmem:[#allocation1] sm:$0xff pattern:$0x75316420]
    %v4290 = vld.sshfl [vmem:[#allocation1 + $0x10] sm:$0xff pattern:$0x75316420]
    %v4291 = vld.sshfl [vmem:[#allocation1 + $0x20] sm:$0xff pattern:$0x75316420]
    %v4292 = vld.sshfl [vmem:[#allocation1 + $0x30] sm:$0xff pattern:$0x75316420]
    %4293 = vst [vmem:[#allocation1] ss:$2 sm:$0xff] %v1649
    %4294 = vst [vmem:[%s4251] ss:$2 sm:$0xff] %v1652
    %4295 = vst [vmem:[%s4253] ss:$2 sm:$0xff] %v1691
    %4296 = vst [vmem:[%s4255] ss:$2 sm:$0xff] %v1694
    %4297 = vst [vmem:[%s4257] ss:$2 sm:$0xff] %v1733
    %4298 = vst [vmem:[%s4259] ss:$2 sm:$0xff] %v1736
    %4299 = vst [vmem:[%s4261] ss:$2 sm:$0xff] %v1775
    %4300 = vst [vmem:[%s4263] ss:$2 sm:$0xff] %v1778
    %v4301 = vld.sshfl [vmem:[#allocation1] sm:$0xff pattern:$0x75316420]
    %v4302 = vld.sshfl [vmem:[#allocation1 + $0x10] sm:$0xff pattern:$0x75316420]
    %v4303 = vld.sshfl [vmem:[#allocation1 + $0x20] sm:$0xff pattern:$0x75316420]
    %v4304 = vld.sshfl [vmem:[#allocation1 + $0x30] sm:$0xff pattern:$0x75316420]
    %4305 = vrot.lane.b32.xlu0 %v4265, 60
    %v4306 = vpop.permute.xlu0 %4305
    %4307 = vrot.lane.b32.xlu0 %v4266, 60
    %v4308 = vpop.permute.xlu0 %4307
    %4309 = vrot.lane.b32.xlu0 %v4267, 60
    %v4310 = vpop.permute.xlu0 %4309
    %4311 = vrot.lane.b32.xlu0 %v4268, 60
    %v4312 = vpop.permute.xlu0 %4311
    %4313 = vrot.lane.b32.xlu0 %v4277, 60
    %v4314 = vpop.permute.xlu0 %4313
    %4315 = vrot.lane.b32.xlu0 %v4278, 60
    %v4316 = vpop.permute.xlu0 %4315
    %4317 = vrot.lane.b32.xlu0 %v4279, 60
    %v4318 = vpop.permute.xlu0 %4317
    %4319 = vrot.lane.b32.xlu0 %v4280, 60
    %v4320 = vpop.permute.xlu0 %4319
    %4321 = vrot.lane.b32.xlu0 %v4289, 60
    %v4322 = vpop.permute.xlu0 %4321
    %4323 = vrot.lane.b32.xlu0 %v4290, 60
    %v4324 = vpop.permute.xlu0 %4323
    %4325 = vrot.lane.b32.xlu0 %v4291, 60
    %v4326 = vpop.permute.xlu0 %4325
    %4327 = vrot.lane.b32.xlu0 %v4292, 60
    %v4328 = vpop.permute.xlu0 %4327
    %4329 = vrot.lane.b32.xlu0 %v4301, 60
    %v4330 = vpop.permute.xlu0 %4329
    %4331 = vrot.lane.b32.xlu0 %v4302, 60
    %v4332 = vpop.permute.xlu0 %4331
    %4333 = vrot.lane.b32.xlu0 %v4303, 60
    %v4334 = vpop.permute.xlu0 %4333
    %4335 = vrot.lane.b32.xlu0 %v4304, 60
    %v4336 = vpop.permute.xlu0 %4335
    %4353 = vst [vmem:[#allocation1] ss:$2 sm:$0xff] %v1544
    %s4354 = scalar_lea.vmem [#allocation1], 1
    %4355 = vst [vmem:[%s4354] ss:$2 sm:$0xff] %v1547
    %s4356 = scalar_lea.vmem [#allocation1], 16
    %4357 = vst [vmem:[%s4356] ss:$2 sm:$0xff] %v1551
    %s4358 = scalar_lea.vmem [#allocation1], 17
    %4359 = vst [vmem:[%s4358] ss:$2 sm:$0xff] %v1554
    %s4360 = scalar_lea.vmem [#allocation1], 32
    %4361 = vst [vmem:[%s4360] ss:$2 sm:$0xff] %v1558
    %s4362 = scalar_lea.vmem [#allocation1], 33
    %4363 = vst [vmem:[%s4362] ss:$2 sm:$0xff] %v1561
    %s4364 = scalar_lea.vmem [#allocation1], 48
    %4365 = vst [vmem:[%s4364] ss:$2 sm:$0xff] %v1565
    %s4366 = scalar_lea.vmem [#allocation1], 49
    %4367 = vst [vmem:[%s4366] ss:$2 sm:$0xff] %v1568
    %v4368 = vld.sshfl [vmem:[#allocation1] sm:$0xff pattern:$0x75316420]
    %v4369 = vld.sshfl [vmem:[#allocation1 + $0x10] sm:$0xff pattern:$0x75316420]
    %v4370 = vld.sshfl [vmem:[#allocation1 + $0x20] sm:$0xff pattern:$0x75316420]
    %v4371 = vld.sshfl [vmem:[#allocation1 + $0x30] sm:$0xff pattern:$0x75316420]
    %4372 = vst [vmem:[#allocation1] ss:$2 sm:$0xff] %v1656
    %4373 = vst [vmem:[%s4354] ss:$2 sm:$0xff] %v1659
    %4374 = vst [vmem:[%s4356] ss:$2 sm:$0xff] %v1698
    %4375 = vst [vmem:[%s4358] ss:$2 sm:$0xff] %v1701
    %4376 = vst [vmem:[%s4360] ss:$2 sm:$0xff] %v1740
    %4377 = vst [vmem:[%s4362] ss:$2 sm:$0xff] %v1743
    %4378 = vst [vmem:[%s4364] ss:$2 sm:$0xff] %v1782
    %4379 = vst [vmem:[%s4366] ss:$2 sm:$0xff] %v1785
    %v4380 = vld.sshfl [vmem:[#allocation1] sm:$0xff pattern:$0x75316420]
    %v4381 = vld.sshfl [vmem:[#allocation1 + $0x10] sm:$0xff pattern:$0x75316420]
    %v4382 = vld.sshfl [vmem:[#allocation1 + $0x20] sm:$0xff pattern:$0x75316420]
    %v4383 = vld.sshfl [vmem:[#allocation1 + $0x30] sm:$0xff pattern:$0x75316420]
    %4384 = vst [vmem:[#allocation1] ss:$2 sm:$0xff] %v1600
    %4385 = vst [vmem:[%s4354] ss:$2 sm:$0xff] %v1603
    %4386 = vst [vmem:[%s4356] ss:$2 sm:$0xff] %v1607
    %4387 = vst [vmem:[%s4358] ss:$2 sm:$0xff] %v1610
    %4388 = vst [vmem:[%s4360] ss:$2 sm:$0xff] %v1614
    %4389 = vst [vmem:[%s4362] ss:$2 sm:$0xff] %v1617
    %4390 = vst [vmem:[%s4364] ss:$2 sm:$0xff] %v1621
    %4391 = vst [vmem:[%s4366] ss:$2 sm:$0xff] %v1624
    %v4392 = vld.sshfl [vmem:[#allocation1] sm:$0xff pattern:$0x75316420]
    %v4393 = vld.sshfl [vmem:[#allocation1 + $0x10] sm:$0xff pattern:$0x75316420]
    %v4394 = vld.sshfl [vmem:[#allocation1 + $0x20] sm:$0xff pattern:$0x75316420]
    %v4395 = vld.sshfl [vmem:[#allocation1 + $0x30] sm:$0xff pattern:$0x75316420]
    %4396 = vst [vmem:[#allocation1] ss:$2 sm:$0xff] %v1663
    %4397 = vst [vmem:[%s4354] ss:$2 sm:$0xff] %v1666
    %4398 = vst [vmem:[%s4356] ss:$2 sm:$0xff] %v1705
    %4399 = vst [vmem:[%s4358] ss:$2 sm:$0xff] %v1708
    %4400 = vst [vmem:[%s4360] ss:$2 sm:$0xff] %v1747
    %4401 = vst [vmem:[%s4362] ss:$2 sm:$0xff] %v1750
    %4402 = vst [vmem:[%s4364] ss:$2 sm:$0xff] %v1789
    %4403 = vst [vmem:[%s4366] ss:$2 sm:$0xff] %v1792
    %v4404 = vld.sshfl [vmem:[#allocation1] sm:$0xff pattern:$0x75316420]
    %v4405 = vld.sshfl [vmem:[#allocation1 + $0x10] sm:$0xff pattern:$0x75316420]
    %v4406 = vld.sshfl [vmem:[#allocation1 + $0x20] sm:$0xff pattern:$0x75316420]
    %v4407 = vld.sshfl [vmem:[#allocation1 + $0x30] sm:$0xff pattern:$0x75316420]
    %4408 = vrot.lane.b32.xlu0 %v4368, 70
    %v4409 = vpop.permute.xlu0 %4408
    %4410 = vrot.lane.b32.xlu0 %v4369, 70
    %v4411 = vpop.permute.xlu0 %4410
    %4412 = vrot.lane.b32.xlu0 %v4370, 70
    %v4413 = vpop.permute.xlu0 %4412
    %4414 = vrot.lane.b32.xlu0 %v4371, 70
    %v4415 = vpop.permute.xlu0 %4414
    %4416 = vrot.lane.b32.xlu0 %v4380, 70
    %v4417 = vpop.permute.xlu0 %4416
    %4418 = vrot.lane.b32.xlu0 %v4381, 70
    %v4419 = vpop.permute.xlu0 %4418
    %4420 = vrot.lane.b32.xlu0 %v4382, 70
    %v4421 = vpop.permute.xlu0 %4420
    %4422 = vrot.lane.b32.xlu0 %v4383, 70
    %v4423 = vpop.permute.xlu0 %4422
    %4424 = vrot.lane.b32.xlu0 %v4392, 70
    %v4425 = vpop.permute.xlu0 %4424
    %4426 = vrot.lane.b32.xlu0 %v4393, 70
    %v4427 = vpop.permute.xlu0 %4426
    %4428 = vrot.lane.b32.xlu0 %v4394, 70
    %v4429 = vpop.permute.xlu0 %4428
    %4430 = vrot.lane.b32.xlu0 %v4395, 70
    %v4431 = vpop.permute.xlu0 %4430
    %4432 = vrot.lane.b32.xlu0 %v4404, 70
    %v4433 = vpop.permute.xlu0 %4432
    %4434 = vrot.lane.b32.xlu0 %v4405, 70
    %v4435 = vpop.permute.xlu0 %4434
    %4436 = vrot.lane.b32.xlu0 %v4406, 70
    %v4437 = vpop.permute.xlu0 %4436
    %4438 = vrot.lane.b32.xlu0 %v4407, 70
    %v4439 = vpop.permute.xlu0 %4438
    %4456 = vst [vmem:[#allocation1] ss:$2 sm:$0xff] %v1251
    %s4457 = scalar_lea.vmem [#allocation1], 1
    %4458 = vst [vmem:[%s4457] ss:$2 sm:$0xff] %v1180
    %s4459 = scalar_lea.vmem [#allocation1], 16
    %4460 = vst [vmem:[%s4459] ss:$2 sm:$0xff] %v1181
    %s4461 = scalar_lea.vmem [#allocation1], 17
    %4462 = vst [vmem:[%s4461] ss:$2 sm:$0xff] %v1253
    %s4463 = scalar_lea.vmem [#allocation1], 32
    %4464 = vst [vmem:[%s4463] ss:$2 sm:$0xff] %v1254
    %s4465 = scalar_lea.vmem [#allocation1], 33
    %4466 = vst [vmem:[%s4465] ss:$2 sm:$0xff] %v1183
    %s4467 = scalar_lea.vmem [#allocation1], 48
    %4468 = vst [vmem:[%s4467] ss:$2 sm:$0xff] %v1184
    %s4469 = scalar_lea.vmem [#allocation1], 49
    %4470 = vst [vmem:[%s4469] ss:$2 sm:$0xff] %v1256
    %v4471 = vld.sshfl [vmem:[#allocation1] sm:$0xff pattern:$0x75316420]
    %v4472 = vld.sshfl [vmem:[#allocation1 + $0x10] sm:$0xff pattern:$0x75316420]
    %v4473 = vld.sshfl [vmem:[#allocation1 + $0x20] sm:$0xff pattern:$0x75316420]
    %v4474 = vld.sshfl [vmem:[#allocation1 + $0x30] sm:$0xff pattern:$0x75316420]
    %4475 = vst [vmem:[#allocation1] ss:$2 sm:$0xff] %v1257
    %4476 = vst [vmem:[%s4457] ss:$2 sm:$0xff] %v1186
    %4477 = vst [vmem:[%s4459] ss:$2 sm:$0xff] %v1187
    %4478 = vst [vmem:[%s4461] ss:$2 sm:$0xff] %v1259
    %4479 = vst [vmem:[%s4463] ss:$2 sm:$0xff] %v1260
    %4480 = vst [vmem:[%s4465] ss:$2 sm:$0xff] %v1189
    %4481 = vst [vmem:[%s4467] ss:$2 sm:$0xff] %v1190
    %4482 = vst [vmem:[%s4469] ss:$2 sm:$0xff] %v1262
    %v4483 = vld.sshfl [vmem:[#allocation1] sm:$0xff pattern:$0x75316420]
    %v4484 = vld.sshfl [vmem:[#allocation1 + $0x10] sm:$0xff pattern:$0x75316420]
    %v4485 = vld.sshfl [vmem:[#allocation1 + $0x20] sm:$0xff pattern:$0x75316420]
    %v4486 = vld.sshfl [vmem:[#allocation1 + $0x30] sm:$0xff pattern:$0x75316420]
    %4487 = vst [vmem:[#allocation1] ss:$2 sm:$0xff] %v1269
    %4488 = vst [vmem:[%s4457] ss:$2 sm:$0xff] %v1198
    %4489 = vst [vmem:[%s4459] ss:$2 sm:$0xff] %v1199
    %4490 = vst [vmem:[%s4461] ss:$2 sm:$0xff] %v1271
    %4491 = vst [vmem:[%s4463] ss:$2 sm:$0xff] %v1272
    %4492 = vst [vmem:[%s4465] ss:$2 sm:$0xff] %v1201
    %4493 = vst [vmem:[%s4467] ss:$2 sm:$0xff] %v1202
    %4494 = vst [vmem:[%s4469] ss:$2 sm:$0xff] %v1274
    %v4495 = vld.sshfl [vmem:[#allocation1] sm:$0xff pattern:$0x75316420]
    %v4496 = vld.sshfl [vmem:[#allocation1 + $0x10] sm:$0xff pattern:$0x75316420]
    %v4497 = vld.sshfl [vmem:[#allocation1 + $0x20] sm:$0xff pattern:$0x75316420]
    %v4498 = vld.sshfl [vmem:[#allocation1 + $0x30] sm:$0xff pattern:$0x75316420]
    %4499 = vst [vmem:[#allocation1] ss:$2 sm:$0xff] %v1275
    %4500 = vst [vmem:[%s4457] ss:$2 sm:$0xff] %v1204
    %4501 = vst [vmem:[%s4459] ss:$2 sm:$0xff] %v1205
    %4502 = vst [vmem:[%s4461] ss:$2 sm:$0xff] %v1277
    %4503 = vst [vmem:[%s4463] ss:$2 sm:$0xff] %v1278
    %4504 = vst [vmem:[%s4465] ss:$2 sm:$0xff] %v1207
    %4505 = vst [vmem:[%s4467] ss:$2 sm:$0xff] %v1208
    %4506 = vst [vmem:[%s4469] ss:$2 sm:$0xff] %v1280
    %v4507 = vld.sshfl [vmem:[#allocation1] sm:$0xff pattern:$0x75316420]
    %v4508 = vld.sshfl [vmem:[#allocation1 + $0x10] sm:$0xff pattern:$0x75316420]
    %v4509 = vld.sshfl [vmem:[#allocation1 + $0x20] sm:$0xff pattern:$0x75316420]
    %v4510 = vld.sshfl [vmem:[#allocation1 + $0x30] sm:$0xff pattern:$0x75316420]
    %4511 = vrot.lane.b32.xlu0 %v4471, 80
    %v4512 = vpop.permute.xlu0 %4511
    %4513 = vrot.lane.b32.xlu0 %v4472, 80
    %v4514 = vpop.permute.xlu0 %4513
    %4515 = vrot.lane.b32.xlu0 %v4473, 80
    %v4516 = vpop.permute.xlu0 %4515
    %4517 = vrot.lane.b32.xlu0 %v4474, 80
    %v4518 = vpop.permute.xlu0 %4517
    %4519 = vrot.lane.b32.xlu0 %v4483, 80
    %v4520 = vpop.permute.xlu0 %4519
    %4521 = vrot.lane.b32.xlu0 %v4484, 80
    %v4522 = vpop.permute.xlu0 %4521
    %4523 = vrot.lane.b32.xlu0 %v4485, 80
    %v4524 = vpop.permute.xlu0 %4523
    %4525 = vrot.lane.b32.xlu0 %v4486, 80
    %v4526 = vpop.permute.xlu0 %4525
    %4527 = vrot.lane.b32.xlu0 %v4495, 80
    %v4528 = vpop.permute.xlu0 %4527
    %4529 = vrot.lane.b32.xlu0 %v4496, 80
    %v4530 = vpop.permute.xlu0 %4529
    %4531 = vrot.lane.b32.xlu0 %v4497, 80
    %v4532 = vpop.permute.xlu0 %4531
    %4533 = vrot.lane.b32.xlu0 %v4498, 80
    %v4534 = vpop.permute.xlu0 %4533
    %4535 = vrot.lane.b32.xlu0 %v4507, 80
    %v4536 = vpop.permute.xlu0 %4535
    %4537 = vrot.lane.b32.xlu0 %v4508, 80
    %v4538 = vpop.permute.xlu0 %4537
    %4539 = vrot.lane.b32.xlu0 %v4509, 80
    %v4540 = vpop.permute.xlu0 %4539
    %4541 = vrot.lane.b32.xlu0 %v4510, 80
    %v4542 = vpop.permute.xlu0 %4541
    %v4559 = vsel %vm3409, %v3679, %v3791
    %v4560 = vsel %vm3409, %v3680, %v3793
    %v4561 = vsel %vm3409, %v3681, %v3795
    %v4562 = vsel %vm3409, %v3682, %v3797
    %v4563 = vsel %vm3409, %v3691, %v3799
    %v4564 = vsel %vm3409, %v3692, %v3801
    %v4565 = vsel %vm3409, %v3693, %v3803
    %v4566 = vsel %vm3409, %v3694, %v3805
    %v4567 = vsel %vm3409, %v3703, %v3807
    %v4568 = vsel %vm3409, %v3704, %v3809
    %v4569 = vsel %vm3409, %v3705, %v3811
    %v4570 = vsel %vm3409, %v3706, %v3813
    %v4571 = vsel %vm3409, %v3715, %v3815
    %v4572 = vsel %vm3409, %v3716, %v3817
    %v4573 = vsel %vm3409, %v3717, %v3819
    %v4574 = vsel %vm3409, %v3718, %v3821
    %v4575 = vsel %vm3426, %v4559, %v3894
    %v4576 = vsel %vm3426, %v4560, %v3896
    %v4577 = vsel %vm3426, %v4561, %v3898
    %v4578 = vsel %vm3426, %v4562, %v3900
    %v4579 = vsel %vm3426, %v4563, %v3902
    %v4580 = vsel %vm3426, %v4564, %v3904
    %v4581 = vsel %vm3426, %v4565, %v3906
    %v4582 = vsel %vm3426, %v4566, %v3908
    %v4583 = vsel %vm3426, %v4567, %v3910
    %v4584 = vsel %vm3426, %v4568, %v3912
    %v4585 = vsel %vm3426, %v4569, %v3914
    %v4586 = vsel %vm3426, %v4570, %v3916
    %v4587 = vsel %vm3426, %v4571, %v3918
    %v4588 = vsel %vm3426, %v4572, %v3920
    %v4589 = vsel %vm3426, %v4573, %v3922
    %v4590 = vsel %vm3426, %v4574, %v3924
    %v4591 = vsel %vm3443, %v4575, %v3997
    %v4592 = vsel %vm3443, %v4576, %v3999
    %v4593 = vsel %vm3443, %v4577, %v4001
    %v4594 = vsel %vm3443, %v4578, %v4003
    %v4595 = vsel %vm3443, %v4579, %v4005
    %v4596 = vsel %vm3443, %v4580, %v4007
    %v4597 = vsel %vm3443, %v4581, %v4009
    %v4598 = vsel %vm3443, %v4582, %v4011
    %v4599 = vsel %vm3443, %v4583, %v4013
    %v4600 = vsel %vm3443, %v4584, %v4015
    %v4601 = vsel %vm3443, %v4585, %v4017
    %v4602 = vsel %vm3443, %v4586, %v4019
    %v4603 = vsel %vm3443, %v4587, %v4021
    %v4604 = vsel %vm3443, %v4588, %v4023
    %v4605 = vsel %vm3443, %v4589, %v4025
    %v4606 = vsel %vm3443, %v4590, %v4027
    %v4607 = vsel %vm3460, %v4591, %v4100
    %v4608 = vsel %vm3460, %v4592, %v4102
    %v4609 = vsel %vm3460, %v4593, %v4104
    %v4610 = vsel %vm3460, %v4594, %v4106
    %v4611 = vsel %vm3460, %v4595, %v4108
    %v4612 = vsel %vm3460, %v4596, %v4110
    %v4613 = vsel %vm3460, %v4597, %v4112
    %v4614 = vsel %vm3460, %v4598, %v4114
    %v4615 = vsel %vm3460, %v4599, %v4116
    %v4616 = vsel %vm3460, %v4600, %v4118
    %v4617 = vsel %vm3460, %v4601, %v4120
    %v4618 = vsel %vm3460, %v4602, %v4122
    %v4619 = vsel %vm3460, %v4603, %v4124
    %v4620 = vsel %vm3460, %v4604, %v4126
    %v4621 = vsel %vm3460, %v4605, %v4128
    %v4622 = vsel %vm3460, %v4606, %v4130
    %v4623 = vsel %vm3477, %v4607, %v4203
    %v4624 = vsel %vm3477, %v4608, %v4205
    %v4625 = vsel %vm3477, %v4609, %v4207
    %v4626 = vsel %vm3477, %v4610, %v4209
    %v4627 = vsel %vm3477, %v4611, %v4211
    %v4628 = vsel %vm3477, %v4612, %v4213
    %v4629 = vsel %vm3477, %v4613, %v4215
    %v4630 = vsel %vm3477, %v4614, %v4217
    %v4631 = vsel %vm3477, %v4615, %v4219
    %v4632 = vsel %vm3477, %v4616, %v4221
    %v4633 = vsel %vm3477, %v4617, %v4223
    %v4634 = vsel %vm3477, %v4618, %v4225
    %v4635 = vsel %vm3477, %v4619, %v4227
    %v4636 = vsel %vm3477, %v4620, %v4229
    %v4637 = vsel %vm3477, %v4621, %v4231
    %v4638 = vsel %vm3477, %v4622, %v4233
    %v4639 = vsel %vm3494, %v4623, %v4306
    %v4640 = vsel %vm3494, %v4624, %v4308
    %v4641 = vsel %vm3494, %v4625, %v4310
    %v4642 = vsel %vm3494, %v4626, %v4312
    %v4643 = vsel %vm3494, %v4627, %v4314
    %v4644 = vsel %vm3494, %v4628, %v4316
    %v4645 = vsel %vm3494, %v4629, %v4318
    %v4646 = vsel %vm3494, %v4630, %v4320
    %v4647 = vsel %vm3494, %v4631, %v4322
    %v4648 = vsel %vm3494, %v4632, %v4324
    %v4649 = vsel %vm3494, %v4633, %v4326
    %v4650 = vsel %vm3494, %v4634, %v4328
    %v4651 = vsel %vm3494, %v4635, %v4330
    %v4652 = vsel %vm3494, %v4636, %v4332
    %v4653 = vsel %vm3494, %v4637, %v4334
    %v4654 = vsel %vm3494, %v4638, %v4336
    %v4655 = vsel %vm3511, %v4639, %v4409
    %v4656 = vsel %vm3511, %v4640, %v4411
    %v4657 = vsel %vm3511, %v4641, %v4413
    %v4658 = vsel %vm3511, %v4642, %v4415
    %v4659 = vsel %vm3511, %v4643, %v4417
    %v4660 = vsel %vm3511, %v4644, %v4419
    %v4661 = vsel %vm3511, %v4645, %v4421
    %v4662 = vsel %vm3511, %v4646, %v4423
    %v4663 = vsel %vm3511, %v4647, %v4425
    %v4664 = vsel %vm3511, %v4648, %v4427
    %v4665 = vsel %vm3511, %v4649, %v4429
    %v4666 = vsel %vm3511, %v4650, %v4431
    %v4667 = vsel %vm3511, %v4651, %v4433
    %v4668 = vsel %vm3511, %v4652, %v4435
    %v4669 = vsel %vm3511, %v4653, %v4437
    %v4670 = vsel %vm3511, %v4654, %v4439
    %v4671 = vsel %vm3528, %v4655, %v4512
    %v4672 = vsel %vm3528, %v4656, %v4514
    %v4673 = vsel %vm3528, %v4657, %v4516
    %v4674 = vsel %vm3528, %v4658, %v4518
    %v4675 = vsel %vm3528, %v4659, %v4520
    %v4676 = vsel %vm3528, %v4660, %v4522
    %v4677 = vsel %vm3528, %v4661, %v4524
    %v4678 = vsel %vm3528, %v4662, %v4526
    %v4679 = vsel %vm3528, %v4663, %v4528
    %v4680 = vsel %vm3528, %v4664, %v4530
    %v4681 = vsel %vm3528, %v4665, %v4532
    %v4682 = vsel %vm3528, %v4666, %v4534
    %v4683 = vsel %vm3528, %v4667, %v4536
    %v4684 = vsel %vm3528, %v4668, %v4538
    %v4685 = vsel %vm3528, %v4669, %v4540
    %v4686 = vsel %vm3528, %v4670, %v4542
    %4703 = vrot.lane.b32.xlu0 %v4671, 32
    %v4704 = vpop.permute.xlu0 %4703
    %4705 = vrot.lane.b32.xlu0 %v4672, 32
    %v4706 = vpop.permute.xlu0 %4705
    %4707 = vrot.lane.b32.xlu0 %v4673, 32
    %v4708 = vpop.permute.xlu0 %4707
    %4709 = vrot.lane.b32.xlu0 %v4674, 32
    %v4710 = vpop.permute.xlu0 %4709
    %4711 = vrot.lane.b32.xlu0 %v4675, 32
    %v4712 = vpop.permute.xlu0 %4711
    %4713 = vrot.lane.b32.xlu0 %v4676, 32
    %v4714 = vpop.permute.xlu0 %4713
    %4715 = vrot.lane.b32.xlu0 %v4677, 32
    %v4716 = vpop.permute.xlu0 %4715
    %4717 = vrot.lane.b32.xlu0 %v4678, 32
    %v4718 = vpop.permute.xlu0 %4717
    %4719 = vrot.lane.b32.xlu0 %v4679, 32
    %v4720 = vpop.permute.xlu0 %4719
    %4721 = vrot.lane.b32.xlu0 %v4680, 32
    %v4722 = vpop.permute.xlu0 %4721
    %4723 = vrot.lane.b32.xlu0 %v4681, 32
    %v4724 = vpop.permute.xlu0 %4723
    %4725 = vrot.lane.b32.xlu0 %v4682, 32
    %v4726 = vpop.permute.xlu0 %4725
    %4727 = vrot.lane.b32.xlu0 %v4683, 32
    %v4728 = vpop.permute.xlu0 %4727
    %4729 = vrot.lane.b32.xlu0 %v4684, 32
    %v4730 = vpop.permute.xlu0 %4729
    %4731 = vrot.lane.b32.xlu0 %v4685, 32
    %v4732 = vpop.permute.xlu0 %4731
    %4733 = vrot.lane.b32.xlu0 %v4686, 32
    %v4734 = vpop.permute.xlu0 %4733
    %vm4751 = vcmask 261120
    %v4752 = vsel %vm4751, %v3648, %v4704
    %v4753 = vsel %vm4751, %v3649, %v4706
    %v4754 = vsel %vm4751, %v3650, %v4708
    %v4755 = vsel %vm4751, %v3651, %v4710
    %v4756 = vsel %vm4751, %v3652, %v4712
    %v4757 = vsel %vm4751, %v3653, %v4714
    %v4758 = vsel %vm4751, %v3654, %v4716
    %v4759 = vsel %vm4751, %v3655, %v4718
    %v4760 = vsel %vm4751, %v3656, %v4720
    %v4761 = vsel %vm4751, %v3657, %v4722
    %v4762 = vsel %vm4751, %v3658, %v4724
    %v4763 = vsel %vm4751, %v3659, %v4726
    %v4764 = vsel %vm4751, %v3660, %v4728
    %v4765 = vsel %vm4751, %v3661, %v4730
    %v4766 = vsel %vm4751, %v3662, %v4732
    %v4767 = vsel %vm4751, %v3663, %v4734
    %v4768 = vld [vmem:[%s3] sm:$0xff]
    %v4769 = vld [vmem:[%s3 + $0x8] sm:$0xff]
    %v4770 = vld [vmem:[%s3 + $0x10] sm:$0xff]
    %v4771 = vld [vmem:[%s3 + $0x18] sm:$0xff]
    %v4772 = vld [vmem:[%s3 + $0x20] sm:$0xff]
    %v4773 = vld [vmem:[%s3 + $0x28] sm:$0xff]
    %v4774 = vld [vmem:[%s3 + $0x30] sm:$0xff]
    %v4775 = vld [vmem:[%s3 + $0x38] sm:$0xff]
    %v4776 = vld [vmem:[%s3 + $0x40] sm:$0xff]
    %v4777 = vld [vmem:[%s3 + $0x48] sm:$0xff]
    %v4778 = vld [vmem:[%s3 + $0x50] sm:$0xff]
    %v4779 = vld [vmem:[%s3 + $0x58] sm:$0xff]
    %v4780 = vld [vmem:[%s3 + $0x60] sm:$0xff]
    %v4781 = vld [vmem:[%s3 + $0x68] sm:$0xff]
    %v4782 = vld [vmem:[%s3 + $0x70] sm:$0xff]
    %v4783 = vld [vmem:[%s3 + $0x78] sm:$0xff]
    %v4784 = vld [vmem:[%s3 + $0x80] sm:$0xff]
    %v4785 = vld [vmem:[%s3 + $0x88] sm:$0xff]
    %v4786 = vld [vmem:[%s3 + $0x90] sm:$0xff]
    %v4787 = vld [vmem:[%s3 + $0x98] sm:$0xff]
    %v4788 = vld [vmem:[%s3 + $0xa0] sm:$0xff]
    %v4789 = vld [vmem:[%s3 + $0xa8] sm:$0xff]
    %v4790 = vld [vmem:[%s3 + $0xb0] sm:$0xff]
    %v4791 = vld [vmem:[%s3 + $0xb8] sm:$0xff]
    %v4792 = vld [vmem:[%s3 + $0xc0] sm:$0xff]
    %v4793 = vld [vmem:[%s3 + $0xc8] sm:$0xff]
    %v4794 = vld [vmem:[%s3 + $0xd0] sm:$0xff]
    %v4795 = vld [vmem:[%s3 + $0xd8] sm:$0xff]
    %v4796 = vld [vmem:[%s3 + $0xe0] sm:$0xff]
    %v4797 = vld [vmem:[%s3 + $0xe8] sm:$0xff]
    %v4798 = vld [vmem:[%s3 + $0xf0] sm:$0xff]
    %v4799 = vld [vmem:[%s3 + $0xf8] sm:$0x3]
    %v4800 = vld [vmem:[%s4] sm:$0x1]
    %v4802 = vperm.slane %v4800, 0
    %vm4804 = vcmask 998400
    %v4806 = vsel %vm4804, %v4752, 0
    %v4809 = vsel %vm4804, %v4753, 0
    %v4812 = vsel %vm4804, %v4754, 0
    %v4815 = vsel %vm4804, %v4755, 0
    %v4818 = vsel %vm4804, %v4756, 0
    %v4821 = vsel %vm4804, %v4757, 0
    %v4824 = vsel %vm4804, %v4758, 0
    %v4827 = vsel %vm4804, %v4759, 0
    %v4830 = vsel %vm4804, %v4760, 0
    %v4833 = vsel %vm4804, %v4761, 0
    %v4836 = vsel %vm4804, %v4762, 0
    %v4839 = vsel %vm4804, %v4763, 0
    %v4842 = vsel %vm4804, %v4764, 0
    %v4845 = vsel %vm4804, %v4765, 0
    %v4848 = vsel %vm4804, %v4766, 0
    %v4851 = vsel %vm4804, %v4767, 0
    %v4854 = vsel %vm1396, %v4799, 0
    %4856 = vmatpush.msra.mxu0 %v4783
    %4857 = vmatpush.msra.mxu0 %v4782
    %4858 = vmatpush.msra.mxu0 %v4781
    %4859 = vmatpush.msra.mxu0 %v4780
    %4860 = vmatpush.msra.mxu0 %v4779
    %4861 = vmatpush.msra.mxu0 %v4778
    %4862 = vmatpush.msra.mxu0 %v4777
    %4863 = vmatpush.msra.mxu0 %v4776
    %4864 = vmatpush.msra.mxu0 %v4775
    %4865 = vmatpush.msra.mxu0 %v4774
    %4866 = vmatpush.msra.mxu0 %v4773
    %4867 = vmatpush.msra.mxu0 %v4772
    %4868 = vmatpush.msra.mxu0 %v4771
    %4869 = vmatpush.msra.mxu0 %v4770
    %4870 = vmatpush.msra.mxu0 %v4769
    %4871 = vmatpush.msra.mxu0 %v4768
    %4872 = vmatmul.f32.gmra.mxu0 %v3597
    %v4873 = vpop.f32.mrf.mxu0
    %v4874 = vadd.f32 %v4802, %v4873
    %4875 = vmatmul.f32.gmra.mxu0 %v3598
    %v4876 = vpop.f32.mrf.mxu0
    %v4877 = vadd.f32 %v4802, %v4876
    %4878 = vmatmul.f32.gmra.mxu0 %v3599
    %v4879 = vpop.f32.mrf.mxu0
    %v4880 = vadd.f32 %v4802, %v4879
    %4881 = vmatmul.f32.gmra.mxu0 %v3600
    %v4882 = vpop.f32.mrf.mxu0
    %v4883 = vadd.f32 %v4802, %v4882
    %4884 = vmatmul.f32.gmra.mxu0 %v3601
    %v4885 = vpop.f32.mrf.mxu0
    %v4886 = vadd.f32 %v4802, %v4885
    %4887 = vmatmul.f32.gmra.mxu0 %v3602
    %v4888 = vpop.f32.mrf.mxu0
    %v4889 = vadd.f32 %v4802, %v4888
    %4890 = vmatmul.f32.gmra.mxu0 %v3603
    %v4891 = vpop.f32.mrf.mxu0
    %v4892 = vadd.f32 %v4802, %v4891
    %4893 = vmatmul.f32.gmra.mxu0 %v3604
    %v4894 = vpop.f32.mrf.mxu0
    %v4895 = vadd.f32 %v4802, %v4894
    %4896 = vmatmul.f32.gmra.mxu0 %v3605
    %v4897 = vpop.f32.mrf.mxu0
    %v4898 = vadd.f32 %v4802, %v4897
    %4899 = vmatmul.f32.gmra.mxu0 %v3606
    %v4900 = vpop.f32.mrf.mxu0
    %v4901 = vadd.f32 %v4802, %v4900
    %4902 = vmatmul.f32.gmra.mxu0 %v3607
    %v4903 = vpop.f32.mrf.mxu0
    %v4904 = vadd.f32 %v4802, %v4903
    %4905 = vmatmul.f32.gmra.mxu0 %v3608
    %v4906 = vpop.f32.mrf.mxu0
    %v4907 = vadd.f32 %v4802, %v4906
    %4908 = vmatmul.f32.gmra.mxu0 %v3609
    %v4909 = vpop.f32.mrf.mxu0
    %v4910 = vadd.f32 %v4802, %v4909
    %4911 = vmatmul.f32.gmra.mxu0 %v3610
    %v4912 = vpop.f32.mrf.mxu0
    %v4913 = vadd.f32 %v4802, %v4912
    %4914 = vmatmul.f32.gmra.mxu0 %v3611
    %v4915 = vpop.f32.mrf.mxu0
    %v4916 = vadd.f32 %v4802, %v4915
    %4917 = vmatmul.f32.gmra.mxu0 %v3612
    %v4918 = vpop.f32.mrf.mxu0
    %v4919 = vadd.f32 %v4802, %v4918
    %4920 = vdwg.mxu0
    %4921 = vmatpush.msra.mxu0 %v4854
    %4922 = vmatpush.msra.mxu0 %v4798
    %4923 = vmatpush.msra.mxu0 %v4797
    %4924 = vmatpush.msra.mxu0 %v4796
    %4925 = vmatpush.msra.mxu0 %v4795
    %4926 = vmatpush.msra.mxu0 %v4794
    %4927 = vmatpush.msra.mxu0 %v4793
    %4928 = vmatpush.msra.mxu0 %v4792
    %4929 = vmatpush.msra.mxu0 %v4791
    %4930 = vmatpush.msra.mxu0 %v4790
    %4931 = vmatpush.msra.mxu0 %v4789
    %4932 = vmatpush.msra.mxu0 %v4788
    %4933 = vmatpush.msra.mxu0 %v4787
    %4934 = vmatpush.msra.mxu0 %v4786
    %4935 = vmatpush.msra.mxu0 %v4785
    %4936 = vmatpush.msra.mxu0 %v4784
    %4937 = vmatmul.f32.gmra.mxu0 %v4806
    %v4938 = vpop.f32.mrf.mxu0
    %v4939 = vadd.f32 %v4874, %v4938
    %4940 = vmatmul.f32.gmra.mxu0 %v4809
    %v4941 = vpop.f32.mrf.mxu0
    %v4942 = vadd.f32 %v4877, %v4941
    %4943 = vmatmul.f32.gmra.mxu0 %v4812
    %v4944 = vpop.f32.mrf.mxu0
    %v4945 = vadd.f32 %v4880, %v4944
    %4946 = vmatmul.f32.gmra.mxu0 %v4815
    %v4947 = vpop.f32.mrf.mxu0
    %v4948 = vadd.f32 %v4883, %v4947
    %4949 = vmatmul.f32.gmra.mxu0 %v4818
    %v4950 = vpop.f32.mrf.mxu0
    %v4951 = vadd.f32 %v4886, %v4950
    %4952 = vmatmul.f32.gmra.mxu0 %v4821
    %v4953 = vpop.f32.mrf.mxu0
    %v4954 = vadd.f32 %v4889, %v4953
    %4955 = vmatmul.f32.gmra.mxu0 %v4824
    %v4956 = vpop.f32.mrf.mxu0
    %v4957 = vadd.f32 %v4892, %v4956
    %4958 = vmatmul.f32.gmra.mxu0 %v4827
    %v4959 = vpop.f32.mrf.mxu0
    %v4960 = vadd.f32 %v4895, %v4959
    %4961 = vmatmul.f32.gmra.mxu0 %v4830
    %v4962 = vpop.f32.mrf.mxu0
    %v4963 = vadd.f32 %v4898, %v4962
    %4964 = vmatmul.f32.gmra.mxu0 %v4833
    %v4965 = vpop.f32.mrf.mxu0
    %v4966 = vadd.f32 %v4901, %v4965
    %4967 = vmatmul.f32.gmra.mxu0 %v4836
    %v4968 = vpop.f32.mrf.mxu0
    %v4969 = vadd.f32 %v4904, %v4968
    %4970 = vmatmul.f32.gmra.mxu0 %v4839
    %v4971 = vpop.f32.mrf.mxu0
    %v4972 = vadd.f32 %v4907, %v4971
    %4973 = vmatmul.f32.gmra.mxu0 %v4842
    %v4974 = vpop.f32.mrf.mxu0
    %v4975 = vadd.f32 %v4910, %v4974
    %4976 = vmatmul.f32.gmra.mxu0 %v4845
    %v4977 = vpop.f32.mrf.mxu0
    %v4978 = vadd.f32 %v4913, %v4977
    %4979 = vmatmul.f32.gmra.mxu0 %v4848
    %v4980 = vpop.f32.mrf.mxu0
    %v4981 = vadd.f32 %v4916, %v4980
    %4982 = vmatmul.f32.gmra.mxu0 %v4851
    %v4983 = vpop.f32.mrf.mxu0
    %v4984 = vadd.f32 %v4919, %v4983
    %4985 = vdwg.mxu0
    %v4986 = vmax.f32 %v4939, %v4942
    %v4987 = vmax.f32 %v4945, %v4948
    %v4988 = vmax.f32 %v4951, %v4954
    %v4989 = vmax.f32 %v4957, %v4960
    %v4990 = vmax.f32 %v4963, %v4966
    %v4991 = vmax.f32 %v4969, %v4972
    %v4992 = vmax.f32 %v4975, %v4978
    %v4993 = vmax.f32 %v4981, %v4984
    %v5002 = vrot.slane %v4986, 2
    %v5003 = vrot.slane %v4986, 4
    %v5004 = vrot.slane %v4986, 6
    %v5005 = vrot.slane %v4987, 2
    %v5006 = vrot.slane %v4987, 4
    %v5007 = vrot.slane %v4987, 6
    %v5008 = vrot.slane %v4988, 2
    %v5009 = vrot.slane %v4988, 4
    %v5010 = vrot.slane %v4988, 6
    %v5011 = vrot.slane %v4989, 2
    %v5012 = vrot.slane %v4989, 4
    %v5013 = vrot.slane %v4989, 6
    %v5014 = vrot.slane %v4990, 2
    %v5015 = vrot.slane %v4990, 4
    %v5016 = vrot.slane %v4990, 6
    %v5017 = vrot.slane %v4991, 2
    %v5018 = vrot.slane %v4991, 4
    %v5019 = vrot.slane %v4991, 6
    %v5020 = vrot.slane %v4992, 2
    %v5021 = vrot.slane %v4992, 4
    %v5022 = vrot.slane %v4992, 6
    %v5023 = vrot.slane %v4993, 2
    %v5024 = vrot.slane %v4993, 4
    %v5025 = vrot.slane %v4993, 6
    %v5050 = vrot.slane %v4986, 7
    %v5051 = vrot.slane %v5050, 2
    %v5052 = vrot.slane %v5002, 7
    %v5053 = vrot.slane %v5052, 2
    %v5054 = vrot.slane %v5003, 7
    %v5055 = vrot.slane %v5054, 2
    %v5056 = vrot.slane %v5004, 7
    %v5057 = vrot.slane %v5056, 2
    %v5058 = vrot.slane %v4987, 7
    %v5059 = vrot.slane %v5058, 2
    %v5060 = vrot.slane %v5005, 7
    %v5061 = vrot.slane %v5060, 2
    %v5062 = vrot.slane %v5006, 7
    %v5063 = vrot.slane %v5062, 2
    %v5064 = vrot.slane %v5007, 7
    %v5065 = vrot.slane %v5064, 2
    %v5066 = vrot.slane %v4988, 7
    %v5067 = vrot.slane %v5066, 2
    %v5068 = vrot.slane %v5008, 7
    %v5069 = vrot.slane %v5068, 2
    %v5070 = vrot.slane %v5009, 7
    %v5071 = vrot.slane %v5070, 2
    %v5072 = vrot.slane %v5010, 7
    %v5073 = vrot.slane %v5072, 2
    %v5074 = vrot.slane %v4989, 7
    %v5075 = vrot.slane %v5074, 2
    %v5076 = vrot.slane %v5011, 7
    %v5077 = vrot.slane %v5076, 2
    %v5078 = vrot.slane %v5012, 7
    %v5079 = vrot.slane %v5078, 2
    %v5080 = vrot.slane %v5013, 7
    %v5081 = vrot.slane %v5080, 2
    %v5082 = vrot.slane %v4990, 7
    %v5083 = vrot.slane %v5082, 2
    %v5084 = vrot.slane %v5014, 7
    %v5085 = vrot.slane %v5084, 2
    %v5086 = vrot.slane %v5015, 7
    %v5087 = vrot.slane %v5086, 2
    %v5088 = vrot.slane %v5016, 7
    %v5089 = vrot.slane %v5088, 2
    %v5090 = vrot.slane %v4991, 7
    %v5091 = vrot.slane %v5090, 2
    %v5092 = vrot.slane %v5017, 7
    %v5093 = vrot.slane %v5092, 2
    %v5094 = vrot.slane %v5018, 7
    %v5095 = vrot.slane %v5094, 2
    %v5096 = vrot.slane %v5019, 7
    %v5097 = vrot.slane %v5096, 2
    %v5098 = vrot.slane %v4992, 7
    %v5099 = vrot.slane %v5098, 2
    %v5100 = vrot.slane %v5020, 7
    %v5101 = vrot.slane %v5100, 2
    %v5102 = vrot.slane %v5021, 7
    %v5103 = vrot.slane %v5102, 2
    %v5104 = vrot.slane %v5022, 7
    %v5105 = vrot.slane %v5104, 2
    %v5106 = vrot.slane %v4993, 7
    %v5107 = vrot.slane %v5106, 2
    %v5108 = vrot.slane %v5023, 7
    %v5109 = vrot.slane %v5108, 2
    %v5110 = vrot.slane %v5024, 7
    %v5111 = vrot.slane %v5110, 2
    %v5112 = vrot.slane %v5025, 7
    %v5113 = vrot.slane %v5112, 2
    %v5146 = vmax.f32 %v4986, %v5051
    %v5147 = vmax.f32 %v5002, %v5053
    %v5148 = vmax.f32 %v5003, %v5055
    %v5149 = vmax.f32 %v5004, %v5057
    %v5150 = vmax.f32 %v4987, %v5059
    %v5151 = vmax.f32 %v5005, %v5061
    %v5152 = vmax.f32 %v5006, %v5063
    %v5153 = vmax.f32 %v5007, %v5065
    %v5154 = vmax.f32 %v4988, %v5067
    %v5155 = vmax.f32 %v5008, %v5069
    %v5156 = vmax.f32 %v5009, %v5071
    %v5157 = vmax.f32 %v5010, %v5073
    %v5158 = vmax.f32 %v4989, %v5075
    %v5159 = vmax.f32 %v5011, %v5077
    %v5160 = vmax.f32 %v5012, %v5079
    %v5161 = vmax.f32 %v5013, %v5081
    %v5162 = vmax.f32 %v4990, %v5083
    %v5163 = vmax.f32 %v5014, %v5085
    %v5164 = vmax.f32 %v5015, %v5087
    %v5165 = vmax.f32 %v5016, %v5089
    %v5166 = vmax.f32 %v4991, %v5091
    %v5167 = vmax.f32 %v5017, %v5093
    %v5168 = vmax.f32 %v5018, %v5095
    %v5169 = vmax.f32 %v5019, %v5097
    %v5170 = vmax.f32 %v4992, %v5099
    %v5171 = vmax.f32 %v5020, %v5101
    %v5172 = vmax.f32 %v5021, %v5103
    %v5173 = vmax.f32 %v5022, %v5105
    %v5174 = vmax.f32 %v4993, %v5107
    %v5175 = vmax.f32 %v5023, %v5109
    %v5176 = vmax.f32 %v5024, %v5111
    %v5177 = vmax.f32 %v5025, %v5113
    %v5178 = vmax.f32 %v5146, 0.0
    %v5179 = vmax.f32 %v5147, 0.0
    %v5180 = vmax.f32 %v5148, 0.0
    %v5181 = vmax.f32 %v5149, 0.0
    %v5182 = vmax.f32 %v5150, 0.0
    %v5183 = vmax.f32 %v5151, 0.0
    %v5184 = vmax.f32 %v5152, 0.0
    %v5185 = vmax.f32 %v5153, 0.0
    %v5186 = vmax.f32 %v5154, 0.0
    %v5187 = vmax.f32 %v5155, 0.0
    %v5188 = vmax.f32 %v5156, 0.0
    %v5189 = vmax.f32 %v5157, 0.0
    %v5190 = vmax.f32 %v5158, 0.0
    %v5191 = vmax.f32 %v5159, 0.0
    %v5192 = vmax.f32 %v5160, 0.0
    %v5193 = vmax.f32 %v5161, 0.0
    %v5194 = vmax.f32 %v5162, 0.0
    %v5195 = vmax.f32 %v5163, 0.0
    %v5196 = vmax.f32 %v5164, 0.0
    %v5197 = vmax.f32 %v5165, 0.0
    %v5198 = vmax.f32 %v5166, 0.0
    %v5199 = vmax.f32 %v5167, 0.0
    %v5200 = vmax.f32 %v5168, 0.0
    %v5201 = vmax.f32 %v5169, 0.0
    %v5202 = vmax.f32 %v5170, 0.0
    %v5203 = vmax.f32 %v5171, 0.0
    %v5204 = vmax.f32 %v5172, 0.0
    %v5205 = vmax.f32 %v5173, 0.0
    %v5206 = vmax.f32 %v5174, 0.0
    %v5207 = vmax.f32 %v5175, 0.0
    %v5208 = vmax.f32 %v5176, 0.0
    %v5209 = vmax.f32 %v5177, 0.0
    %v5212 = vperm.slane %v5178, 0
    %v5213 = vperm.slane %v5194, 0
    %vm5214 = vcmask 1041409
    %v5215 = vsel %vm5214, %v5213, %v5212
    %v5219 = vperm.slane %v5179, 0
    %v5220 = vperm.slane %v5195, 0
    %v5221 = vsel %vm5214, %v5220, %v5219
    %5222 = vrot.lane.b32.xlu0 %v5221, 20
    %v5223 = vpop.permute.xlu0 %5222
    %v5227 = vperm.slane %v5180, 0
    %v5228 = vperm.slane %v5196, 0
    %v5229 = vsel %vm5214, %v5228, %v5227
    %5230 = vrot.lane.b32.xlu0 %v5229, 40
    %v5231 = vpop.permute.xlu0 %5230
    %v5235 = vperm.slane %v5181, 0
    %v5236 = vperm.slane %v5197, 0
    %v5237 = vsel %vm5214, %v5236, %v5235
    %5238 = vrot.lane.b32.xlu0 %v5237, 60
    %v5239 = vpop.permute.xlu0 %5238
    %v5243 = vperm.slane %v5182, 0
    %v5244 = vperm.slane %v5198, 0
    %v5245 = vsel %vm5214, %v5244, %v5243
    %5246 = vrot.lane.b32.xlu0 %v5245, 80
    %v5247 = vpop.permute.xlu0 %5246
    %v5251 = vperm.slane %v5183, 0
    %v5252 = vperm.slane %v5199, 0
    %v5253 = vsel %vm5214, %v5252, %v5251
    %5254 = vrot.lane.b32.xlu0 %v5253, 100
    %v5255 = vpop.permute.xlu0 %5254
    %v5259 = vperm.slane %v5184, 0
    %v5260 = vperm.slane %v5200, 0
    %v5261 = vsel %vm5214, %v5260, %v5259
    %5262 = vrot.lane.b32.xlu0 %v5261, 120
    %v5263 = vpop.permute.xlu0 %5262
    %v5267 = vperm.slane %v5185, 0
    %v5268 = vperm.slane %v5201, 0
    %v5269 = vsel %vm5214, %v5268, %v5267
    %5270 = vrot.lane.b32.xlu0 %v5269, 12
    %v5271 = vpop.permute.xlu0 %5270
    %v5275 = vperm.slane %v5186, 0
    %v5276 = vperm.slane %v5202, 0
    %v5277 = vsel %vm5214, %v5276, %v5275
    %5278 = vrot.lane.b32.xlu0 %v5277, 32
    %v5279 = vpop.permute.xlu0 %5278
    %v5283 = vperm.slane %v5187, 0
    %v5284 = vperm.slane %v5203, 0
    %v5285 = vsel %vm5214, %v5284, %v5283
    %5286 = vrot.lane.b32.xlu0 %v5285, 52
    %v5287 = vpop.permute.xlu0 %5286
    %v5291 = vperm.slane %v5188, 0
    %v5292 = vperm.slane %v5204, 0
    %v5293 = vsel %vm5214, %v5292, %v5291
    %5294 = vrot.lane.b32.xlu0 %v5293, 72
    %v5295 = vpop.permute.xlu0 %5294
    %v5299 = vperm.slane %v5189, 0
    %v5300 = vperm.slane %v5205, 0
    %v5301 = vsel %vm5214, %v5300, %v5299
    %5302 = vrot.lane.b32.xlu0 %v5301, 92
    %v5303 = vpop.permute.xlu0 %5302
    %v5307 = vperm.slane %v5190, 0
    %v5308 = vperm.slane %v5206, 0
    %v5309 = vsel %vm5214, %v5308, %v5307
    %5310 = vrot.lane.b32.xlu0 %v5309, 112
    %v5311 = vpop.permute.xlu0 %5310
    %v5315 = vperm.slane %v5191, 0
    %v5316 = vperm.slane %v5207, 0
    %v5317 = vsel %vm5214, %v5316, %v5315
    %5318 = vrot.lane.b32.xlu0 %v5317, 4
    %v5319 = vpop.permute.xlu0 %5318
    %v5323 = vperm.slane %v5192, 0
    %v5324 = vperm.slane %v5208, 0
    %v5325 = vsel %vm5214, %v5324, %v5323
    %5326 = vrot.lane.b32.xlu0 %v5325, 24
    %v5327 = vpop.permute.xlu0 %5326
    %v5331 = vperm.slane %v5193, 0
    %v5332 = vperm.slane %v5209, 0
    %v5333 = vsel %vm5214, %v5332, %v5331
    %5334 = vrot.lane.b32.xlu0 %v5333, 44
    %v5335 = vpop.permute.xlu0 %5334
    %v5337 = vsel %vm3426, %v5215, %v5223
    %v5338 = vsel %vm3460, %v5337, %v5231
    %v5339 = vsel %vm3494, %v5338, %v5239
    %v5340 = vsel %vm3528, %v5339, %v5247
    %v5341 = vsel %vm3562, %v5340, %v5255
    %v5342 = vsel %vm3596, %v5341, %v5263
    %v5343 = vsel %vm3630, %v5263, %v5271
    %v5344 = vsel %vm4751, %v5343, %v5279
    %vm5345 = vcmask 424960
    %v5346 = vsel %vm5345, %v5344, %v5287
    %vm5347 = vcmask 588800
    %v5348 = vsel %vm5347, %v5346, %v5295
    %vm5349 = vcmask 752640
    %v5350 = vsel %vm5349, %v5348, %v5303
    %vm5351 = vcmask 916480
    %v5352 = vsel %vm5351, %v5350, %v5311
    %vm5353 = vcmask 31744
    %v5354 = vsel %vm5353, %v5311, %v5319
    %vm5355 = vcmask 195584
    %v5356 = vsel %vm5355, %v5354, %v5327
    %vm5357 = vcmask 359424
    %v5358 = vsel %vm5357, %v5356, %v5335
    %v5359 = vld [vmem:[%s5] sm:$0xff]
    %v5360 = vld [vmem:[%s5 + $0x8] sm:$0xff]
    %v5361 = vld [vmem:[%s5 + $0x10] sm:$0xff]
    %v5362 = vld [vmem:[%s5 + $0x18] sm:$0xff]
    %v5363 = vld [vmem:[%s5 + $0x20] sm:$0xff]
    %v5364 = vld [vmem:[%s5 + $0x28] sm:$0xff]
    %v5365 = vld [vmem:[%s5 + $0x30] sm:$0xff]
    %v5366 = vld [vmem:[%s5 + $0x38] sm:$0xff]
    %v5367 = vld [vmem:[%s5 + $0x40] sm:$0xff]
    %v5368 = vld [vmem:[%s5 + $0x48] sm:$0xff]
    %v5369 = vld [vmem:[%s5 + $0x50] sm:$0xff]
    %v5370 = vld [vmem:[%s5 + $0x58] sm:$0xff]
    %v5371 = vld [vmem:[%s5 + $0x60] sm:$0xff]
    %v5372 = vld [vmem:[%s5 + $0x68] sm:$0xff]
    %v5373 = vld [vmem:[%s5 + $0x70] sm:$0xff]
    %v5374 = vld [vmem:[%s5 + $0x78] sm:$0xff]
    %v5375 = vld [vmem:[%s5 + $0x80] sm:$0xff]
    %v5376 = vld [vmem:[%s5 + $0x88] sm:$0xff]
    %v5377 = vld [vmem:[%s5 + $0x90] sm:$0xff]
    %v5378 = vld [vmem:[%s5 + $0x98] sm:$0xff]
    %v5379 = vld [vmem:[%s5 + $0xa0] sm:$0xff]
    %v5380 = vld [vmem:[%s5 + $0xa8] sm:$0xff]
    %v5381 = vld [vmem:[%s5 + $0xb0] sm:$0xff]
    %v5382 = vld [vmem:[%s5 + $0xb8] sm:$0xff]
    %v5383 = vld [vmem:[%s5 + $0xc0] sm:$0xff]
    %v5384 = vld [vmem:[%s5 + $0xc8] sm:$0xff]
    %v5385 = vld [vmem:[%s5 + $0xd0] sm:$0xff]
    %v5386 = vld [vmem:[%s5 + $0xd8] sm:$0xff]
    %v5387 = vld [vmem:[%s5 + $0xe0] sm:$0xff]
    %v5388 = vld [vmem:[%s5 + $0xe8] sm:$0xff]
    %v5389 = vld [vmem:[%s5 + $0xf0] sm:$0xff]
    %v5390 = vld [vmem:[%s5 + $0xf8] sm:$0xff]
    %v5391 = vld [vmem:[%s5 + $0x100] sm:$0xff]
    %v5392 = vld [vmem:[%s5 + $0x108] sm:$0xff]
    %v5393 = vld [vmem:[%s5 + $0x110] sm:$0xff]
    %v5394 = vld [vmem:[%s5 + $0x118] sm:$0xff]
    %v5395 = vld [vmem:[%s5 + $0x120] sm:$0xff]
    %v5396 = vld [vmem:[%s5 + $0x128] sm:$0xff]
    %v5397 = vld [vmem:[%s5 + $0x130] sm:$0xff]
    %v5398 = vld [vmem:[%s5 + $0x138] sm:$0xff]
    %v5399 = vld [vmem:[%s6] sm:$0x1]
    %v5401 = vperm.slane %v5399, 0
    %vm5403 = vcmask 523264
    %v5405 = vsel %vm5403, %v5358, 0
    %5407 = vmatpush.msra.mxu0 %v5374
    %5408 = vmatpush.msra.mxu0 %v5373
    %5409 = vmatpush.msra.mxu0 %v5372
    %5410 = vmatpush.msra.mxu0 %v5371
    %5411 = vmatpush.msra.mxu0 %v5370
    %5412 = vmatpush.msra.mxu0 %v5369
    %5413 = vmatpush.msra.mxu0 %v5368
    %5414 = vmatpush.msra.mxu0 %v5367
    %5415 = vmatpush.msra.mxu0 %v5366
    %5416 = vmatpush.msra.mxu0 %v5365
    %5417 = vmatpush.msra.mxu0 %v5364
    %5418 = vmatpush.msra.mxu0 %v5363
    %5419 = vmatpush.msra.mxu0 %v5362
    %5420 = vmatpush.msra.mxu0 %v5361
    %5421 = vmatpush.msra.mxu0 %v5360
    %5422 = vmatpush.msra.mxu0 %v5359
    %5423 = vmatmul.f32.gmra.mxu0 %v5342
    %v5424 = vpop.f32.mrf.mxu0
    %v5425 = vadd.f32 %v5401, %v5424
    %5426 = vdwg.mxu0
    %5427 = vmatpush.msra.mxu0 %v5390
    %5428 = vmatpush.msra.mxu0 %v5389
    %5429 = vmatpush.msra.mxu0 %v5388
    %5430 = vmatpush.msra.mxu0 %v5387
    %5431 = vmatpush.msra.mxu0 %v5386
    %5432 = vmatpush.msra.mxu0 %v5385
    %5433 = vmatpush.msra.mxu0 %v5384
    %5434 = vmatpush.msra.mxu0 %v5383
    %5435 = vmatpush.msra.mxu0 %v5382
    %5436 = vmatpush.msra.mxu0 %v5381
    %5437 = vmatpush.msra.mxu0 %v5380
    %5438 = vmatpush.msra.mxu0 %v5379
    %5439 = vmatpush.msra.mxu0 %v5378
    %5440 = vmatpush.msra.mxu0 %v5377
    %5441 = vmatpush.msra.mxu0 %v5376
    %5442 = vmatpush.msra.mxu0 %v5375
    %5443 = vmatmul.f32.gmra.mxu0 %v5352
    %v5444 = vpop.f32.mrf.mxu0
    %v5445 = vadd.f32 %v5425, %v5444
    %5446 = vdwg.mxu0
    %5447 = vmatpush.msra.mxu0 0.0
    %5448 = vmatpush.msra.mxu0 0.0
    %5449 = vmatpush.msra.mxu0 0.0
    %5450 = vmatpush.msra.mxu0 0.0
    %5451 = vmatpush.msra.mxu0 0.0
    %5452 = vmatpush.msra.mxu0 0.0
    %5453 = vmatpush.msra.mxu0 0.0
    %5454 = vmatpush.msra.mxu0 0.0
    %5455 = vmatpush.msra.mxu0 %v5398
    %5456 = vmatpush.msra.mxu0 %v5397
    %5457 = vmatpush.msra.mxu0 %v5396
    %5458 = vmatpush.msra.mxu0 %v5395
    %5459 = vmatpush.msra.mxu0 %v5394
    %5460 = vmatpush.msra.mxu0 %v5393
    %5461 = vmatpush.msra.mxu0 %v5392
    %5462 = vmatpush.msra.mxu0 %v5391
    %5463 = vmatmul.f32.gmra.mxu0 %v5405
    %v5464 = vpop.f32.mrf.mxu0
    %v5465 = vadd.f32 %v5445, %v5464
    %5466 = vdwg.mxu0
    %vm5467 = vcmask 74752
    %v5468 = vsel %vm5467, %v5465, -inf
    %5469 = vmax.xlane.f32.xlu0 %v5468
    %v5470 = vpop.xlane.xlu0 %5469
    %v5471 = vsub.f32 %v5465, %v5470
    %v5472 = vmul.f32 %v5471, 1.442695
    %v5473 = vpow.pop %v5472
    %v5474 = vsel %vm5467, %v5473, 0.0
    %5475 = vadd.xlane.f32.xlu0 %v5474
    %v5476 = vpop.xlane.xlu0 %5475
    %v5477 = vlog2.pop %v5476
    %v5478 = vmul.f32 %v5477, 0.6931472
    %v5479 = vsub.f32 %v5471, %v5478
    %5480 = vst.msk [vmem:[#allocation2] sm:$0x3] %vm5467, %v5479
    // Predicated region
    $region30: #{tpu_custom_call.1} parent=1 // pred_check
      _
    $region31: #{tpu_custom_call.1} parent=1 // pred_check_branch
      %5482 = sbr.rel (0) target = $region33
    $region32: #{tpu_custom_call.1} parent=1 // pred_region
      %5484 = vsyncadd [#allocation3], 0
      %s5486 = sshll.u32 [#allocation2], 4
      %s5487 = int_to_ptr.vmem [resolvable:$true] %s5486
      %s5488 = sshll.u32 %s7, 4
      %s5489 = int_to_ptr.hbm [resolvable:$true] %s5488
      %5491 = dma.vmem_to_hbm [thread:$0]  %s5487, 32, %s5489, [#allocation3]
    $region33: #{tpu_custom_call.1} parent=1 // pred_fallthru
      _
    // Predicated region
    $region34: #{tpu_custom_call.1} parent=1 // pred_check
      _
    $region35: #{tpu_custom_call.1} parent=1 // pred_check_branch
      %5493 = sbr.rel (0) target = $region37
    $region36: #{tpu_custom_call.1} parent=1 // pred_region
      %5495 = dma.done [#allocation3], 32
    $region37: #{tpu_custom_call.1} parent=1 // pred_fallthru
      _
    %5496 = vsyncpa [#allocation3], 1

</llo_original>
